<compile_context>
chip_gen: v6e
topology: v6e:2x2x1
jax: 0.10.0
libtpu: 0.0.40
codegen_flags: <defaults>
</compile_context>

<pallas_src>
import math
import functools

import jax
import jax.numpy as jnp
from jax import lax
from jax.experimental import pallas as pl
from jax.experimental.pallas import tpu as pltpu


# ---------------------------------------------------------------------------
# In-kernel helpers (pure functions traced inside the Pallas kernel body)
# ---------------------------------------------------------------------------
def _mha(q, k, v, num_heads, attn_scr):
    """Multi-head scaled-dot-product attention.

    q: (Sq, H), k/v: (Sk, H), all bf16; the 1/sqrt(head_dim) scale is already
    folded into the query projection.  Each head's output is written into the
    lane-dense f32 VMEM scratch `attn_scr` (Sq, H), which is returned as a
    value (avoids a lane-concatenate chain across heads).
    """
    H = q.shape[-1]
    head_dim = H // num_heads

    for h in range(num_heads):                      # static unroll, small head count
        sl = slice(h * head_dim, (h + 1) * head_dim)
        # q @ k^T without an explicit transpose: contract last axes on the MXU.
        s = lax.dot_general(
            q[:, sl], k[:, sl], (((1,), (1,)), ((), ())),
            preferred_element_type=jnp.float32)                  # (Sq, Sk) f32

        m = jnp.max(s, axis=-1, keepdims=True)
        e = jnp.exp(s - m)                                       # f32, EUP
        denom = jnp.sum(e, axis=-1, keepdims=True)

        # Unnormalized probs go to the MXU in bf16; normalization is deferred
        # to the (Sq, head_dim) output (cheaper than scaling (Sq, Sk)).
        o = jnp.dot(e.astype(v.dtype), v[:, sl],
                    preferred_element_type=jnp.float32)          # (Sq, hd) f32
        o = o * pl.reciprocal(denom, approx=True)                # EUP recip
        # dropout on attention probs: eval mode -> identity
        attn_scr[:, sl] = o

    return attn_scr[...]                             # (Sq, H) f32, lane-dense


def _dense_residual_ln(h_b, residual, wd, bd, gamma, beta):
    """AttentionOutput: dense -> (dropout=id) -> residual add -> LayerNorm.

    h_b, wd are bf16 (MXU operands); accumulation, residual add and LayerNorm
    statistics are f32.
    """
    y = jnp.dot(h_b, wd, preferred_element_type=jnp.float32) + bd
    y = y + residual
    mean = jnp.mean(y, axis=-1, keepdims=True)
    centered = y - mean
    var = jnp.mean(centered * centered, axis=-1, keepdims=True)
    inv = lax.rsqrt(var + 1e-5)                      # PyTorch LayerNorm eps
    return centered * inv * gamma + beta             # f32


# ---------------------------------------------------------------------------
# Fully fused CrossAttentionLayer kernel.
# Grid: (batch,). Each grid step computes the whole layer for one batch elem;
# every intermediate stays in VMEM/vregs.
# ---------------------------------------------------------------------------
def _cross_attention_layer_kernel(
        x_ref, ctx_ref,
        ca_wq_ref, ca_bq_ref, ca_wkv_ref, ca_bkv_ref,
        sa_wqkv_ref, sa_bqkv_ref,
        wd1_ref, bd1_ref, g1_ref, b1_ref,
        wd2_ref, bd2_ref, g2_ref, b2_ref,
        o_ref, attn_scr, *, num_heads, hidden):
    H = hidden
    bf16 = jnp.bfloat16
    x = x_ref[0]                        # (Sq, H) bf16  (MXU operand)
    ctx = ctx_ref[0]                    # (Sk, C) bf16
    x_f32 = x.astype(jnp.float32)       # residual for out1

    # TODO(synk): attention_mask broadcasting path not implemented (mask=None).

    # ---- cross_attention_1(hidden_states, cross_states_1) ------------------
    # 1/sqrt(head_dim) is pre-folded into ca_wq / ca_bq (prepare_params).
    q = (jnp.dot(x, ca_wq_ref[...], preferred_element_type=jnp.float32)
         + ca_bq_ref[...]).astype(bf16)                               # (Sq, H)
    kv = (jnp.dot(ctx, ca_wkv_ref[...], preferred_element_type=jnp.float32)
          + ca_bkv_ref[...]).astype(bf16)                             # (Sk, 2H)
    attn1 = _mha(q, kv[:, :H], kv[:, H:], num_heads, attn_scr)       # (Sq, H) f32

    # ---- out1(cross_1, hidden_states) ---------------------------------------
    h1 = _dense_residual_ln(attn1.astype(bf16), x_f32,
                            wd1_ref[...], bd1_ref[...],
                            g1_ref[...], b1_ref[...])                 # (Sq, H) f32
    h1_b = h1.astype(bf16)

    # ---- self_attention(cross_1, cross_1): fused QKV matmul -----------------
    qkv = (jnp.dot(h1_b, sa_wqkv_ref[...], preferred_element_type=jnp.float32)
           + sa_bqkv_ref[...]).astype(bf16)                           # (Sq, 3H)
    attn2 = _mha(qkv[:, :H], qkv[:, H:2 * H], qkv[:, 2 * H:],
                 num_heads, attn_scr)                                 # (Sq, H) f32

    # ---- out2(self_out, cross_1) --------------------------------------------
    h2 = _dense_residual_ln(attn2.astype(bf16), h1,
                            wd2_ref[...], bd2_ref[...],
                            g2_ref[...], b2_ref[...])                 # (Sq, H) f32

    # Single lane-dense full-width store.
    o_ref[0] = h2.astype(o_ref.dtype)


# ---------------------------------------------------------------------------
# pallas_call builder + wrapper
# ---------------------------------------------------------------------------
def _build_layer_call(B, Sq, Sk, H, C, nhead, out_dtype, single_buffer_weights):
    kernel = functools.partial(_cross_attention_layer_kernel,
                               num_heads=nhead, hidden=H)

    def w_spec(shape):
        # Grid-invariant operand: constant block index across the batch grid.
        index_map = lambda b, _n=len(shape): (0,) * _n
        if single_buffer_weights:
            # Single-buffer weights: they never change across grid steps, so
            # the default double buffering only wastes VMEM.
            return pl.BlockSpec(shape, index_map, pipeline_mode=pl.Buffered(1))
        return pl.BlockSpec(shape, index_map)

    # Advisory cost estimate so XLA schedules around this fused custom call.
    flops = 2 * B * (Sq * H * H           # cross-attn Q projection
                     + Sk * C * 2 * H     # cross-attn fused KV projection
                     + 2 * Sq * Sk * H    # cross-attn scores + PV
                     + Sq * H * H         # out1 dense
                     + Sq * H * 3 * H     # self-attn fused QKV projection
                     + 2 * Sq * Sq * H    # self-attn scores + PV
                     + Sq * H * H)        # out2 dense
    transcendentals = B * (nhead * Sq * (Sk + Sq)  # exp
                           + 2 * nhead * Sq        # reciprocal
                           + 2 * Sq)               # rsqrt
    weight_bytes = 2 * (H * H + C * 2 * H + H * 3 * H + 2 * H * H) + 4 * 12 * H
    act_bytes = 2 * B * (Sq * H + Sk * C) + 4 * B * Sq * H
    cost = pl.CostEstimate(flops=flops, transcendentals=transcendentals,
                           bytes_accessed=weight_bytes + act_bytes)

    return pl.pallas_call(
        kernel,
        out_shape=jax.ShapeDtypeStruct((B, Sq, H), out_dtype),
        grid_spec=pltpu.PrefetchScalarGridSpec(
            num_scalar_prefetch=0,
            grid=(B,),
            in_specs=[
                pl.BlockSpec((1, Sq, H), lambda b: (b, 0, 0)),   # hidden_states (bf16)
                pl.BlockSpec((1, Sk, C), lambda b: (b, 0, 0)),   # cross_states_1 (bf16)
                w_spec((H, H)),        # ca_wq  (bf16, scale folded)
                w_spec((1, H)),        # ca_bq  (f32, scale folded)
                w_spec((C, 2 * H)),    # ca_wkv (bf16, fused K|V)
                w_spec((1, 2 * H)),    # ca_bkv (f32)
                w_spec((H, 3 * H)),    # sa_wqkv (bf16, fused Q|K|V, scale folded)
                w_spec((1, 3 * H)),    # sa_bqkv (f32)
                w_spec((H, H)),        # out1 dense W (bf16)
                w_spec((1, H)),        # out1 dense b (f32)
                w_spec((1, H)),        # out1 LN gamma (f32)
                w_spec((1, H)),        # out1 LN beta (f32)
                w_spec((H, H)),        # out2 dense W (bf16)
                w_spec((1, H)),        # out2 dense b (f32)
                w_spec((1, H)),        # out2 LN gamma (f32)
                w_spec((1, H)),        # out2 LN beta (f32)
            ],
            out_specs=pl.BlockSpec((1, Sq, H), lambda b: (b, 0, 0)),
            scratch_shapes=[pltpu.VMEM((Sq, H), jnp.float32)],   # per-head merge buffer
        ),
        compiler_params=pltpu.CompilerParams(
            dimension_semantics=("parallel",),      # B >= 2 feeds both v7x TCs
            vmem_limit_bytes=64 * 1024 * 1024),
        cost_estimate=cost,
    )


def cross_attention_layer(prepared, hidden_states, cross_states_1, *, nhead):
    """Fused forward of CrossAttentionLayer (eval mode, attention_mask=None).

    `prepared` must come from `prepare_params` (weights pre-fused, bf16-cast,
    scale-folded).  Activations are cast to bf16 here; output dtype matches
    `hidden_states.dtype`.
    """
    B, Sq, H = hidden_states.shape
    Bc, Sk, C = cross_states_1.shape
    assert B == Bc and H % nhead == 0

    x_b = hidden_states.astype(jnp.bfloat16)
    ctx_b = cross_states_1.astype(jnp.bfloat16)
    args = (x_b, ctx_b,
            prepared["ca_wq"], prepared["ca_bq"],
            prepared["ca_wkv"], prepared["ca_bkv"],
            prepared["sa_wqkv"], prepared["sa_bqkv"],
            prepared["wd1"], prepared["bd1"], prepared["g1"], prepared["b1"],
            prepared["wd2"], prepared["bd2"], prepared["g2"], prepared["b2"])

    try:
        fn = _build_layer_call(B, Sq, Sk, H, C, nhead, hidden_states.dtype,
                               single_buffer_weights=True)
        out = fn(*args)
        jax.block_until_ready(out)      # surface lowering/compile issues here
        return out
    except Exception:
        # Fallback for JAX versions without pipeline_mode / Buffered(1) support.
        fn = _build_layer_call(B, Sq, Sk, H, C, nhead, hidden_states.dtype,
                               single_buffer_weights=False)
        return fn(*args)


# ---------------------------------------------------------------------------
# Parameter construction and one-time preprocessing
# ---------------------------------------------------------------------------
def init_params(key, hidden_size, cross_size1):
    def lin(k, fan_in, fan_out):
        kw, kb = jax.random.split(k)
        w = jax.random.normal(kw, (fan_in, fan_out), jnp.float32) * 0.02
        b = jax.random.normal(kb, (1, fan_out), jnp.float32) * 0.02
        return w, b

    keys = jax.random.split(key, 8)
    H, C = hidden_size, cross_size1
    return {
        # cross_attention_1: query from H, key/value from C (ctx_dim=cross_size1)
        "ca_q": lin(keys[0], H, H), "ca_k": lin(keys[1], C, H), "ca_v": lin(keys[2], C, H),
        # self_attention: all from H
        "sa_q": lin(keys[3], H, H), "sa_k": lin(keys[4], H, H), "sa_v": lin(keys[5], H, H),
        # out1 / out2 dense + LayerNorm
        "out1_dense": lin(keys[6], H, H),
        "out2_dense": lin(keys[7], H, H),
        "out1_ln": (jnp.ones((1, H), jnp.float32), jnp.zeros((1, H), jnp.float32)),
        "out2_ln": (jnp.ones((1, H), jnp.float32), jnp.zeros((1, H), jnp.float32)),
    }


def prepare_params(params, *, nhead):
    """One-time parameter preprocessing (hoisted out of the per-call path):
    K|V and Q|K|V fusion, 1/sqrt(head_dim) folded into the query projections,
    matmul weights cast to bf16 (MXU-native), biases / LN params kept f32."""
    bf16, f32 = jnp.bfloat16, jnp.float32
    ca_wq, ca_bq = params["ca_q"]
    ca_wk, ca_bk = params["ca_k"]
    ca_wv, ca_bv = params["ca_v"]
    sa_wq, sa_bq = params["sa_q"]
    sa_wk, sa_bk = params["sa_k"]
    sa_wv, sa_bv = params["sa_v"]
    wd1, bd1 = params["out1_dense"]
    g1, b1 = params["out1_ln"]
    wd2, bd2 = params["out2_dense"]
    g2, b2 = params["out2_ln"]

    H = ca_wq.shape[1]
    inv_scale = 1.0 / math.sqrt(H // nhead)

    return {
        "ca_wq": (ca_wq * inv_scale).astype(bf16),
        "ca_bq": (ca_bq * inv_scale).astype(f32),
        "ca_wkv": jnp.concatenate([ca_wk, ca_wv], axis=1).astype(bf16),      # (C, 2H)
        "ca_bkv": jnp.concatenate([ca_bk, ca_bv], axis=1).astype(f32),       # (1, 2H)
        "sa_wqkv": jnp.concatenate([sa_wq * inv_scale, sa_wk, sa_wv],
                                   axis=1).astype(bf16),                      # (H, 3H)
        "sa_bqkv": jnp.concatenate([sa_bq * inv_scale, sa_bk, sa_bv],
                                   axis=1).astype(f32),                       # (1, 3H)
        "wd1": wd1.astype(bf16), "bd1": bd1.astype(f32),
        "g1": g1.astype(f32), "b1": b1.astype(f32),
        "wd2": wd2.astype(bf16), "bd2": bd2.astype(f32),
        "g2": g2.astype(f32), "b2": b2.astype(f32),
    }


if __name__ == "__main__":
    # Small deterministic example: B=2, Sq=8 (query seq), Sk=8 (cross seq),
    # hidden_size=32, cross_size1=16, nhead=2 (head_dim=16).
    B, Sq, Sk = 2, 8, 8
    hidden_size, cross_size1, nhead = 32, 16, 2

    key = jax.random.PRNGKey(0)
    k_x, k_c, k_p = jax.random.split(key, 3)
    hidden_states = jax.random.normal(k_x, (B, Sq, hidden_size), jnp.float32)
    cross_states_1 = jax.random.normal(k_c, (B, Sk, cross_size1), jnp.float32)

    params = init_params(k_p, hidden_size, cross_size1)
    prepared = prepare_params(params, nhead=nhead)      # one-time preprocessing

    out = cross_attention_layer(prepared, hidden_states, cross_states_1, nhead=nhead)
    out = jax.block_until_ready(out)
    assert out.shape == (B, Sq, hidden_size)
    print("KERNEL_OK")
</pallas_src>

<mosaic_0001>
module attributes {stable_mosaic.version = 11 : i64} {
  func.func @_cross_attention_layer_kernel(%arg0: i32, %arg1: memref<1x8x32xbf16, #tpu.memory_space<vmem>>, %arg2: memref<1x8x16xbf16, #tpu.memory_space<vmem>>, %arg3: memref<32x32xbf16, #tpu.memory_space<vmem>>, %arg4: memref<1x32xf32, #tpu.memory_space<vmem>>, %arg5: memref<16x64xbf16, #tpu.memory_space<vmem>>, %arg6: memref<1x64xf32, #tpu.memory_space<vmem>>, %arg7: memref<32x96xbf16, #tpu.memory_space<vmem>>, %arg8: memref<1x96xf32, #tpu.memory_space<vmem>>, %arg9: memref<32x32xbf16, #tpu.memory_space<vmem>>, %arg10: memref<1x32xf32, #tpu.memory_space<vmem>>, %arg11: memref<1x32xf32, #tpu.memory_space<vmem>>, %arg12: memref<1x32xf32, #tpu.memory_space<vmem>>, %arg13: memref<32x32xbf16, #tpu.memory_space<vmem>>, %arg14: memref<1x32xf32, #tpu.memory_space<vmem>>, %arg15: memref<1x32xf32, #tpu.memory_space<vmem>>, %arg16: memref<1x32xf32, #tpu.memory_space<vmem>>, %arg17: memref<1x8x32xf32, #tpu.memory_space<vmem>>, %arg18: memref<8x32xf32, #tpu.memory_space<vmem>>) attributes {dimension_semantics = [#tpu.dimension_semantics<parallel>], iteration_bounds = array<i64: 2>, scalar_prefetch = 0 : i64, scratch_operands = 1 : i64, tpu.core_type = #tpu.core_type<tc>, window_params = [{transform_indices = @transform_0, window_bounds = array<i64: 1, 8, 32>}, {transform_indices = @transform_1, window_bounds = array<i64: 1, 8, 16>}, {pipeline_mode = #tpu.pipeline_mode<synchronous>, transform_indices = @transform_2, window_bounds = array<i64: 32, 32>}, {pipeline_mode = #tpu.pipeline_mode<synchronous>, transform_indices = @transform_3, window_bounds = array<i64: 1, 32>}, {pipeline_mode = #tpu.pipeline_mode<synchronous>, transform_indices = @transform_4, window_bounds = array<i64: 16, 64>}, {pipeline_mode = #tpu.pipeline_mode<synchronous>, transform_indices = @transform_5, window_bounds = array<i64: 1, 64>}, {pipeline_mode = #tpu.pipeline_mode<synchronous>, transform_indices = @transform_6, window_bounds = array<i64: 32, 96>}, {pipeline_mode = #tpu.pipeline_mode<synchronous>, transform_indices = @transform_7, window_bounds = array<i64: 1, 96>}, {pipeline_mode = #tpu.pipeline_mode<synchronous>, transform_indices = @transform_8, window_bounds = array<i64: 32, 32>}, {pipeline_mode = #tpu.pipeline_mode<synchronous>, transform_indices = @transform_9, window_bounds = array<i64: 1, 32>}, {pipeline_mode = #tpu.pipeline_mode<synchronous>, transform_indices = @transform_10, window_bounds = array<i64: 1, 32>}, {pipeline_mode = #tpu.pipeline_mode<synchronous>, transform_indices = @transform_11, window_bounds = array<i64: 1, 32>}, {pipeline_mode = #tpu.pipeline_mode<synchronous>, transform_indices = @transform_12, window_bounds = array<i64: 32, 32>}, {pipeline_mode = #tpu.pipeline_mode<synchronous>, transform_indices = @transform_13, window_bounds = array<i64: 1, 32>}, {pipeline_mode = #tpu.pipeline_mode<synchronous>, transform_indices = @transform_14, window_bounds = array<i64: 1, 32>}, {pipeline_mode = #tpu.pipeline_mode<synchronous>, transform_indices = @transform_15, window_bounds = array<i64: 1, 32>}, {transform_indices = @transform_16, window_bounds = array<i64: 1, 8, 32>}]} {
    %c0 = arith.constant 0 : index
    %c0_0 = arith.constant 0 : index
    %c0_1 = arith.constant 0 : index
    %0 = vector.load %arg1[%c0, %c0_0, %c0_1] : memref<1x8x32xbf16, #tpu.memory_space<vmem>>, vector<1x8x32xbf16>
    %1 = vector.shape_cast %0 : vector<1x8x32xbf16> to vector<8x32xbf16>
    %c0_2 = arith.constant 0 : index
    %c0_3 = arith.constant 0 : index
    %c0_4 = arith.constant 0 : index
    %2 = vector.load %arg2[%c0_2, %c0_3, %c0_4] : memref<1x8x16xbf16, #tpu.memory_space<vmem>>, vector<1x8x16xbf16>
    %3 = vector.shape_cast %2 : vector<1x8x16xbf16> to vector<8x16xbf16>
    %4 = arith.extf %1 : vector<8x32xbf16> to vector<8x32xf32>
    %c0_5 = arith.constant 0 : index
    %c0_6 = arith.constant 0 : index
    %5 = vector.load %arg3[%c0_5, %c0_6] : memref<32x32xbf16, #tpu.memory_space<vmem>>, vector<32x32xbf16>
    %cst = arith.constant dense<0.000000e+00> : vector<8x32xf32>
    %6 = tpu.matmul %1, %5, %cst {dimension_numbers = #tpu.dot_dimension_numbers<[1], [0], [0], [1], [0, 0, 1, 1], [], []>} : vector<8x32xbf16>, vector<32x32xbf16>, vector<8x32xf32> -> vector<8x32xf32>
    %c0_7 = arith.constant 0 : index
    %c0_8 = arith.constant 0 : index
    %7 = vector.load %arg4[%c0_7, %c0_8] : memref<1x32xf32, #tpu.memory_space<vmem>>, vector<1x32xf32>
    %8 = vector.broadcast %7 : vector<1x32xf32> to vector<8x32xf32>
    %9 = arith.addf %6, %8 : vector<8x32xf32>
    %10 = arith.truncf %9 : vector<8x32xf32> to vector<8x32xbf16>
    %c0_9 = arith.constant 0 : index
    %c0_10 = arith.constant 0 : index
    %11 = vector.load %arg5[%c0_9, %c0_10] : memref<16x64xbf16, #tpu.memory_space<vmem>>, vector<16x64xbf16>
    %cst_11 = arith.constant dense<0.000000e+00> : vector<8x64xf32>
    %12 = tpu.matmul %3, %11, %cst_11 {dimension_numbers = #tpu.dot_dimension_numbers<[1], [0], [0], [1], [0, 0, 1, 1], [], []>} : vector<8x16xbf16>, vector<16x64xbf16>, vector<8x64xf32> -> vector<8x64xf32>
    %c0_12 = arith.constant 0 : index
    %c0_13 = arith.constant 0 : index
    %13 = vector.load %arg6[%c0_12, %c0_13] : memref<1x64xf32, #tpu.memory_space<vmem>>, vector<1x64xf32>
    %14 = vector.broadcast %13 : vector<1x64xf32> to vector<8x64xf32>
    %15 = arith.addf %12, %14 : vector<8x64xf32>
    %16 = arith.truncf %15 : vector<8x64xf32> to vector<8x64xbf16>
    %17 = vector.extract_strided_slice %16 {offsets = [0, 0], sizes = [8, 32], strides = [1, 1]} : vector<8x64xbf16> to vector<8x32xbf16>
    %18 = vector.extract_strided_slice %16 {offsets = [0, 32], sizes = [8, 32], strides = [1, 1]} : vector<8x64xbf16> to vector<8x32xbf16>
    %19 = vector.extract_strided_slice %10 {offsets = [0, 0], sizes = [8, 16], strides = [1, 1]} : vector<8x32xbf16> to vector<8x16xbf16>
    %20 = vector.extract_strided_slice %17 {offsets = [0, 0], sizes = [8, 16], strides = [1, 1]} : vector<8x32xbf16> to vector<8x16xbf16>
    %cst_14 = arith.constant dense<0.000000e+00> : vector<8x8xf32>
    %21 = tpu.matmul %19, %20, %cst_14 {dimension_numbers = #tpu.dot_dimension_numbers<[1], [1], [0], [0], [0, 0, 1, 0], [], []>} : vector<8x16xbf16>, vector<8x16xbf16>, vector<8x8xf32> -> vector<8x8xf32>
    %cst_15 = arith.constant dense<0xFF800000> : vector<8xf32>
    %22 = vector.multi_reduction <maximumf>, %21, %cst_15 [1] : vector<8x8xf32> to vector<8xf32>
    %23 = vector.shape_cast %22 : vector<8xf32> to vector<8x1xf32>
    %24 = vector.broadcast %23 : vector<8x1xf32> to vector<8x8xf32>
    %25 = arith.subf %21, %24 : vector<8x8xf32>
    %26 = math.exp %25 : vector<8x8xf32>
    %cst_16 = arith.constant dense<0.000000e+00> : vector<8xf32>
    %27 = vector.multi_reduction <add>, %26, %cst_16 [1] : vector<8x8xf32> to vector<8xf32>
    %28 = vector.shape_cast %27 : vector<8xf32> to vector<8x1xf32>
    %29 = arith.truncf %26 : vector<8x8xf32> to vector<8x8xbf16>
    %30 = vector.extract_strided_slice %18 {offsets = [0, 0], sizes = [8, 16], strides = [1, 1]} : vector<8x32xbf16> to vector<8x16xbf16>
    %cst_17 = arith.constant dense<0.000000e+00> : vector<8x16xf32>
    %31 = tpu.matmul %29, %30, %cst_17 {dimension_numbers = #tpu.dot_dimension_numbers<[1], [0], [0], [1], [0, 0, 1, 1], [], []>} : vector<8x8xbf16>, vector<8x16xbf16>, vector<8x16xf32> -> vector<8x16xf32>
    %32 = tpu.reciprocal %28 {approx = true} : vector<8x1xf32> -> vector<8x1xf32>
    %33 = vector.broadcast %32 : vector<8x1xf32> to vector<8x16xf32>
    %34 = arith.mulf %31, %33 : vector<8x16xf32>
    %c0_18 = arith.constant 0 : index
    %c0_19 = arith.constant 0 : index
    %35 = vector.load %arg18[%c0_18, %c0_19] : memref<8x32xf32, #tpu.memory_space<vmem>>, vector<8x16xf32>
    tpu.vector_store %arg18[%c0_18, %c0_19], %34 {strides = array<i32>} : memref<8x32xf32, #tpu.memory_space<vmem>>, vector<8x16xf32>,
    %36 = vector.extract_strided_slice %10 {offsets = [0, 16], sizes = [8, 16], strides = [1, 1]} : vector<8x32xbf16> to vector<8x16xbf16>
    %37 = vector.extract_strided_slice %17 {offsets = [0, 16], sizes = [8, 16], strides = [1, 1]} : vector<8x32xbf16> to vector<8x16xbf16>
    %cst_20 = arith.constant dense<0.000000e+00> : vector<8x8xf32>
    %38 = tpu.matmul %36, %37, %cst_20 {dimension_numbers = #tpu.dot_dimension_numbers<[1], [1], [0], [0], [0, 0, 1, 0], [], []>} : vector<8x16xbf16>, vector<8x16xbf16>, vector<8x8xf32> -> vector<8x8xf32>
    %cst_21 = arith.constant dense<0xFF800000> : vector<8xf32>
    %39 = vector.multi_reduction <maximumf>, %38, %cst_21 [1] : vector<8x8xf32> to vector<8xf32>
    %40 = vector.shape_cast %39 : vector<8xf32> to vector<8x1xf32>
    %41 = vector.broadcast %40 : vector<8x1xf32> to vector<8x8xf32>
    %42 = arith.subf %38, %41 : vector<8x8xf32>
    %43 = math.exp %42 : vector<8x8xf32>
    %cst_22 = arith.constant dense<0.000000e+00> : vector<8xf32>
    %44 = vector.multi_reduction <add>, %43, %cst_22 [1] : vector<8x8xf32> to vector<8xf32>
    %45 = vector.shape_cast %44 : vector<8xf32> to vector<8x1xf32>
    %46 = arith.truncf %43 : vector<8x8xf32> to vector<8x8xbf16>
    %47 = vector.extract_strided_slice %18 {offsets = [0, 16], sizes = [8, 16], strides = [1, 1]} : vector<8x32xbf16> to vector<8x16xbf16>
    %cst_23 = arith.constant dense<0.000000e+00> : vector<8x16xf32>
    %48 = tpu.matmul %46, %47, %cst_23 {dimension_numbers = #tpu.dot_dimension_numbers<[1], [0], [0], [1], [0, 0, 1, 1], [], []>} : vector<8x8xbf16>, vector<8x16xbf16>, vector<8x16xf32> -> vector<8x16xf32>
    %49 = tpu.reciprocal %45 {approx = true} : vector<8x1xf32> -> vector<8x1xf32>
    %50 = vector.broadcast %49 : vector<8x1xf32> to vector<8x16xf32>
    %51 = arith.mulf %48, %50 : vector<8x16xf32>
    %c0_24 = arith.constant 0 : index
    %c16 = arith.constant 16 : index
    %52 = vector.load %arg18[%c0_24, %c16] : memref<8x32xf32, #tpu.memory_space<vmem>>, vector<8x16xf32>
    tpu.vector_store %arg18[%c0_24, %c16], %51 {strides = array<i32>} : memref<8x32xf32, #tpu.memory_space<vmem>>, vector<8x16xf32>,
    %c0_25 = arith.constant 0 : index
    %c0_26 = arith.constant 0 : index
    %53 = vector.load %arg18[%c0_25, %c0_26] : memref<8x32xf32, #tpu.memory_space<vmem>>, vector<8x32xf32>
    %54 = arith.truncf %53 : vector<8x32xf32> to vector<8x32xbf16>
    %c0_27 = arith.constant 0 : index
    %c0_28 = arith.constant 0 : index
    %55 = vector.load %arg9[%c0_27, %c0_28] : memref<32x32xbf16, #tpu.memory_space<vmem>>, vector<32x32xbf16>
    %c0_29 = arith.constant 0 : index
    %c0_30 = arith.constant 0 : index
    %56 = vector.load %arg10[%c0_29, %c0_30] : memref<1x32xf32, #tpu.memory_space<vmem>>, vector<1x32xf32>
    %c0_31 = arith.constant 0 : index
    %c0_32 = arith.constant 0 : index
    %57 = vector.load %arg11[%c0_31, %c0_32] : memref<1x32xf32, #tpu.memory_space<vmem>>, vector<1x32xf32>
    %c0_33 = arith.constant 0 : index
    %c0_34 = arith.constant 0 : index
    %58 = vector.load %arg12[%c0_33, %c0_34] : memref<1x32xf32, #tpu.memory_space<vmem>>, vector<1x32xf32>
    %cst_35 = arith.constant dense<0.000000e+00> : vector<8x32xf32>
    %59 = tpu.matmul %54, %55, %cst_35 {dimension_numbers = #tpu.dot_dimension_numbers<[1], [0], [0], [1], [0, 0, 1, 1], [], []>} : vector<8x32xbf16>, vector<32x32xbf16>, vector<8x32xf32> -> vector<8x32xf32>
    %60 = vector.broadcast %56 : vector<1x32xf32> to vector<8x32xf32>
    %61 = arith.addf %59, %60 : vector<8x32xf32>
    %62 = arith.addf %61, %4 : vector<8x32xf32>
    %cst_36 = arith.constant dense<0.000000e+00> : vector<8xf32>
    %63 = vector.multi_reduction <add>, %62, %cst_36 [1] : vector<8x32xf32> to vector<8xf32>
    %64 = vector.shape_cast %63 : vector<8xf32> to vector<8x1xf32>
    %cst_37 = arith.constant 3.200000e+01 : f32
    %65 = vector.broadcast %cst_37 : f32 to vector<8x1xf32>
    %66 = arith.divf %64, %65 : vector<8x1xf32>
    %67 = vector.broadcast %66 : vector<8x1xf32> to vector<8x32xf32>
    %68 = arith.subf %62, %67 : vector<8x32xf32>
    %69 = arith.mulf %68, %68 : vector<8x32xf32>
    %cst_38 = arith.constant dense<0.000000e+00> : vector<8xf32>
    %70 = vector.multi_reduction <add>, %69, %cst_38 [1] : vector<8x32xf32> to vector<8xf32>
    %71 = vector.shape_cast %70 : vector<8xf32> to vector<8x1xf32>
    %cst_39 = arith.constant 3.200000e+01 : f32
    %72 = vector.broadcast %cst_39 : f32 to vector<8x1xf32>
    %73 = arith.divf %71, %72 : vector<8x1xf32>
    %cst_40 = arith.constant 9.99999974E-6 : f32
    %74 = vector.broadcast %cst_40 : f32 to vector<8x1xf32>
    %75 = arith.addf %73, %74 : vector<8x1xf32>
    %76 = math.rsqrt %75 : vector<8x1xf32>
    %77 = vector.broadcast %76 : vector<8x1xf32> to vector<8x32xf32>
    %78 = arith.mulf %68, %77 : vector<8x32xf32>
    %79 = vector.broadcast %57 : vector<1x32xf32> to vector<8x32xf32>
    %80 = arith.mulf %78, %79 : vector<8x32xf32>
    %81 = vector.broadcast %58 : vector<1x32xf32> to vector<8x32xf32>
    %82 = arith.addf %80, %81 : vector<8x32xf32>
    %83 = arith.truncf %82 : vector<8x32xf32> to vector<8x32xbf16>
    %c0_41 = arith.constant 0 : index
    %c0_42 = arith.constant 0 : index
    %84 = vector.load %arg7[%c0_41, %c0_42] : memref<32x96xbf16, #tpu.memory_space<vmem>>, vector<32x96xbf16>
    %cst_43 = arith.constant dense<0.000000e+00> : vector<8x96xf32>
    %85 = tpu.matmul %83, %84, %cst_43 {dimension_numbers = #tpu.dot_dimension_numbers<[1], [0], [0], [1], [0, 0, 1, 1], [], []>} : vector<8x32xbf16>, vector<32x96xbf16>, vector<8x96xf32> -> vector<8x96xf32>
    %c0_44 = arith.constant 0 : index
    %c0_45 = arith.constant 0 : index
    %86 = vector.load %arg8[%c0_44, %c0_45] : memref<1x96xf32, #tpu.memory_space<vmem>>, vector<1x96xf32>
    %87 = vector.broadcast %86 : vector<1x96xf32> to vector<8x96xf32>
    %88 = arith.addf %85, %87 : vector<8x96xf32>
    %89 = arith.truncf %88 : vector<8x96xf32> to vector<8x96xbf16>
    %90 = vector.extract_strided_slice %89 {offsets = [0, 0], sizes = [8, 32], strides = [1, 1]} : vector<8x96xbf16> to vector<8x32xbf16>
    %91 = vector.extract_strided_slice %89 {offsets = [0, 32], sizes = [8, 32], strides = [1, 1]} : vector<8x96xbf16> to vector<8x32xbf16>
    %92 = vector.extract_strided_slice %89 {offsets = [0, 64], sizes = [8, 32], strides = [1, 1]} : vector<8x96xbf16> to vector<8x32xbf16>
    %93 = vector.extract_strided_slice %90 {offsets = [0, 0], sizes = [8, 16], strides = [1, 1]} : vector<8x32xbf16> to vector<8x16xbf16>
    %94 = vector.extract_strided_slice %91 {offsets = [0, 0], sizes = [8, 16], strides = [1, 1]} : vector<8x32xbf16> to vector<8x16xbf16>
    %cst_46 = arith.constant dense<0.000000e+00> : vector<8x8xf32>
    %95 = tpu.matmul %93, %94, %cst_46 {dimension_numbers = #tpu.dot_dimension_numbers<[1], [1], [0], [0], [0, 0, 1, 0], [], []>} : vector<8x16xbf16>, vector<8x16xbf16>, vector<8x8xf32> -> vector<8x8xf32>
    %cst_47 = arith.constant dense<0xFF800000> : vector<8xf32>
    %96 = vector.multi_reduction <maximumf>, %95, %cst_47 [1] : vector<8x8xf32> to vector<8xf32>
    %97 = vector.shape_cast %96 : vector<8xf32> to vector<8x1xf32>
    %98 = vector.broadcast %97 : vector<8x1xf32> to vector<8x8xf32>
    %99 = arith.subf %95, %98 : vector<8x8xf32>
    %100 = math.exp %99 : vector<8x8xf32>
    %cst_48 = arith.constant dense<0.000000e+00> : vector<8xf32>
    %101 = vector.multi_reduction <add>, %100, %cst_48 [1] : vector<8x8xf32> to vector<8xf32>
    %102 = vector.shape_cast %101 : vector<8xf32> to vector<8x1xf32>
    %103 = arith.truncf %100 : vector<8x8xf32> to vector<8x8xbf16>
    %104 = vector.extract_strided_slice %92 {offsets = [0, 0], sizes = [8, 16], strides = [1, 1]} : vector<8x32xbf16> to vector<8x16xbf16>
    %cst_49 = arith.constant dense<0.000000e+00> : vector<8x16xf32>
    %105 = tpu.matmul %103, %104, %cst_49 {dimension_numbers = #tpu.dot_dimension_numbers<[1], [0], [0], [1], [0, 0, 1, 1], [], []>} : vector<8x8xbf16>, vector<8x16xbf16>, vector<8x16xf32> -> vector<8x16xf32>
    %106 = tpu.reciprocal %102 {approx = true} : vector<8x1xf32> -> vector<8x1xf32>
    %107 = vector.broadcast %106 : vector<8x1xf32> to vector<8x16xf32>
    %108 = arith.mulf %105, %107 : vector<8x16xf32>
    %c0_50 = arith.constant 0 : index
    %c0_51 = arith.constant 0 : index
    %109 = vector.load %arg18[%c0_50, %c0_51] : memref<8x32xf32, #tpu.memory_space<vmem>>, vector<8x16xf32>
    tpu.vector_store %arg18[%c0_50, %c0_51], %108 {strides = array<i32>} : memref<8x32xf32, #tpu.memory_space<vmem>>, vector<8x16xf32>,
    %110 = vector.extract_strided_slice %90 {offsets = [0, 16], sizes = [8, 16], strides = [1, 1]} : vector<8x32xbf16> to vector<8x16xbf16>
    %111 = vector.extract_strided_slice %91 {offsets = [0, 16], sizes = [8, 16], strides = [1, 1]} : vector<8x32xbf16> to vector<8x16xbf16>
    %cst_52 = arith.constant dense<0.000000e+00> : vector<8x8xf32>
    %112 = tpu.matmul %110, %111, %cst_52 {dimension_numbers = #tpu.dot_dimension_numbers<[1], [1], [0], [0], [0, 0, 1, 0], [], []>} : vector<8x16xbf16>, vector<8x16xbf16>, vector<8x8xf32> -> vector<8x8xf32>
    %cst_53 = arith.constant dense<0xFF800000> : vector<8xf32>
    %113 = vector.multi_reduction <maximumf>, %112, %cst_53 [1] : vector<8x8xf32> to vector<8xf32>
    %114 = vector.shape_cast %113 : vector<8xf32> to vector<8x1xf32>
    %115 = vector.broadcast %114 : vector<8x1xf32> to vector<8x8xf32>
    %116 = arith.subf %112, %115 : vector<8x8xf32>
    %117 = math.exp %116 : vector<8x8xf32>
    %cst_54 = arith.constant dense<0.000000e+00> : vector<8xf32>
    %118 = vector.multi_reduction <add>, %117, %cst_54 [1] : vector<8x8xf32> to vector<8xf32>
    %119 = vector.shape_cast %118 : vector<8xf32> to vector<8x1xf32>
    %120 = arith.truncf %117 : vector<8x8xf32> to vector<8x8xbf16>
    %121 = vector.extract_strided_slice %92 {offsets = [0, 16], sizes = [8, 16], strides = [1, 1]} : vector<8x32xbf16> to vector<8x16xbf16>
    %cst_55 = arith.constant dense<0.000000e+00> : vector<8x16xf32>
    %122 = tpu.matmul %120, %121, %cst_55 {dimension_numbers = #tpu.dot_dimension_numbers<[1], [0], [0], [1], [0, 0, 1, 1], [], []>} : vector<8x8xbf16>, vector<8x16xbf16>, vector<8x16xf32> -> vector<8x16xf32>
    %123 = tpu.reciprocal %119 {approx = true} : vector<8x1xf32> -> vector<8x1xf32>
    %124 = vector.broadcast %123 : vector<8x1xf32> to vector<8x16xf32>
    %125 = arith.mulf %122, %124 : vector<8x16xf32>
    %c0_56 = arith.constant 0 : index
    %c16_57 = arith.constant 16 : index
    %126 = vector.load %arg18[%c0_56, %c16_57] : memref<8x32xf32, #tpu.memory_space<vmem>>, vector<8x16xf32>
    tpu.vector_store %arg18[%c0_56, %c16_57], %125 {strides = array<i32>} : memref<8x32xf32, #tpu.memory_space<vmem>>, vector<8x16xf32>,
    %c0_58 = arith.constant 0 : index
    %c0_59 = arith.constant 0 : index
    %127 = vector.load %arg18[%c0_58, %c0_59] : memref<8x32xf32, #tpu.memory_space<vmem>>, vector<8x32xf32>
    %128 = arith.truncf %127 : vector<8x32xf32> to vector<8x32xbf16>
    %c0_60 = arith.constant 0 : index
    %c0_61 = arith.constant 0 : index
    %129 = vector.load %arg13[%c0_60, %c0_61] : memref<32x32xbf16, #tpu.memory_space<vmem>>, vector<32x32xbf16>
    %c0_62 = arith.constant 0 : index
    %c0_63 = arith.constant 0 : index
    %130 = vector.load %arg14[%c0_62, %c0_63] : memref<1x32xf32, #tpu.memory_space<vmem>>, vector<1x32xf32>
    %c0_64 = arith.constant 0 : index
    %c0_65 = arith.constant 0 : index
    %131 = vector.load %arg15[%c0_64, %c0_65] : memref<1x32xf32, #tpu.memory_space<vmem>>, vector<1x32xf32>
    %c0_66 = arith.constant 0 : index
    %c0_67 = arith.constant 0 : index
    %132 = vector.load %arg16[%c0_66, %c0_67] : memref<1x32xf32, #tpu.memory_space<vmem>>, vector<1x32xf32>
    %cst_68 = arith.constant dense<0.000000e+00> : vector<8x32xf32>
    %133 = tpu.matmul %128, %129, %cst_68 {dimension_numbers = #tpu.dot_dimension_numbers<[1], [0], [0], [1], [0, 0, 1, 1], [], []>} : vector<8x32xbf16>, vector<32x32xbf16>, vector<8x32xf32> -> vector<8x32xf32>
    %134 = vector.broadcast %130 : vector<1x32xf32> to vector<8x32xf32>
    %135 = arith.addf %133, %134 : vector<8x32xf32>
    %136 = arith.addf %135, %82 : vector<8x32xf32>
    %cst_69 = arith.constant dense<0.000000e+00> : vector<8xf32>
    %137 = vector.multi_reduction <add>, %136, %cst_69 [1] : vector<8x32xf32> to vector<8xf32>
    %138 = vector.shape_cast %137 : vector<8xf32> to vector<8x1xf32>
    %cst_70 = arith.constant 3.200000e+01 : f32
    %139 = vector.broadcast %cst_70 : f32 to vector<8x1xf32>
    %140 = arith.divf %138, %139 : vector<8x1xf32>
    %141 = vector.broadcast %140 : vector<8x1xf32> to vector<8x32xf32>
    %142 = arith.subf %136, %141 : vector<8x32xf32>
    %143 = arith.mulf %142, %142 : vector<8x32xf32>
    %cst_71 = arith.constant dense<0.000000e+00> : vector<8xf32>
    %144 = vector.multi_reduction <add>, %143, %cst_71 [1] : vector<8x32xf32> to vector<8xf32>
    %145 = vector.shape_cast %144 : vector<8xf32> to vector<8x1xf32>
    %cst_72 = arith.constant 3.200000e+01 : f32
    %146 = vector.broadcast %cst_72 : f32 to vector<8x1xf32>
    %147 = arith.divf %145, %146 : vector<8x1xf32>
    %cst_73 = arith.constant 9.99999974E-6 : f32
    %148 = vector.broadcast %cst_73 : f32 to vector<8x1xf32>
    %149 = arith.addf %147, %148 : vector<8x1xf32>
    %150 = math.rsqrt %149 : vector<8x1xf32>
    %151 = vector.broadcast %150 : vector<8x1xf32> to vector<8x32xf32>
    %152 = arith.mulf %142, %151 : vector<8x32xf32>
    %153 = vector.broadcast %131 : vector<1x32xf32> to vector<8x32xf32>
    %154 = arith.mulf %152, %153 : vector<8x32xf32>
    %155 = vector.broadcast %132 : vector<1x32xf32> to vector<8x32xf32>
    %156 = arith.addf %154, %155 : vector<8x32xf32>
    %c0_74 = arith.constant 0 : index
    %c0_75 = arith.constant 0 : index
    %c0_76 = arith.constant 0 : index
    %157 = vector.load %arg17[%c0_74, %c0_75, %c0_76] : memref<1x8x32xf32, #tpu.memory_space<vmem>>, vector<1x8x32xf32>
    %158 = vector.shape_cast %157 : vector<1x8x32xf32> to vector<8x32xf32>
    %159 = vector.shape_cast %156 : vector<8x32xf32> to vector<1x8x32xf32>
    tpu.vector_store %arg17[%c0_74, %c0_75, %c0_76], %159 {strides = array<i32>} : memref<1x8x32xf32, #tpu.memory_space<vmem>>, vector<1x8x32xf32>,
    return
  }
  func.func @transform_0(%arg0: i32) -> (i32, i32, i32) {
    %c0_i32 = arith.constant 0 : i32
    %c0_i32_0 = arith.constant 0 : i32
    %c0_i32_1 = arith.constant 0 : i32
    return %arg0, %c0_i32, %c0_i32_0 : i32, i32, i32
  }
  func.func @transform_1(%arg0: i32) -> (i32, i32, i32) {
    %c0_i32 = arith.constant 0 : i32
    %c0_i32_0 = arith.constant 0 : i32
    %c0_i32_1 = arith.constant 0 : i32
    return %arg0, %c0_i32, %c0_i32_0 : i32, i32, i32
  }
  func.func @transform_2(%arg0: i32) -> (i32, i32) {
    %c0_i32 = arith.constant 0 : i32
    %c0_i32_0 = arith.constant 0 : i32
    %c0_i32_1 = arith.constant 0 : i32
    return %c0_i32, %c0_i32_0 : i32, i32
  }
  func.func @transform_3(%arg0: i32) -> (i32, i32) {
    %c0_i32 = arith.constant 0 : i32
    %c0_i32_0 = arith.constant 0 : i32
    %c0_i32_1 = arith.constant 0 : i32
    return %c0_i32, %c0_i32_0 : i32, i32
  }
  func.func @transform_4(%arg0: i32) -> (i32, i32) {
    %c0_i32 = arith.constant 0 : i32
    %c0_i32_0 = arith.constant 0 : i32
    %c0_i32_1 = arith.constant 0 : i32
    return %c0_i32, %c0_i32_0 : i32, i32
  }
  func.func @transform_5(%arg0: i32) -> (i32, i32) {
    %c0_i32 = arith.constant 0 : i32
    %c0_i32_0 = arith.constant 0 : i32
    %c0_i32_1 = arith.constant 0 : i32
    return %c0_i32, %c0_i32_0 : i32, i32
  }
  func.func @transform_6(%arg0: i32) -> (i32, i32) {
    %c0_i32 = arith.constant 0 : i32
    %c0_i32_0 = arith.constant 0 : i32
    %c0_i32_1 = arith.constant 0 : i32
    return %c0_i32, %c0_i32_0 : i32, i32
  }
  func.func @transform_7(%arg0: i32) -> (i32, i32) {
    %c0_i32 = arith.constant 0 : i32
    %c0_i32_0 = arith.constant 0 : i32
    %c0_i32_1 = arith.constant 0 : i32
    return %c0_i32, %c0_i32_0 : i32, i32
  }
  func.func @transform_8(%arg0: i32) -> (i32, i32) {
    %c0_i32 = arith.constant 0 : i32
    %c0_i32_0 = arith.constant 0 : i32
    %c0_i32_1 = arith.constant 0 : i32
    return %c0_i32, %c0_i32_0 : i32, i32
  }
  func.func @transform_9(%arg0: i32) -> (i32, i32) {
    %c0_i32 = arith.constant 0 : i32
    %c0_i32_0 = arith.constant 0 : i32
    %c0_i32_1 = arith.constant 0 : i32
    return %c0_i32, %c0_i32_0 : i32, i32
  }
  func.func @transform_10(%arg0: i32) -> (i32, i32) {
    %c0_i32 = arith.constant 0 : i32
    %c0_i32_0 = arith.constant 0 : i32
    %c0_i32_1 = arith.constant 0 : i32
    return %c0_i32, %c0_i32_0 : i32, i32
  }
  func.func @transform_11(%arg0: i32) -> (i32, i32) {
    %c0_i32 = arith.constant 0 : i32
    %c0_i32_0 = arith.constant 0 : i32
    %c0_i32_1 = arith.constant 0 : i32
    return %c0_i32, %c0_i32_0 : i32, i32
  }
  func.func @transform_12(%arg0: i32) -> (i32, i32) {
    %c0_i32 = arith.constant 0 : i32
    %c0_i32_0 = arith.constant 0 : i32
    %c0_i32_1 = arith.constant 0 : i32
    return %c0_i32, %c0_i32_0 : i32, i32
  }
  func.func @transform_13(%arg0: i32) -> (i32, i32) {
    %c0_i32 = arith.constant 0 : i32
    %c0_i32_0 = arith.constant 0 : i32
    %c0_i32_1 = arith.constant 0 : i32
    return %c0_i32, %c0_i32_0 : i32, i32
  }
  func.func @transform_14(%arg0: i32) -> (i32, i32) {
    %c0_i32 = arith.constant 0 : i32
    %c0_i32_0 = arith.constant 0 : i32
    %c0_i32_1 = arith.constant 0 : i32
    return %c0_i32, %c0_i32_0 : i32, i32
  }
  func.func @transform_15(%arg0: i32) -> (i32, i32) {
    %c0_i32 = arith.constant 0 : i32
    %c0_i32_0 = arith.constant 0 : i32
    %c0_i32_1 = arith.constant 0 : i32
    return %c0_i32, %c0_i32_0 : i32, i32
  }
  func.func @transform_16(%arg0: i32) -> (i32, i32, i32) {
    %c0_i32 = arith.constant 0 : i32
    %c0_i32_0 = arith.constant 0 : i32
    %c0_i32_1 = arith.constant 0 : i32
    return %arg0, %c0_i32, %c0_i32_0 : i32, i32, i32
  }
}

module attributes {stable_mosaic.version = 11 : i64} {
  func.func @_cross_attention_layer_kernel(%arg0: i32, %arg1: memref<1x8x32xbf16, #tpu.memory_space<vmem>>, %arg2: memref<1x8x16xbf16, #tpu.memory_space<vmem>>, %arg3: memref<32x32xbf16, #tpu.memory_space<vmem>>, %arg4: memref<1x32xf32, #tpu.memory_space<vmem>>, %arg5: memref<16x64xbf16, #tpu.memory_space<vmem>>, %arg6: memref<1x64xf32, #tpu.memory_space<vmem>>, %arg7: memref<32x96xbf16, #tpu.memory_space<vmem>>, %arg8: memref<1x96xf32, #tpu.memory_space<vmem>>, %arg9: memref<32x32xbf16, #tpu.memory_space<vmem>>, %arg10: memref<1x32xf32, #tpu.memory_space<vmem>>, %arg11: memref<1x32xf32, #tpu.memory_space<vmem>>, %arg12: memref<1x32xf32, #tpu.memory_space<vmem>>, %arg13: memref<32x32xbf16, #tpu.memory_space<vmem>>, %arg14: memref<1x32xf32, #tpu.memory_space<vmem>>, %arg15: memref<1x32xf32, #tpu.memory_space<vmem>>, %arg16: memref<1x32xf32, #tpu.memory_space<vmem>>, %arg17: memref<1x8x32xf32, #tpu.memory_space<vmem>>, %arg18: memref<8x32xf32, #tpu.memory_space<vmem>>) attributes {dimension_semantics = [#tpu.dimension_semantics<parallel>], iteration_bounds = array<i64: 2>, scalar_prefetch = 0 : i64, scratch_operands = 1 : i64, tpu.core_type = #tpu.core_type<tc>, window_params = [{transform_indices = @transform_0, window_bounds = array<i64: 1, 8, 32>}, {transform_indices = @transform_1, window_bounds = array<i64: 1, 8, 16>}, {pipeline_mode = #tpu.pipeline_mode<synchronous>, transform_indices = @transform_2, window_bounds = array<i64: 32, 32>}, {pipeline_mode = #tpu.pipeline_mode<synchronous>, transform_indices = @transform_3, window_bounds = array<i64: 1, 32>}, {pipeline_mode = #tpu.pipeline_mode<synchronous>, transform_indices = @transform_4, window_bounds = array<i64: 16, 64>}, {pipeline_mode = #tpu.pipeline_mode<synchronous>, transform_indices = @transform_5, window_bounds = array<i64: 1, 64>}, {pipeline_mode = #tpu.pipeline_mode<synchronous>, transform_indices = @transform_6, window_bounds = array<i64: 32, 96>}, {pipeline_mode = #tpu.pipeline_mode<synchronous>, transform_indices = @transform_7, window_bounds = array<i64: 1, 96>}, {pipeline_mode = #tpu.pipeline_mode<synchronous>, transform_indices = @transform_8, window_bounds = array<i64: 32, 32>}, {pipeline_mode = #tpu.pipeline_mode<synchronous>, transform_indices = @transform_9, window_bounds = array<i64: 1, 32>}, {pipeline_mode = #tpu.pipeline_mode<synchronous>, transform_indices = @transform_10, window_bounds = array<i64: 1, 32>}, {pipeline_mode = #tpu.pipeline_mode<synchronous>, transform_indices = @transform_11, window_bounds = array<i64: 1, 32>}, {pipeline_mode = #tpu.pipeline_mode<synchronous>, transform_indices = @transform_12, window_bounds = array<i64: 32, 32>}, {pipeline_mode = #tpu.pipeline_mode<synchronous>, transform_indices = @transform_13, window_bounds = array<i64: 1, 32>}, {pipeline_mode = #tpu.pipeline_mode<synchronous>, transform_indices = @transform_14, window_bounds = array<i64: 1, 32>}, {pipeline_mode = #tpu.pipeline_mode<synchronous>, transform_indices = @transform_15, window_bounds = array<i64: 1, 32>}, {transform_indices = @transform_16, window_bounds = array<i64: 1, 8, 32>}]} {
    %c0 = arith.constant 0 : index
    %c0_0 = arith.constant 0 : index
    %c0_1 = arith.constant 0 : index
    %0 = vector.load %arg1[%c0, %c0_0, %c0_1] : memref<1x8x32xbf16, #tpu.memory_space<vmem>>, vector<1x8x32xbf16>
    %1 = vector.shape_cast %0 : vector<1x8x32xbf16> to vector<8x32xbf16>
    %c0_2 = arith.constant 0 : index
    %c0_3 = arith.constant 0 : index
    %c0_4 = arith.constant 0 : index
    %2 = vector.load %arg2[%c0_2, %c0_3, %c0_4] : memref<1x8x16xbf16, #tpu.memory_space<vmem>>, vector<1x8x16xbf16>
    %3 = vector.shape_cast %2 : vector<1x8x16xbf16> to vector<8x16xbf16>
    %4 = arith.extf %1 : vector<8x32xbf16> to vector<8x32xf32>
    %c0_5 = arith.constant 0 : index
    %c0_6 = arith.constant 0 : index
    %5 = vector.load %arg3[%c0_5, %c0_6] : memref<32x32xbf16, #tpu.memory_space<vmem>>, vector<32x32xbf16>
    %cst = arith.constant dense<0.000000e+00> : vector<8x32xf32>
    %6 = tpu.matmul %1, %5, %cst {dimension_numbers = #tpu.dot_dimension_numbers<[1], [0], [0], [1], [0, 0, 1, 1], [], []>} : vector<8x32xbf16>, vector<32x32xbf16>, vector<8x32xf32> -> vector<8x32xf32>
    %c0_7 = arith.constant 0 : index
    %c0_8 = arith.constant 0 : index
    %7 = vector.load %arg4[%c0_7, %c0_8] : memref<1x32xf32, #tpu.memory_space<vmem>>, vector<1x32xf32>
    %8 = vector.broadcast %7 : vector<1x32xf32> to vector<8x32xf32>
    %9 = arith.addf %6, %8 : vector<8x32xf32>
    %10 = arith.truncf %9 : vector<8x32xf32> to vector<8x32xbf16>
    %c0_9 = arith.constant 0 : index
    %c0_10 = arith.constant 0 : index
    %11 = vector.load %arg5[%c0_9, %c0_10] : memref<16x64xbf16, #tpu.memory_space<vmem>>, vector<16x64xbf16>
    %cst_11 = arith.constant dense<0.000000e+00> : vector<8x64xf32>
    %12 = tpu.matmul %3, %11, %cst_11 {dimension_numbers = #tpu.dot_dimension_numbers<[1], [0], [0], [1], [0, 0, 1, 1], [], []>} : vector<8x16xbf16>, vector<16x64xbf16>, vector<8x64xf32> -> vector<8x64xf32>
    %c0_12 = arith.constant 0 : index
    %c0_13 = arith.constant 0 : index
    %13 = vector.load %arg6[%c0_12, %c0_13] : memref<1x64xf32, #tpu.memory_space<vmem>>, vector<1x64xf32>
    %14 = vector.broadcast %13 : vector<1x64xf32> to vector<8x64xf32>
    %15 = arith.addf %12, %14 : vector<8x64xf32>
    %16 = arith.truncf %15 : vector<8x64xf32> to vector<8x64xbf16>
    %17 = vector.extract_strided_slice %16 {offsets = [0, 0], sizes = [8, 32], strides = [1, 1]} : vector<8x64xbf16> to vector<8x32xbf16>
    %18 = vector.extract_strided_slice %16 {offsets = [0, 32], sizes = [8, 32], strides = [1, 1]} : vector<8x64xbf16> to vector<8x32xbf16>
    %19 = vector.extract_strided_slice %10 {offsets = [0, 0], sizes = [8, 16], strides = [1, 1]} : vector<8x32xbf16> to vector<8x16xbf16>
    %20 = vector.extract_strided_slice %17 {offsets = [0, 0], sizes = [8, 16], strides = [1, 1]} : vector<8x32xbf16> to vector<8x16xbf16>
    %cst_14 = arith.constant dense<0.000000e+00> : vector<8x8xf32>
    %21 = tpu.matmul %19, %20, %cst_14 {dimension_numbers = #tpu.dot_dimension_numbers<[1], [1], [0], [0], [0, 0, 1, 0], [], []>} : vector<8x16xbf16>, vector<8x16xbf16>, vector<8x8xf32> -> vector<8x8xf32>
    %cst_15 = arith.constant dense<0xFF800000> : vector<8xf32>
    %22 = vector.multi_reduction <maximumf>, %21, %cst_15 [1] : vector<8x8xf32> to vector<8xf32>
    %23 = vector.shape_cast %22 : vector<8xf32> to vector<8x1xf32>
    %24 = vector.broadcast %23 : vector<8x1xf32> to vector<8x8xf32>
    %25 = arith.subf %21, %24 : vector<8x8xf32>
    %26 = math.exp %25 : vector<8x8xf32>
    %cst_16 = arith.constant dense<0.000000e+00> : vector<8xf32>
    %27 = vector.multi_reduction <add>, %26, %cst_16 [1] : vector<8x8xf32> to vector<8xf32>
    %28 = vector.shape_cast %27 : vector<8xf32> to vector<8x1xf32>
    %29 = arith.truncf %26 : vector<8x8xf32> to vector<8x8xbf16>
    %30 = vector.extract_strided_slice %18 {offsets = [0, 0], sizes = [8, 16], strides = [1, 1]} : vector<8x32xbf16> to vector<8x16xbf16>
    %cst_17 = arith.constant dense<0.000000e+00> : vector<8x16xf32>
    %31 = tpu.matmul %29, %30, %cst_17 {dimension_numbers = #tpu.dot_dimension_numbers<[1], [0], [0], [1], [0, 0, 1, 1], [], []>} : vector<8x8xbf16>, vector<8x16xbf16>, vector<8x16xf32> -> vector<8x16xf32>
    %32 = tpu.reciprocal %28 {approx = true} : vector<8x1xf32> -> vector<8x1xf32>
    %33 = vector.broadcast %32 : vector<8x1xf32> to vector<8x16xf32>
    %34 = arith.mulf %31, %33 : vector<8x16xf32>
    %c0_18 = arith.constant 0 : index
    %c0_19 = arith.constant 0 : index
    %35 = vector.load %arg18[%c0_18, %c0_19] : memref<8x32xf32, #tpu.memory_space<vmem>>, vector<8x16xf32>
    tpu.vector_store %arg18[%c0_18, %c0_19], %34 {strides = array<i32>} : memref<8x32xf32, #tpu.memory_space<vmem>>, vector<8x16xf32>,
    %36 = vector.extract_strided_slice %10 {offsets = [0, 16], sizes = [8, 16], strides = [1, 1]} : vector<8x32xbf16> to vector<8x16xbf16>
    %37 = vector.extract_strided_slice %17 {offsets = [0, 16], sizes = [8, 16], strides = [1, 1]} : vector<8x32xbf16> to vector<8x16xbf16>
    %cst_20 = arith.constant dense<0.000000e+00> : vector<8x8xf32>
    %38 = tpu.matmul %36, %37, %cst_20 {dimension_numbers = #tpu.dot_dimension_numbers<[1], [1], [0], [0], [0, 0, 1, 0], [], []>} : vector<8x16xbf16>, vector<8x16xbf16>, vector<8x8xf32> -> vector<8x8xf32>
    %cst_21 = arith.constant dense<0xFF800000> : vector<8xf32>
    %39 = vector.multi_reduction <maximumf>, %38, %cst_21 [1] : vector<8x8xf32> to vector<8xf32>
    %40 = vector.shape_cast %39 : vector<8xf32> to vector<8x1xf32>
    %41 = vector.broadcast %40 : vector<8x1xf32> to vector<8x8xf32>
    %42 = arith.subf %38, %41 : vector<8x8xf32>
    %43 = math.exp %42 : vector<8x8xf32>
    %cst_22 = arith.constant dense<0.000000e+00> : vector<8xf32>
    %44 = vector.multi_reduction <add>, %43, %cst_22 [1] : vector<8x8xf32> to vector<8xf32>
    %45 = vector.shape_cast %44 : vector<8xf32> to vector<8x1xf32>
    %46 = arith.truncf %43 : vector<8x8xf32> to vector<8x8xbf16>
    %47 = vector.extract_strided_slice %18 {offsets = [0, 16], sizes = [8, 16], strides = [1, 1]} : vector<8x32xbf16> to vector<8x16xbf16>
    %cst_23 = arith.constant dense<0.000000e+00> : vector<8x16xf32>
    %48 = tpu.matmul %46, %47, %cst_23 {dimension_numbers = #tpu.dot_dimension_numbers<[1], [0], [0], [1], [0, 0, 1, 1], [], []>} : vector<8x8xbf16>, vector<8x16xbf16>, vector<8x16xf32> -> vector<8x16xf32>
    %49 = tpu.reciprocal %45 {approx = true} : vector<8x1xf32> -> vector<8x1xf32>
    %50 = vector.broadcast %49 : vector<8x1xf32> to vector<8x16xf32>
    %51 = arith.mulf %48, %50 : vector<8x16xf32>
    %c0_24 = arith.constant 0 : index
    %c16 = arith.constant 16 : index
    %52 = vector.load %arg18[%c0_24, %c16] : memref<8x32xf32, #tpu.memory_space<vmem>>, vector<8x16xf32>
    tpu.vector_store %arg18[%c0_24, %c16], %51 {strides = array<i32>} : memref<8x32xf32, #tpu.memory_space<vmem>>, vector<8x16xf32>,
    %c0_25 = arith.constant 0 : index
    %c0_26 = arith.constant 0 : index
    %53 = vector.load %arg18[%c0_25, %c0_26] : memref<8x32xf32, #tpu.memory_space<vmem>>, vector<8x32xf32>
    %54 = arith.truncf %53 : vector<8x32xf32> to vector<8x32xbf16>
    %c0_27 = arith.constant 0 : index
    %c0_28 = arith.constant 0 : index
    %55 = vector.load %arg9[%c0_27, %c0_28] : memref<32x32xbf16, #tpu.memory_space<vmem>>, vector<32x32xbf16>
    %c0_29 = arith.constant 0 : index
    %c0_30 = arith.constant 0 : index
    %56 = vector.load %arg10[%c0_29, %c0_30] : memref<1x32xf32, #tpu.memory_space<vmem>>, vector<1x32xf32>
    %c0_31 = arith.constant 0 : index
    %c0_32 = arith.constant 0 : index
    %57 = vector.load %arg11[%c0_31, %c0_32] : memref<1x32xf32, #tpu.memory_space<vmem>>, vector<1x32xf32>
    %c0_33 = arith.constant 0 : index
    %c0_34 = arith.constant 0 : index
    %58 = vector.load %arg12[%c0_33, %c0_34] : memref<1x32xf32, #tpu.memory_space<vmem>>, vector<1x32xf32>
    %cst_35 = arith.constant dense<0.000000e+00> : vector<8x32xf32>
    %59 = tpu.matmul %54, %55, %cst_35 {dimension_numbers = #tpu.dot_dimension_numbers<[1], [0], [0], [1], [0, 0, 1, 1], [], []>} : vector<8x32xbf16>, vector<32x32xbf16>, vector<8x32xf32> -> vector<8x32xf32>
    %60 = vector.broadcast %56 : vector<1x32xf32> to vector<8x32xf32>
    %61 = arith.addf %59, %60 : vector<8x32xf32>
    %62 = arith.addf %61, %4 : vector<8x32xf32>
    %cst_36 = arith.constant dense<0.000000e+00> : vector<8xf32>
    %63 = vector.multi_reduction <add>, %62, %cst_36 [1] : vector<8x32xf32> to vector<8xf32>
    %64 = vector.shape_cast %63 : vector<8xf32> to vector<8x1xf32>
    %cst_37 = arith.constant 3.200000e+01 : f32
    %65 = vector.broadcast %cst_37 : f32 to vector<8x1xf32>
    %66 = arith.divf %64, %65 : vector<8x1xf32>
    %67 = vector.broadcast %66 : vector<8x1xf32> to vector<8x32xf32>
    %68 = arith.subf %62, %67 : vector<8x32xf32>
    %69 = arith.mulf %68, %68 : vector<8x32xf32>
    %cst_38 = arith.constant dense<0.000000e+00> : vector<8xf32>
    %70 = vector.multi_reduction <add>, %69, %cst_38 [1] : vector<8x32xf32> to vector<8xf32>
    %71 = vector.shape_cast %70 : vector<8xf32> to vector<8x1xf32>
    %cst_39 = arith.constant 3.200000e+01 : f32
    %72 = vector.broadcast %cst_39 : f32 to vector<8x1xf32>
    %73 = arith.divf %71, %72 : vector<8x1xf32>
    %cst_40 = arith.constant 9.99999974E-6 : f32
    %74 = vector.broadcast %cst_40 : f32 to vector<8x1xf32>
    %75 = arith.addf %73, %74 : vector<8x1xf32>
    %76 = math.rsqrt %75 : vector<8x1xf32>
    %77 = vector.broadcast %76 : vector<8x1xf32> to vector<8x32xf32>
    %78 = arith.mulf %68, %77 : vector<8x32xf32>
    %79 = vector.broadcast %57 : vector<1x32xf32> to vector<8x32xf32>
    %80 = arith.mulf %78, %79 : vector<8x32xf32>
    %81 = vector.broadcast %58 : vector<1x32xf32> to vector<8x32xf32>
    %82 = arith.addf %80, %81 : vector<8x32xf32>
    %83 = arith.truncf %82 : vector<8x32xf32> to vector<8x32xbf16>
    %c0_41 = arith.constant 0 : index
    %c0_42 = arith.constant 0 : index
    %84 = vector.load %arg7[%c0_41, %c0_42] : memref<32x96xbf16, #tpu.memory_space<vmem>>, vector<32x96xbf16>
    %cst_43 = arith.constant dense<0.000000e+00> : vector<8x96xf32>
    %85 = tpu.matmul %83, %84, %cst_43 {dimension_numbers = #tpu.dot_dimension_numbers<[1], [0], [0], [1], [0, 0, 1, 1], [], []>} : vector<8x32xbf16>, vector<32x96xbf16>, vector<8x96xf32> -> vector<8x96xf32>
    %c0_44 = arith.constant 0 : index
    %c0_45 = arith.constant 0 : index
    %86 = vector.load %arg8[%c0_44, %c0_45] : memref<1x96xf32, #tpu.memory_space<vmem>>, vector<1x96xf32>
    %87 = vector.broadcast %86 : vector<1x96xf32> to vector<8x96xf32>
    %88 = arith.addf %85, %87 : vector<8x96xf32>
    %89 = arith.truncf %88 : vector<8x96xf32> to vector<8x96xbf16>
    %90 = vector.extract_strided_slice %89 {offsets = [0, 0], sizes = [8, 32], strides = [1, 1]} : vector<8x96xbf16> to vector<8x32xbf16>
    %91 = vector.extract_strided_slice %89 {offsets = [0, 32], sizes = [8, 32], strides = [1, 1]} : vector<8x96xbf16> to vector<8x32xbf16>
    %92 = vector.extract_strided_slice %89 {offsets = [0, 64], sizes = [8, 32], strides = [1, 1]} : vector<8x96xbf16> to vector<8x32xbf16>
    %93 = vector.extract_strided_slice %90 {offsets = [0, 0], sizes = [8, 16], strides = [1, 1]} : vector<8x32xbf16> to vector<8x16xbf16>
    %94 = vector.extract_strided_slice %91 {offsets = [0, 0], sizes = [8, 16], strides = [1, 1]} : vector<8x32xbf16> to vector<8x16xbf16>
    %cst_46 = arith.constant dense<0.000000e+00> : vector<8x8xf32>
    %95 = tpu.matmul %93, %94, %cst_46 {dimension_numbers = #tpu.dot_dimension_numbers<[1], [1], [0], [0], [0, 0, 1, 0], [], []>} : vector<8x16xbf16>, vector<8x16xbf16>, vector<8x8xf32> -> vector<8x8xf32>
    %cst_47 = arith.constant dense<0xFF800000> : vector<8xf32>
    %96 = vector.multi_reduction <maximumf>, %95, %cst_47 [1] : vector<8x8xf32> to vector<8xf32>
    %97 = vector.shape_cast %96 : vector<8xf32> to vector<8x1xf32>
    %98 = vector.broadcast %97 : vector<8x1xf32> to vector<8x8xf32>
    %99 = arith.subf %95, %98 : vector<8x8xf32>
    %100 = math.exp %99 : vector<8x8xf32>
    %cst_48 = arith.constant dense<0.000000e+00> : vector<8xf32>
    %101 = vector.multi_reduction <add>, %100, %cst_48 [1] : vector<8x8xf32> to vector<8xf32>
    %102 = vector.shape_cast %101 : vector<8xf32> to vector<8x1xf32>
    %103 = arith.truncf %100 : vector<8x8xf32> to vector<8x8xbf16>
    %104 = vector.extract_strided_slice %92 {offsets = [0, 0], sizes = [8, 16], strides = [1, 1]} : vector<8x32xbf16> to vector<8x16xbf16>
    %cst_49 = arith.constant dense<0.000000e+00> : vector<8x16xf32>
    %105 = tpu.matmul %103, %104, %cst_49 {dimension_numbers = #tpu.dot_dimension_numbers<[1], [0], [0], [1], [0, 0, 1, 1], [], []>} : vector<8x8xbf16>, vector<8x16xbf16>, vector<8x16xf32> -> vector<8x16xf32>
    %106 = tpu.reciprocal %102 {approx = true} : vector<8x1xf32> -> vector<8x1xf32>
    %107 = vector.broadcast %106 : vector<8x1xf32> to vector<8x16xf32>
    %108 = arith.mulf %105, %107 : vector<8x16xf32>
    %c0_50 = arith.constant 0 : index
    %c0_51 = arith.constant 0 : index
    %109 = vector.load %arg18[%c0_50, %c0_51] : memref<8x32xf32, #tpu.memory_space<vmem>>, vector<8x16xf32>
    tpu.vector_store %arg18[%c0_50, %c0_51], %108 {strides = array<i32>} : memref<8x32xf32, #tpu.memory_space<vmem>>, vector<8x16xf32>,
    %110 = vector.extract_strided_slice %90 {offsets = [0, 16], sizes = [8, 16], strides = [1, 1]} : vector<8x32xbf16> to vector<8x16xbf16>
    %111 = vector.extract_strided_slice %91 {offsets = [0, 16], sizes = [8, 16], strides = [1, 1]} : vector<8x32xbf16> to vector<8x16xbf16>
    %cst_52 = arith.constant dense<0.000000e+00> : vector<8x8xf32>
    %112 = tpu.matmul %110, %111, %cst_52 {dimension_numbers = #tpu.dot_dimension_numbers<[1], [1], [0], [0], [0, 0, 1, 0], [], []>} : vector<8x16xbf16>, vector<8x16xbf16>, vector<8x8xf32> -> vector<8x8xf32>
    %cst_53 = arith.constant dense<0xFF800000> : vector<8xf32>
    %113 = vector.multi_reduction <maximumf>, %112, %cst_53 [1] : vector<8x8xf32> to vector<8xf32>
    %114 = vector.shape_cast %113 : vector<8xf32> to vector<8x1xf32>
    %115 = vector.broadcast %114 : vector<8x1xf32> to vector<8x8xf32>
    %116 = arith.subf %112, %115 : vector<8x8xf32>
    %117 = math.exp %116 : vector<8x8xf32>
    %cst_54 = arith.constant dense<0.000000e+00> : vector<8xf32>
    %118 = vector.multi_reduction <add>, %117, %cst_54 [1] : vector<8x8xf32> to vector<8xf32>
    %119 = vector.shape_cast %118 : vector<8xf32> to vector<8x1xf32>
    %120 = arith.truncf %117 : vector<8x8xf32> to vector<8x8xbf16>
    %121 = vector.extract_strided_slice %92 {offsets = [0, 16], sizes = [8, 16], strides = [1, 1]} : vector<8x32xbf16> to vector<8x16xbf16>
    %cst_55 = arith.constant dense<0.000000e+00> : vector<8x16xf32>
    %122 = tpu.matmul %120, %121, %cst_55 {dimension_numbers = #tpu.dot_dimension_numbers<[1], [0], [0], [1], [0, 0, 1, 1], [], []>} : vector<8x8xbf16>, vector<8x16xbf16>, vector<8x16xf32> -> vector<8x16xf32>
    %123 = tpu.reciprocal %119 {approx = true} : vector<8x1xf32> -> vector<8x1xf32>
    %124 = vector.broadcast %123 : vector<8x1xf32> to vector<8x16xf32>
    %125 = arith.mulf %122, %124 : vector<8x16xf32>
    %c0_56 = arith.constant 0 : index
    %c16_57 = arith.constant 16 : index
    %126 = vector.load %arg18[%c0_56, %c16_57] : memref<8x32xf32, #tpu.memory_space<vmem>>, vector<8x16xf32>
    tpu.vector_store %arg18[%c0_56, %c16_57], %125 {strides = array<i32>} : memref<8x32xf32, #tpu.memory_space<vmem>>, vector<8x16xf32>,
    %c0_58 = arith.constant 0 : index
    %c0_59 = arith.constant 0 : index
    %127 = vector.load %arg18[%c0_58, %c0_59] : memref<8x32xf32, #tpu.memory_space<vmem>>, vector<8x32xf32>
    %128 = arith.truncf %127 : vector<8x32xf32> to vector<8x32xbf16>
    %c0_60 = arith.constant 0 : index
    %c0_61 = arith.constant 0 : index
    %129 = vector.load %arg13[%c0_60, %c0_61] : memref<32x32xbf16, #tpu.memory_space<vmem>>, vector<32x32xbf16>
    %c0_62 = arith.constant 0 : index
    %c0_63 = arith.constant 0 : index
    %130 = vector.load %arg14[%c0_62, %c0_63] : memref<1x32xf32, #tpu.memory_space<vmem>>, vector<1x32xf32>
    %c0_64 = arith.constant 0 : index
    %c0_65 = arith.constant 0 : index
    %131 = vector.load %arg15[%c0_64, %c0_65] : memref<1x32xf32, #tpu.memory_space<vmem>>, vector<1x32xf32>
    %c0_66 = arith.constant 0 : index
    %c0_67 = arith.constant 0 : index
    %132 = vector.load %arg16[%c0_66, %c0_67] : memref<1x32xf32, #tpu.memory_space<vmem>>, vector<1x32xf32>
    %cst_68 = arith.constant dense<0.000000e+00> : vector<8x32xf32>
    %133 = tpu.matmul %128, %129, %cst_68 {dimension_numbers = #tpu.dot_dimension_numbers<[1], [0], [0], [1], [0, 0, 1, 1], [], []>} : vector<8x32xbf16>, vector<32x32xbf16>, vector<8x32xf32> -> vector<8x32xf32>
    %134 = vector.broadcast %130 : vector<1x32xf32> to vector<8x32xf32>
    %135 = arith.addf %133, %134 : vector<8x32xf32>
    %136 = arith.addf %135, %82 : vector<8x32xf32>
    %cst_69 = arith.constant dense<0.000000e+00> : vector<8xf32>
    %137 = vector.multi_reduction <add>, %136, %cst_69 [1] : vector<8x32xf32> to vector<8xf32>
    %138 = vector.shape_cast %137 : vector<8xf32> to vector<8x1xf32>
    %cst_70 = arith.constant 3.200000e+01 : f32
    %139 = vector.broadcast %cst_70 : f32 to vector<8x1xf32>
    %140 = arith.divf %138, %139 : vector<8x1xf32>
    %141 = vector.broadcast %140 : vector<8x1xf32> to vector<8x32xf32>
    %142 = arith.subf %136, %141 : vector<8x32xf32>
    %143 = arith.mulf %142, %142 : vector<8x32xf32>
    %cst_71 = arith.constant dense<0.000000e+00> : vector<8xf32>
    %144 = vector.multi_reduction <add>, %143, %cst_71 [1] : vector<8x32xf32> to vector<8xf32>
    %145 = vector.shape_cast %144 : vector<8xf32> to vector<8x1xf32>
    %cst_72 = arith.constant 3.200000e+01 : f32
    %146 = vector.broadcast %cst_72 : f32 to vector<8x1xf32>
    %147 = arith.divf %145, %146 : vector<8x1xf32>
    %cst_73 = arith.constant 9.99999974E-6 : f32
    %148 = vector.broadcast %cst_73 : f32 to vector<8x1xf32>
    %149 = arith.addf %147, %148 : vector<8x1xf32>
    %150 = math.rsqrt %149 : vector<8x1xf32>
    %151 = vector.broadcast %150 : vector<8x1xf32> to vector<8x32xf32>
    %152 = arith.mulf %142, %151 : vector<8x32xf32>
    %153 = vector.broadcast %131 : vector<1x32xf32> to vector<8x32xf32>
    %154 = arith.mulf %152, %153 : vector<8x32xf32>
    %155 = vector.broadcast %132 : vector<1x32xf32> to vector<8x32xf32>
    %156 = arith.addf %154, %155 : vector<8x32xf32>
    %c0_74 = arith.constant 0 : index
    %c0_75 = arith.constant 0 : index
    %c0_76 = arith.constant 0 : index
    %157 = vector.load %arg17[%c0_74, %c0_75, %c0_76] : memref<1x8x32xf32, #tpu.memory_space<vmem>>, vector<1x8x32xf32>
    %158 = vector.shape_cast %157 : vector<1x8x32xf32> to vector<8x32xf32>
    %159 = vector.shape_cast %156 : vector<8x32xf32> to vector<1x8x32xf32>
    tpu.vector_store %arg17[%c0_74, %c0_75, %c0_76], %159 {strides = array<i32>} : memref<1x8x32xf32, #tpu.memory_space<vmem>>, vector<1x8x32xf32>,
    return
  }
  func.func @transform_0(%arg0: i32) -> (i32, i32, i32) {
    %c0_i32 = arith.constant 0 : i32
    %c0_i32_0 = arith.constant 0 : i32
    %c0_i32_1 = arith.constant 0 : i32
    return %arg0, %c0_i32, %c0_i32_0 : i32, i32, i32
  }
  func.func @transform_1(%arg0: i32) -> (i32, i32, i32) {
    %c0_i32 = arith.constant 0 : i32
    %c0_i32_0 = arith.constant 0 : i32
    %c0_i32_1 = arith.constant 0 : i32
    return %arg0, %c0_i32, %c0_i32_0 : i32, i32, i32
  }
  func.func @transform_2(%arg0: i32) -> (i32, i32) {
    %c0_i32 = arith.constant 0 : i32
    %c0_i32_0 = arith.constant 0 : i32
    %c0_i32_1 = arith.constant 0 : i32
    return %c0_i32, %c0_i32_0 : i32, i32
  }
  func.func @transform_3(%arg0: i32) -> (i32, i32) {
    %c0_i32 = arith.constant 0 : i32
    %c0_i32_0 = arith.constant 0 : i32
    %c0_i32_1 = arith.constant 0 : i32
    return %c0_i32, %c0_i32_0 : i32, i32
  }
  func.func @transform_4(%arg0: i32) -> (i32, i32) {
    %c0_i32 = arith.constant 0 : i32
    %c0_i32_0 = arith.constant 0 : i32
    %c0_i32_1 = arith.constant 0 : i32
    return %c0_i32, %c0_i32_0 : i32, i32
  }
  func.func @transform_5(%arg0: i32) -> (i32, i32) {
    %c0_i32 = arith.constant 0 : i32
    %c0_i32_0 = arith.constant 0 : i32
    %c0_i32_1 = arith.constant 0 : i32
    return %c0_i32, %c0_i32_0 : i32, i32
  }
  func.func @transform_6(%arg0: i32) -> (i32, i32) {
    %c0_i32 = arith.constant 0 : i32
    %c0_i32_0 = arith.constant 0 : i32
    %c0_i32_1 = arith.constant 0 : i32
    return %c0_i32, %c0_i32_0 : i32, i32
  }
  func.func @transform_7(%arg0: i32) -> (i32, i32) {
    %c0_i32 = arith.constant 0 : i32
    %c0_i32_0 = arith.constant 0 : i32
    %c0_i32_1 = arith.constant 0 : i32
    return %c0_i32, %c0_i32_0 : i32, i32
  }
  func.func @transform_8(%arg0: i32) -> (i32, i32) {
    %c0_i32 = arith.constant 0 : i32
    %c0_i32_0 = arith.constant 0 : i32
    %c0_i32_1 = arith.constant 0 : i32
    return %c0_i32, %c0_i32_0 : i32, i32
  }
  func.func @transform_9(%arg0: i32) -> (i32, i32) {
    %c0_i32 = arith.constant 0 : i32
    %c0_i32_0 = arith.constant 0 : i32
    %c0_i32_1 = arith.constant 0 : i32
    return %c0_i32, %c0_i32_0 : i32, i32
  }
  func.func @transform_10(%arg0: i32) -> (i32, i32) {
    %c0_i32 = arith.constant 0 : i32
    %c0_i32_0 = arith.constant 0 : i32
    %c0_i32_1 = arith.constant 0 : i32
    return %c0_i32, %c0_i32_0 : i32, i32
  }
  func.func @transform_11(%arg0: i32) -> (i32, i32) {
    %c0_i32 = arith.constant 0 : i32
    %c0_i32_0 = arith.constant 0 : i32
    %c0_i32_1 = arith.constant 0 : i32
    return %c0_i32, %c0_i32_0 : i32, i32
  }
  func.func @transform_12(%arg0: i32) -> (i32, i32) {
    %c0_i32 = arith.constant 0 : i32
    %c0_i32_0 = arith.constant 0 : i32
    %c0_i32_1 = arith.constant 0 : i32
    return %c0_i32, %c0_i32_0 : i32, i32
  }
  func.func @transform_13(%arg0: i32) -> (i32, i32) {
    %c0_i32 = arith.constant 0 : i32
    %c0_i32_0 = arith.constant 0 : i32
    %c0_i32_1 = arith.constant 0 : i32
    return %c0_i32, %c0_i32_0 : i32, i32
  }
  func.func @transform_14(%arg0: i32) -> (i32, i32) {
    %c0_i32 = arith.constant 0 : i32
    %c0_i32_0 = arith.constant 0 : i32
    %c0_i32_1 = arith.constant 0 : i32
    return %c0_i32, %c0_i32_0 : i32, i32
  }
  func.func @transform_15(%arg0: i32) -> (i32, i32) {
    %c0_i32 = arith.constant 0 : i32
    %c0_i32_0 = arith.constant 0 : i32
    %c0_i32_1 = arith.constant 0 : i32
    return %c0_i32, %c0_i32_0 : i32, i32
  }
  func.func @transform_16(%arg0: i32) -> (i32, i32, i32) {
    %c0_i32 = arith.constant 0 : i32
    %c0_i32_0 = arith.constant 0 : i32
    %c0_i32_1 = arith.constant 0 : i32
    return %arg0, %c0_i32, %c0_i32_0 : i32, i32, i32
  }
}

</mosaic_0001>

<llo_original>
// kernel: tpu_custom_call.1
$region0: #{tpu_custom_call.1}
  #allocation0 [shape = 'u32[]', space=smem, size = 0x4, offset = 0x4, fixed_abs, tag = 'smem constant byte address 0x4 - core index']
  #allocation1 [shape = 'u32[144,128]{1,0:T(1,128)}', space=vmem, size = 0x12000, scoped, tag = 'internal scratch']
  #allocation2 [shape = 'f32[8,32]{1,0:T(8,128)}', space=vmem, size = 0x1000, scoped, tag = 'scratch operand']
  %s0 = inlined_call_operand.hbm [shape: bf16[2,8,32], index: 0, kind: input, shape index: {}]
  %s1 = inlined_call_operand.hbm [shape: bf16[2,8,16], index: 1, kind: input, shape index: {}]
  %s2 = inlined_call_operand.hbm [shape: bf16[32,32], index: 2, kind: input, shape index: {}]
  %s3 = inlined_call_operand.vmem [shape: f32[1,32], index: 3, kind: input, shape index: {}]
  %s4 = inlined_call_operand.hbm [shape: bf16[16,64], index: 4, kind: input, shape index: {}]
  %s5 = inlined_call_operand.vmem [shape: f32[1,64], index: 5, kind: input, shape index: {}]
  %s6 = inlined_call_operand.hbm [shape: bf16[32,96], index: 6, kind: input, shape index: {}]
  %s7 = inlined_call_operand.vmem [shape: f32[1,96], index: 7, kind: input, shape index: {}]
  %s8 = inlined_call_operand.hbm [shape: bf16[32,32], index: 8, kind: input, shape index: {}]
  %s9 = inlined_call_operand.vmem [shape: f32[1,32], index: 9, kind: input, shape index: {}]
  %s10 = inlined_call_operand.vmem [shape: f32[1,32], index: 10, kind: input, shape index: {}]
  %s11 = inlined_call_operand.hbm [shape: f32[1,32], index: 11, kind: input, shape index: {}]
  %s12 = inlined_call_operand.vmem [shape: bf16[32,32], index: 12, kind: input, shape index: {}]
  %s13 = inlined_call_operand.vmem [shape: f32[1,32], index: 13, kind: input, shape index: {}]
  %s14 = inlined_call_operand.vmem [shape: f32[1,32], index: 14, kind: input, shape index: {}]
  %s15 = inlined_call_operand.vmem [shape: f32[1,32], index: 15, kind: input, shape index: {}]
  %s16 = inlined_call_operand.hbm [shape: f32[2,8,32], index: 16, kind: output, shape index: {}]
  %s17 = sld [smem:[#allocation0]]
  $region125: #{tpu_custom_call.1} parent=0
    _
  %s19 = ssub.s32 1, %s17
  %s20 = scalar_select 0, %s19, %s17
  $region1: #{tpu_custom_call.1} parent=0
    #allocation3 [shape = 'u8[4096]{0}', space=vmem, size = 0x1000, scoped, tag = 'input window, operand 0']
    #allocation4 [shape = 's32[2]{0}', space=sflag, size = 0x8, scoped, tag = 'scoped memory for tpu_custom_call.1']
    #allocation5 [shape = 's32[2]{0}', space=sflag, size = 0x8, scoped, tag = 'scoped memory for tpu_custom_call.1']
    #allocation6 [shape = 'u8[4096]{0}', space=vmem, size = 0x1000, scoped, tag = 'input window, operand 1']
    #allocation7 [shape = 's32[2]{0}', space=sflag, size = 0x8, scoped, tag = 'scoped memory for tpu_custom_call.1']
    #allocation8 [shape = 'u8[8192]{0}', space=vmem, size = 0x2000, scoped, tag = 'input window, operand 2, single buffered']
    #allocation9 [shape = 'u8[4096]{0}', space=vmem, size = 0x1000, scoped, tag = 'input window, operand 4, single buffered']
    #allocation10 [shape = 's32[1]{0}', space=sflag, size = 0x4, scoped, tag = 'scoped memory for tpu_custom_call.1']
    #allocation11 [shape = 'u8[8192]{0}', space=vmem, size = 0x2000, scoped, tag = 'input window, operand 6, single buffered']
    #allocation12 [shape = 'u8[8192]{0}', space=vmem, size = 0x2000, scoped, tag = 'input window, operand 8, single buffered']
    #allocation13 [shape = 's32[1]{0}', space=sflag, size = 0x4, scoped, tag = 'scoped memory for tpu_custom_call.1']
    #allocation14 [shape = 'u8[512]{0}', space=vmem, size = 0x400, scoped, tag = 'input window, operand 11, single buffered']
    #allocation15 [shape = 'u8[8192]{0}', space=vmem, size = 0x2000, scoped, tag = 'output window, operand 0']
    %21 = vsyncpa [#allocation4], 0
    %s22 = scalar_lea.sflag [#allocation4], 1
    %23 = vsyncpa %s22, 0
    %24 = vsyncpa [#allocation7], 0
    %s25 = scalar_lea.sflag [#allocation7], 1
    %26 = vsyncpa %s25, 0
    %27 = vsyncpa [#allocation10], 0
    %28 = vsyncpa [#allocation13], 0
    %29 = vsyncpa [#allocation5], 0
    %s30 = scalar_lea.sflag [#allocation5], 1
    %31 = vsyncpa %s30, 0
    loop: start=0, step=1, limit=4
    $region2: #{tpu_custom_call.1} parent=1 // loop_pre_header
      _
    $region3: #{tpu_custom_call.1} parent=1 // loop_header
      %s33 = sphi 0, %s37
      %p34 = scmp.ge.s32.totalorder %s33, 4
      %s43 = sphi 0, %s45
      %s46 = sphi 0, %s43
      %s47 = sphi 0, %s46
      %s63 = sphi 0, %s47
      %s69 = sphi 0, %s71
      %s72 = sphi 0, %s69
      %s73 = sphi 0, %s72
      %s89 = sphi 0, %s73
      %s93 = sphi 0, %s93
      %s95 = sphi 0, %s93
      %s96 = sphi 0, %s95
      %s110 = sphi 0, %s96
      %s114 = sphi 0, %s114
      %s116 = sphi 0, %s114
      %s117 = sphi 0, %s116
      %s131 = sphi 0, %s117
      %s135 = sphi 0, %s135
      %s137 = sphi 0, %s135
      %s138 = sphi 0, %s137
      %s152 = sphi 0, %s138
      %s156 = sphi 0, %s156
      %s158 = sphi 0, %s156
      %s159 = sphi 0, %s158
      %s173 = sphi 0, %s159
      %s177 = sphi 0, %s177
      %s179 = sphi 0, %s177
      %s180 = sphi 0, %s179
      %s194 = sphi 0, %s180
      %s198 = sphi 0, %s198
      %s200 = sphi 0, %s198
      %s201 = sphi 0, %s200
      %s215 = sphi 0, %s201
      %s219 = sphi 0, %s219
      %s221 = sphi 0, %s219
      %s222 = sphi 0, %s221
      %s236 = sphi 0, %s222
      %s240 = sphi 0, %s240
      %s242 = sphi 0, %s240
      %s243 = sphi 0, %s242
      %s257 = sphi 0, %s243
      %s261 = sphi 0, %s261
      %s263 = sphi 0, %s261
      %s264 = sphi 0, %s263
      %s278 = sphi 0, %s264
      %s282 = sphi 0, %s282
      %s284 = sphi 0, %s282
      %s285 = sphi 0, %s284
      %s299 = sphi 0, %s285
      %s303 = sphi 0, %s303
      %s305 = sphi 0, %s303
      %s306 = sphi 0, %s305
      %s320 = sphi 0, %s306
      %s324 = sphi 0, %s324
      %s326 = sphi 0, %s324
      %s327 = sphi 0, %s326
      %s341 = sphi 0, %s327
      %s345 = sphi 0, %s345
      %s347 = sphi 0, %s345
      %s348 = sphi 0, %s347
      %s362 = sphi 0, %s348
      %s366 = sphi 0, %s366
      %s368 = sphi 0, %s366
      %s369 = sphi 0, %s368
      %s383 = sphi 0, %s369
      %s389 = sphi 0, %s391
      %s392 = sphi 0, %s389
      %s393 = sphi 0, %s392
      %s409 = sphi 0, %s393
    $region4: #{tpu_custom_call.1} parent=1 // loop_header_branch
      %36 = sbr.rel (%p34) target = $region8
    $region5: #{tpu_custom_call.1} parent=1 // loop_body
      %s38 = ssub.s32 %s33, 1
      %s39 = ssub.s32 %s33, 2
      %s40 = sadd.s32 %s33, 1
      %s41 = ssub.s32 %s33, %s40
      %p42 = scmp.eq.s32.totalorder %s41, 0
      %s44 = sadd.s32 %s43, 1
      %s45 = scalar_select %p42, %s43, %s44
      %p48 = pneg %p42
      %p49 = scmp.eq.s32.totalorder %s33, 1
      %p50 = por %p48, %p49
      %p51 = scmp.ne.s32.totalorder %s43, %s46
      %p52 = scmp.eq.s32.totalorder %s33, 0
      %p53 = por %p51, %p52
      %p54 = scmp.ne.s32.totalorder %s43, %s46
      %p55 = scmp.eq.s32.totalorder %s38, 1
      %p56 = por %p54, %p55
      %p57 = scmp.ne.s32.totalorder %s46, %s47
      %p58 = scmp.eq.s32.totalorder %s38, 0
      %p59 = por %p57, %p58
      %p60 = scmp.ne.s32.totalorder %s46, %s47
      %p61 = scmp.eq.s32.totalorder %s39, 1
      %p62 = por %p60, %p61
      %p64 = scmp.ne.s32.totalorder %s47, %s63
      %p65 = scmp.eq.s32.totalorder %s39, 0
      %p66 = por %p64, %p65
      %s67 = ssub.s32 %s33, %s40
      %p68 = scmp.eq.s32.totalorder %s67, 0
      %s70 = sadd.s32 %s69, 1
      %s71 = scalar_select %p68, %s69, %s70
      %p74 = pneg %p68
      %p75 = scmp.eq.s32.totalorder %s33, 1
      %p76 = por %p74, %p75
      %p77 = scmp.ne.s32.totalorder %s69, %s72
      %p78 = scmp.eq.s32.totalorder %s33, 0
      %p79 = por %p77, %p78
      %p80 = scmp.ne.s32.totalorder %s69, %s72
      %p81 = scmp.eq.s32.totalorder %s38, 1
      %p82 = por %p80, %p81
      %p83 = scmp.ne.s32.totalorder %s72, %s73
      %p84 = scmp.eq.s32.totalorder %s38, 0
      %p85 = por %p83, %p84
      %p86 = scmp.ne.s32.totalorder %s72, %s73
      %p87 = scmp.eq.s32.totalorder %s39, 1
      %p88 = por %p86, %p87
      %p90 = scmp.ne.s32.totalorder %s73, %s89
      %p91 = scmp.eq.s32.totalorder %s39, 0
      %p92 = por %p90, %p91
      %s94 = sadd.s32 %s93, 1
      %p97 = scmp.eq.s32.totalorder %s33, 1
      %p98 = scmp.ne.s32.totalorder %s93, %s95
      %p99 = scmp.eq.s32.totalorder %s33, 0
      %p100 = por %p98, %p99
      %p101 = scmp.ne.s32.totalorder %s93, %s95
      %p102 = scmp.eq.s32.totalorder %s38, 1
      %p103 = por %p101, %p102
      %p104 = scmp.ne.s32.totalorder %s95, %s96
      %p105 = scmp.eq.s32.totalorder %s38, 0
      %p106 = por %p104, %p105
      %p107 = scmp.ne.s32.totalorder %s95, %s96
      %p108 = scmp.eq.s32.totalorder %s39, 1
      %p109 = por %p107, %p108
      %p111 = scmp.ne.s32.totalorder %s96, %s110
      %p112 = scmp.eq.s32.totalorder %s39, 0
      %p113 = por %p111, %p112
      %s115 = sadd.s32 %s114, 1
      %p118 = scmp.eq.s32.totalorder %s33, 1
      %p119 = scmp.ne.s32.totalorder %s114, %s116
      %p120 = scmp.eq.s32.totalorder %s33, 0
      %p121 = por %p119, %p120
      %p122 = scmp.ne.s32.totalorder %s114, %s116
      %p123 = scmp.eq.s32.totalorder %s38, 1
      %p124 = por %p122, %p123
      %p125 = scmp.ne.s32.totalorder %s116, %s117
      %p126 = scmp.eq.s32.totalorder %s38, 0
      %p127 = por %p125, %p126
      %p128 = scmp.ne.s32.totalorder %s116, %s117
      %p129 = scmp.eq.s32.totalorder %s39, 1
      %p130 = por %p128, %p129
      %p132 = scmp.ne.s32.totalorder %s117, %s131
      %p133 = scmp.eq.s32.totalorder %s39, 0
      %p134 = por %p132, %p133
      %s136 = sadd.s32 %s135, 1
      %p139 = scmp.eq.s32.totalorder %s33, 1
      %p140 = scmp.ne.s32.totalorder %s135, %s137
      %p141 = scmp.eq.s32.totalorder %s33, 0
      %p142 = por %p140, %p141
      %p143 = scmp.ne.s32.totalorder %s135, %s137
      %p144 = scmp.eq.s32.totalorder %s38, 1
      %p145 = por %p143, %p144
      %p146 = scmp.ne.s32.totalorder %s137, %s138
      %p147 = scmp.eq.s32.totalorder %s38, 0
      %p148 = por %p146, %p147
      %p149 = scmp.ne.s32.totalorder %s137, %s138
      %p150 = scmp.eq.s32.totalorder %s39, 1
      %p151 = por %p149, %p150
      %p153 = scmp.ne.s32.totalorder %s138, %s152
      %p154 = scmp.eq.s32.totalorder %s39, 0
      %p155 = por %p153, %p154
      %s157 = sadd.s32 %s156, 1
      %p160 = scmp.eq.s32.totalorder %s33, 1
      %p161 = scmp.ne.s32.totalorder %s156, %s158
      %p162 = scmp.eq.s32.totalorder %s33, 0
      %p163 = por %p161, %p162
      %p164 = scmp.ne.s32.totalorder %s156, %s158
      %p165 = scmp.eq.s32.totalorder %s38, 1
      %p166 = por %p164, %p165
      %p167 = scmp.ne.s32.totalorder %s158, %s159
      %p168 = scmp.eq.s32.totalorder %s38, 0
      %p169 = por %p167, %p168
      %p170 = scmp.ne.s32.totalorder %s158, %s159
      %p171 = scmp.eq.s32.totalorder %s39, 1
      %p172 = por %p170, %p171
      %p174 = scmp.ne.s32.totalorder %s159, %s173
      %p175 = scmp.eq.s32.totalorder %s39, 0
      %p176 = por %p174, %p175
      %s178 = sadd.s32 %s177, 1
      %p181 = scmp.eq.s32.totalorder %s33, 1
      %p182 = scmp.ne.s32.totalorder %s177, %s179
      %p183 = scmp.eq.s32.totalorder %s33, 0
      %p184 = por %p182, %p183
      %p185 = scmp.ne.s32.totalorder %s177, %s179
      %p186 = scmp.eq.s32.totalorder %s38, 1
      %p187 = por %p185, %p186
      %p188 = scmp.ne.s32.totalorder %s179, %s180
      %p189 = scmp.eq.s32.totalorder %s38, 0
      %p190 = por %p188, %p189
      %p191 = scmp.ne.s32.totalorder %s179, %s180
      %p192 = scmp.eq.s32.totalorder %s39, 1
      %p193 = por %p191, %p192
      %p195 = scmp.ne.s32.totalorder %s180, %s194
      %p196 = scmp.eq.s32.totalorder %s39, 0
      %p197 = por %p195, %p196
      %s199 = sadd.s32 %s198, 1
      %p202 = scmp.eq.s32.totalorder %s33, 1
      %p203 = scmp.ne.s32.totalorder %s198, %s200
      %p204 = scmp.eq.s32.totalorder %s33, 0
      %p205 = por %p203, %p204
      %p206 = scmp.ne.s32.totalorder %s198, %s200
      %p207 = scmp.eq.s32.totalorder %s38, 1
      %p208 = por %p206, %p207
      %p209 = scmp.ne.s32.totalorder %s200, %s201
      %p210 = scmp.eq.s32.totalorder %s38, 0
      %p211 = por %p209, %p210
      %p212 = scmp.ne.s32.totalorder %s200, %s201
      %p213 = scmp.eq.s32.totalorder %s39, 1
      %p214 = por %p212, %p213
      %p216 = scmp.ne.s32.totalorder %s201, %s215
      %p217 = scmp.eq.s32.totalorder %s39, 0
      %p218 = por %p216, %p217
      %s220 = sadd.s32 %s219, 1
      %p223 = scmp.eq.s32.totalorder %s33, 1
      %p224 = scmp.ne.s32.totalorder %s219, %s221
      %p225 = scmp.eq.s32.totalorder %s33, 0
      %p226 = por %p224, %p225
      %p227 = scmp.ne.s32.totalorder %s219, %s221
      %p228 = scmp.eq.s32.totalorder %s38, 1
      %p229 = por %p227, %p228
      %p230 = scmp.ne.s32.totalorder %s221, %s222
      %p231 = scmp.eq.s32.totalorder %s38, 0
      %p232 = por %p230, %p231
      %p233 = scmp.ne.s32.totalorder %s221, %s222
      %p234 = scmp.eq.s32.totalorder %s39, 1
      %p235 = por %p233, %p234
      %p237 = scmp.ne.s32.totalorder %s222, %s236
      %p238 = scmp.eq.s32.totalorder %s39, 0
      %p239 = por %p237, %p238
      %s241 = sadd.s32 %s240, 1
      %p244 = scmp.eq.s32.totalorder %s33, 1
      %p245 = scmp.ne.s32.totalorder %s240, %s242
      %p246 = scmp.eq.s32.totalorder %s33, 0
      %p247 = por %p245, %p246
      %p248 = scmp.ne.s32.totalorder %s240, %s242
      %p249 = scmp.eq.s32.totalorder %s38, 1
      %p250 = por %p248, %p249
      %p251 = scmp.ne.s32.totalorder %s242, %s243
      %p252 = scmp.eq.s32.totalorder %s38, 0
      %p253 = por %p251, %p252
      %p254 = scmp.ne.s32.totalorder %s242, %s243
      %p255 = scmp.eq.s32.totalorder %s39, 1
      %p256 = por %p254, %p255
      %p258 = scmp.ne.s32.totalorder %s243, %s257
      %p259 = scmp.eq.s32.totalorder %s39, 0
      %p260 = por %p258, %p259
      %s262 = sadd.s32 %s261, 1
      %p265 = scmp.eq.s32.totalorder %s33, 1
      %p266 = scmp.ne.s32.totalorder %s261, %s263
      %p267 = scmp.eq.s32.totalorder %s33, 0
      %p268 = por %p266, %p267
      %p269 = scmp.ne.s32.totalorder %s261, %s263
      %p270 = scmp.eq.s32.totalorder %s38, 1
      %p271 = por %p269, %p270
      %p272 = scmp.ne.s32.totalorder %s263, %s264
      %p273 = scmp.eq.s32.totalorder %s38, 0
      %p274 = por %p272, %p273
      %p275 = scmp.ne.s32.totalorder %s263, %s264
      %p276 = scmp.eq.s32.totalorder %s39, 1
      %p277 = por %p275, %p276
      %p279 = scmp.ne.s32.totalorder %s264, %s278
      %p280 = scmp.eq.s32.totalorder %s39, 0
      %p281 = por %p279, %p280
      %s283 = sadd.s32 %s282, 1
      %p286 = scmp.eq.s32.totalorder %s33, 1
      %p287 = scmp.ne.s32.totalorder %s282, %s284
      %p288 = scmp.eq.s32.totalorder %s33, 0
      %p289 = por %p287, %p288
      %p290 = scmp.ne.s32.totalorder %s282, %s284
      %p291 = scmp.eq.s32.totalorder %s38, 1
      %p292 = por %p290, %p291
      %p293 = scmp.ne.s32.totalorder %s284, %s285
      %p294 = scmp.eq.s32.totalorder %s38, 0
      %p295 = por %p293, %p294
      %p296 = scmp.ne.s32.totalorder %s284, %s285
      %p297 = scmp.eq.s32.totalorder %s39, 1
      %p298 = por %p296, %p297
      %p300 = scmp.ne.s32.totalorder %s285, %s299
      %p301 = scmp.eq.s32.totalorder %s39, 0
      %p302 = por %p300, %p301
      %s304 = sadd.s32 %s303, 1
      %p307 = scmp.eq.s32.totalorder %s33, 1
      %p308 = scmp.ne.s32.totalorder %s303, %s305
      %p309 = scmp.eq.s32.totalorder %s33, 0
      %p310 = por %p308, %p309
      %p311 = scmp.ne.s32.totalorder %s303, %s305
      %p312 = scmp.eq.s32.totalorder %s38, 1
      %p313 = por %p311, %p312
      %p314 = scmp.ne.s32.totalorder %s305, %s306
      %p315 = scmp.eq.s32.totalorder %s38, 0
      %p316 = por %p314, %p315
      %p317 = scmp.ne.s32.totalorder %s305, %s306
      %p318 = scmp.eq.s32.totalorder %s39, 1
      %p319 = por %p317, %p318
      %p321 = scmp.ne.s32.totalorder %s306, %s320
      %p322 = scmp.eq.s32.totalorder %s39, 0
      %p323 = por %p321, %p322
      %s325 = sadd.s32 %s324, 1
      %p328 = scmp.eq.s32.totalorder %s33, 1
      %p329 = scmp.ne.s32.totalorder %s324, %s326
      %p330 = scmp.eq.s32.totalorder %s33, 0
      %p331 = por %p329, %p330
      %p332 = scmp.ne.s32.totalorder %s324, %s326
      %p333 = scmp.eq.s32.totalorder %s38, 1
      %p334 = por %p332, %p333
      %p335 = scmp.ne.s32.totalorder %s326, %s327
      %p336 = scmp.eq.s32.totalorder %s38, 0
      %p337 = por %p335, %p336
      %p338 = scmp.ne.s32.totalorder %s326, %s327
      %p339 = scmp.eq.s32.totalorder %s39, 1
      %p340 = por %p338, %p339
      %p342 = scmp.ne.s32.totalorder %s327, %s341
      %p343 = scmp.eq.s32.totalorder %s39, 0
      %p344 = por %p342, %p343
      %s346 = sadd.s32 %s345, 1
      %p349 = scmp.eq.s32.totalorder %s33, 1
      %p350 = scmp.ne.s32.totalorder %s345, %s347
      %p351 = scmp.eq.s32.totalorder %s33, 0
      %p352 = por %p350, %p351
      %p353 = scmp.ne.s32.totalorder %s345, %s347
      %p354 = scmp.eq.s32.totalorder %s38, 1
      %p355 = por %p353, %p354
      %p356 = scmp.ne.s32.totalorder %s347, %s348
      %p357 = scmp.eq.s32.totalorder %s38, 0
      %p358 = por %p356, %p357
      %p359 = scmp.ne.s32.totalorder %s347, %s348
      %p360 = scmp.eq.s32.totalorder %s39, 1
      %p361 = por %p359, %p360
      %p363 = scmp.ne.s32.totalorder %s348, %s362
      %p364 = scmp.eq.s32.totalorder %s39, 0
      %p365 = por %p363, %p364
      %s367 = sadd.s32 %s366, 1
      %p370 = scmp.eq.s32.totalorder %s33, 1
      %p371 = scmp.ne.s32.totalorder %s366, %s368
      %p372 = scmp.eq.s32.totalorder %s33, 0
      %p373 = por %p371, %p372
      %p374 = scmp.ne.s32.totalorder %s366, %s368
      %p375 = scmp.eq.s32.totalorder %s38, 1
      %p376 = por %p374, %p375
      %p377 = scmp.ne.s32.totalorder %s368, %s369
      %p378 = scmp.eq.s32.totalorder %s38, 0
      %p379 = por %p377, %p378
      %p380 = scmp.ne.s32.totalorder %s368, %s369
      %p381 = scmp.eq.s32.totalorder %s39, 1
      %p382 = por %p380, %p381
      %p384 = scmp.ne.s32.totalorder %s369, %s383
      %p385 = scmp.eq.s32.totalorder %s39, 0
      %p386 = por %p384, %p385
      %s387 = ssub.s32 %s33, %s40
      %p388 = scmp.eq.s32.totalorder %s387, 0
      %s390 = sadd.s32 %s389, 1
      %s391 = scalar_select %p388, %s389, %s390
      %p394 = pneg %p388
      %p395 = scmp.eq.s32.totalorder %s33, 1
      %p396 = por %p394, %p395
      %p397 = scmp.ne.s32.totalorder %s389, %s392
      %p398 = scmp.eq.s32.totalorder %s33, 0
      %p399 = por %p397, %p398
      %p400 = scmp.ne.s32.totalorder %s389, %s392
      %p401 = scmp.eq.s32.totalorder %s38, 1
      %p402 = por %p400, %p401
      %p403 = scmp.ne.s32.totalorder %s392, %s393
      %p404 = scmp.eq.s32.totalorder %s38, 0
      %p405 = por %p403, %p404
      %p406 = scmp.ne.s32.totalorder %s392, %s393
      %p407 = scmp.eq.s32.totalorder %s39, 1
      %p408 = por %p406, %p407
      %p410 = scmp.ne.s32.totalorder %s393, %s409
      %p411 = scmp.eq.s32.totalorder %s39, 0
      %p412 = por %p410, %p411
      %p413 = scmp.le.s32.totalorder 1, %s33
      %p414 = scmp.lt.s32.totalorder %s33, 3
      %p415 = pnand %p413, %p414
      %p416 = pneg %p415
      // Predicated region
      $region9: #{tpu_custom_call.1} parent=5 // pred_check
        _
      $region10: #{tpu_custom_call.1} parent=5 // pred_check_branch
        %418 = sbr.rel (%p415) target = $region12
      $region11: #{tpu_custom_call.1} parent=5 // pred_region
        %s419 = ssub.s32 %s33, 1
        // Predicated region
        $region13: #{tpu_custom_call.1} parent=11 // pred_check
          %p420 = pneg %p106
        $region14: #{tpu_custom_call.1} parent=11 // pred_check_branch
          %422 = sbr.rel (%p420) target = $region16
        $region15: #{tpu_custom_call.1} parent=11 // pred_region
          %s424 = ssub.s32 256, 256
          %425 = vsyncadd [#allocation7], %s424
          %s426 = sshll.u32 [#allocation8], 4
          %s427 = int_to_ptr.vmem [resolvable:$true] %s426
          %432 = dma.hbm_to_vmem [thread:$0]  %s2, 256, %s427, [#allocation7], 64, 64, 4
        $region16: #{tpu_custom_call.1} parent=11 // pred_fallthru
          _
        // Predicated region
        $region17: #{tpu_custom_call.1} parent=11 // pred_check
          %p433 = pneg %p127
        $region18: #{tpu_custom_call.1} parent=11 // pred_check_branch
          %435 = sbr.rel (%p433) target = $region20
        $region19: #{tpu_custom_call.1} parent=11 // pred_region
          _
        $region20: #{tpu_custom_call.1} parent=11 // pred_fallthru
          _
        // Predicated region
        $region21: #{tpu_custom_call.1} parent=11 // pred_check
          %p436 = pneg %p148
        $region22: #{tpu_custom_call.1} parent=11 // pred_check_branch
          %438 = sbr.rel (%p436) target = $region24
        $region23: #{tpu_custom_call.1} parent=11 // pred_region
          %s440 = ssub.s32 128, 128
          %441 = vsyncadd [#allocation10], %s440
          %s442 = sshll.u32 [#allocation9], 4
          %s443 = int_to_ptr.vmem [resolvable:$true] %s442
          %448 = dma.hbm_to_vmem [thread:$0]  %s4, 128, %s443, [#allocation10], 64, 64, 4
        $region24: #{tpu_custom_call.1} parent=11 // pred_fallthru
          _
        // Predicated region
        $region25: #{tpu_custom_call.1} parent=11 // pred_check
          %p449 = pneg %p169
        $region26: #{tpu_custom_call.1} parent=11 // pred_check_branch
          %451 = sbr.rel (%p449) target = $region28
        $region27: #{tpu_custom_call.1} parent=11 // pred_region
          _
        $region28: #{tpu_custom_call.1} parent=11 // pred_fallthru
          _
        // Predicated region
        $region29: #{tpu_custom_call.1} parent=11 // pred_check
          %p452 = pneg %p190
        $region30: #{tpu_custom_call.1} parent=11 // pred_check_branch
          %454 = sbr.rel (%p452) target = $region32
        $region31: #{tpu_custom_call.1} parent=11 // pred_region
          %s456 = ssub.s32 256, 256
          %457 = vsyncadd [#allocation10], %s456
          %s458 = sshll.u32 [#allocation11], 4
          %s459 = int_to_ptr.vmem [resolvable:$true] %s458
          %464 = dma.hbm_to_vmem [thread:$0]  %s6, 256, %s459, [#allocation10], 64, 64, 4
        $region32: #{tpu_custom_call.1} parent=11 // pred_fallthru
          _
        // Predicated region
        $region33: #{tpu_custom_call.1} parent=11 // pred_check
          %p465 = pneg %p211
        $region34: #{tpu_custom_call.1} parent=11 // pred_check_branch
          %467 = sbr.rel (%p465) target = $region36
        $region35: #{tpu_custom_call.1} parent=11 // pred_region
          _
        $region36: #{tpu_custom_call.1} parent=11 // pred_fallthru
          _
        // Predicated region
        $region37: #{tpu_custom_call.1} parent=11 // pred_check
          %p468 = pneg %p232
        $region38: #{tpu_custom_call.1} parent=11 // pred_check_branch
          %470 = sbr.rel (%p468) target = $region40
        $region39: #{tpu_custom_call.1} parent=11 // pred_region
          %s472 = ssub.s32 256, 256
          %473 = vsyncadd [#allocation13], %s472
          %s474 = sshll.u32 [#allocation12], 4
          %s475 = int_to_ptr.vmem [resolvable:$true] %s474
          %480 = dma.hbm_to_vmem [thread:$0]  %s8, 256, %s475, [#allocation13], 64, 64, 4
        $region40: #{tpu_custom_call.1} parent=11 // pred_fallthru
          _
        // Predicated region
        $region41: #{tpu_custom_call.1} parent=11 // pred_check
          %p481 = pneg %p253
        $region42: #{tpu_custom_call.1} parent=11 // pred_check_branch
          %483 = sbr.rel (%p481) target = $region44
        $region43: #{tpu_custom_call.1} parent=11 // pred_region
          _
        $region44: #{tpu_custom_call.1} parent=11 // pred_fallthru
          _
        // Predicated region
        $region45: #{tpu_custom_call.1} parent=11 // pred_check
          %p484 = pneg %p274
        $region46: #{tpu_custom_call.1} parent=11 // pred_check_branch
          %486 = sbr.rel (%p484) target = $region48
        $region47: #{tpu_custom_call.1} parent=11 // pred_region
          _
        $region48: #{tpu_custom_call.1} parent=11 // pred_fallthru
          _
        // Predicated region
        $region49: #{tpu_custom_call.1} parent=11 // pred_check
          %p487 = pneg %p295
        $region50: #{tpu_custom_call.1} parent=11 // pred_check_branch
          %489 = sbr.rel (%p487) target = $region52
        $region51: #{tpu_custom_call.1} parent=11 // pred_region
          %s491 = ssub.s32 16, 16
          %492 = vsyncadd [#allocation13], %s491
          %s494 = sshll.u32 [#allocation14], 4
          %s495 = int_to_ptr.vmem [resolvable:$true] %s494
          %497 = dma.hbm_to_vmem [thread:$0]  %s11, 16, %s495, [#allocation13]
        $region52: #{tpu_custom_call.1} parent=11 // pred_fallthru
          _
        // Predicated region
        $region53: #{tpu_custom_call.1} parent=11 // pred_check
          %p498 = pneg %p316
        $region54: #{tpu_custom_call.1} parent=11 // pred_check_branch
          %500 = sbr.rel (%p498) target = $region56
        $region55: #{tpu_custom_call.1} parent=11 // pred_region
          _
        $region56: #{tpu_custom_call.1} parent=11 // pred_fallthru
          _
        // Predicated region
        $region57: #{tpu_custom_call.1} parent=11 // pred_check
          %p501 = pneg %p337
        $region58: #{tpu_custom_call.1} parent=11 // pred_check_branch
          %503 = sbr.rel (%p501) target = $region60
        $region59: #{tpu_custom_call.1} parent=11 // pred_region
          _
        $region60: #{tpu_custom_call.1} parent=11 // pred_fallthru
          _
        // Predicated region
        $region61: #{tpu_custom_call.1} parent=11 // pred_check
          %p504 = pneg %p358
        $region62: #{tpu_custom_call.1} parent=11 // pred_check_branch
          %506 = sbr.rel (%p504) target = $region64
        $region63: #{tpu_custom_call.1} parent=11 // pred_region
          _
        $region64: #{tpu_custom_call.1} parent=11 // pred_fallthru
          _
        // Predicated region
        $region65: #{tpu_custom_call.1} parent=11 // pred_check
          %p507 = pneg %p379
        $region66: #{tpu_custom_call.1} parent=11 // pred_check_branch
          %509 = sbr.rel (%p507) target = $region68
        $region67: #{tpu_custom_call.1} parent=11 // pred_region
          _
        $region68: #{tpu_custom_call.1} parent=11 // pred_fallthru
          _
      $region12: #{tpu_custom_call.1} parent=5 // pred_fallthru
        _
      %p510 = scmp.lt.s32.totalorder %s33, 2
      // Predicated region
      $region69: #{tpu_custom_call.1} parent=5 // pred_check
        %p511 = pneg %p510
      $region70: #{tpu_custom_call.1} parent=5 // pred_check_branch
        %513 = sbr.rel (%p511) target = $region72
      $region71: #{tpu_custom_call.1} parent=5 // pred_region
        // Predicated region
        $region73: #{tpu_custom_call.1} parent=71 // pred_check
          %p514 = pneg %p53
        $region74: #{tpu_custom_call.1} parent=71 // pred_check_branch
          %516 = sbr.rel (%p514) target = $region76
        $region75: #{tpu_custom_call.1} parent=71 // pred_region
          %s517 = sand.u32 %s43, 1
          %s518 = scalar_lea.sflag [#allocation4], %s517
          %s519 = sand.u32 %s43, 1
          %s520 = smul.addr %s519, 4
          %s521 = scalar_lea.vmem [#allocation3], %s520
          %s523 = ssub.s32 64, 64
          %524 = vsyncadd %s518, %s523
          %s525 = smul.addr %s33, 64
          %s526 = scalar_lea.hbm %s0, %s525
          %s528 = sshll.u32 %s521, 4
          %s529 = int_to_ptr.vmem [resolvable:$true] %s528
          %531 = dma.hbm_to_vmem [thread:$0]  %s526, 64, %s529, %s518
        $region76: #{tpu_custom_call.1} parent=71 // pred_fallthru
          _
        // Predicated region
        $region77: #{tpu_custom_call.1} parent=71 // pred_check
          %p532 = pneg %p79
        $region78: #{tpu_custom_call.1} parent=71 // pred_check_branch
          %534 = sbr.rel (%p532) target = $region80
        $region79: #{tpu_custom_call.1} parent=71 // pred_region
          %s535 = sand.u32 %s33, 1
          %s536 = scalar_lea.sflag [#allocation7], %s535
          %s537 = sand.u32 %s69, 1
          %s538 = smul.addr %s537, 4
          %s539 = scalar_lea.vmem [#allocation6], %s538
          %s541 = ssub.s32 64, 64
          %542 = vsyncadd %s536, %s541
          %s543 = smul.addr %s33, 64
          %s544 = scalar_lea.hbm %s1, %s543
          %s546 = sshll.u32 %s539, 4
          %s547 = int_to_ptr.vmem [resolvable:$true] %s546
          %549 = dma.hbm_to_vmem [thread:$0]  %s544, 64, %s547, %s536
        $region80: #{tpu_custom_call.1} parent=71 // pred_fallthru
          _
      $region72: #{tpu_custom_call.1} parent=5 // pred_fallthru
        _
      %p550 = scmp.le.s32.totalorder 1, %s33
      %p551 = scmp.lt.s32.totalorder %s33, 3
      %p552 = pnand %p550, %p551
      %p553 = pneg %p552
      // Predicated region
      $region81: #{tpu_custom_call.1} parent=5 // pred_check
        _
      $region82: #{tpu_custom_call.1} parent=5 // pred_check_branch
        %555 = sbr.rel (%p552) target = $region84
      $region83: #{tpu_custom_call.1} parent=5 // pred_region
        %s556 = ssub.s32 %s33, 1
        %s557 = sand.u32 %s46, 1
        %s558 = scalar_lea.sflag [#allocation4], %s557
        %s559 = sand.u32 %s46, 1
        %s560 = smul.addr %s559, 4
        %s561 = scalar_lea.vmem [#allocation3], %s560
        // Predicated region
        $region85: #{tpu_custom_call.1} parent=83 // pred_check
          %p562 = pneg %p59
        $region86: #{tpu_custom_call.1} parent=83 // pred_check_branch
          %564 = sbr.rel (%p562) target = $region88
        $region87: #{tpu_custom_call.1} parent=83 // pred_region
          %565 = dma.done %s558, 64
        $region88: #{tpu_custom_call.1} parent=83 // pred_fallthru
          _
        %s566 = sand.u32 %s38, 1
        %s567 = scalar_lea.sflag [#allocation7], %s566
        %s568 = sand.u32 %s72, 1
        %s569 = smul.addr %s568, 4
        %s570 = scalar_lea.vmem [#allocation6], %s569
        // Predicated region
        $region89: #{tpu_custom_call.1} parent=83 // pred_check
          %p571 = pneg %p85
        $region90: #{tpu_custom_call.1} parent=83 // pred_check_branch
          %573 = sbr.rel (%p571) target = $region92
        $region91: #{tpu_custom_call.1} parent=83 // pred_region
          %574 = dma.done %s567, 64
        $region92: #{tpu_custom_call.1} parent=83 // pred_fallthru
          _
        // Predicated region
        $region93: #{tpu_custom_call.1} parent=83 // pred_check
          %p575 = pneg %p106
        $region94: #{tpu_custom_call.1} parent=83 // pred_check_branch
          %577 = sbr.rel (%p575) target = $region96
        $region95: #{tpu_custom_call.1} parent=83 // pred_region
          %578 = dma.done [#allocation7], 256
        $region96: #{tpu_custom_call.1} parent=83 // pred_fallthru
          _
        // Predicated region
        $region97: #{tpu_custom_call.1} parent=83 // pred_check
          %p579 = pneg %p148
        $region98: #{tpu_custom_call.1} parent=83 // pred_check_branch
          %581 = sbr.rel (%p579) target = $region100
        $region99: #{tpu_custom_call.1} parent=83 // pred_region
          %582 = dma.done [#allocation10], 128
        $region100: #{tpu_custom_call.1} parent=83 // pred_fallthru
          _
        // Predicated region
        $region101: #{tpu_custom_call.1} parent=83 // pred_check
          %p583 = pneg %p190
        $region102: #{tpu_custom_call.1} parent=83 // pred_check_branch
          %585 = sbr.rel (%p583) target = $region104
        $region103: #{tpu_custom_call.1} parent=83 // pred_region
          %586 = dma.done [#allocation10], 256
        $region104: #{tpu_custom_call.1} parent=83 // pred_fallthru
          _
        // Predicated region
        $region105: #{tpu_custom_call.1} parent=83 // pred_check
          %p587 = pneg %p232
        $region106: #{tpu_custom_call.1} parent=83 // pred_check_branch
          %589 = sbr.rel (%p587) target = $region108
        $region107: #{tpu_custom_call.1} parent=83 // pred_region
          %590 = dma.done [#allocation13], 256
        $region108: #{tpu_custom_call.1} parent=83 // pred_fallthru
          _
        // Predicated region
        $region109: #{tpu_custom_call.1} parent=83 // pred_check
          %p591 = pneg %p295
        $region110: #{tpu_custom_call.1} parent=83 // pred_check_branch
          %593 = sbr.rel (%p591) target = $region112
        $region111: #{tpu_custom_call.1} parent=83 // pred_region
          %594 = dma.done [#allocation13], 16
        $region112: #{tpu_custom_call.1} parent=83 // pred_fallthru
          _
        %s595 = sand.u32 %s46, 1
        %s596 = scalar_lea.sflag [#allocation4], %s595
        %s597 = sand.u32 %s46, 1
        %s598 = smul.addr %s597, 4
        %s599 = scalar_lea.vmem [#allocation3], %s598
        %p600 = pneg %p59
        %p601 = pneg %p56
        %s602 = sand.u32 %s38, 1
        %s603 = scalar_lea.sflag [#allocation7], %s602
        %s604 = sand.u32 %s72, 1
        %s605 = smul.addr %s604, 4
        %s606 = scalar_lea.vmem [#allocation6], %s605
        %p607 = pneg %p85
        %p608 = pneg %p82
        %p609 = pneg %p106
        %p610 = pneg %p103
        %p611 = pneg %p127
        %p612 = pneg %p124
        %p613 = pneg %p148
        %p614 = pneg %p145
        %p615 = pneg %p169
        %p616 = pneg %p166
        %p617 = pneg %p190
        %p618 = pneg %p187
        %p619 = pneg %p211
        %p620 = pneg %p208
        %p621 = pneg %p232
        %p622 = pneg %p229
        %p623 = pneg %p253
        %p624 = pneg %p250
        %p625 = pneg %p274
        %p626 = pneg %p271
        %p627 = pneg %p295
        %p628 = pneg %p292
        %p629 = pneg %p316
        %p630 = pneg %p313
        %p631 = pneg %p337
        %p632 = pneg %p334
        %p633 = pneg %p358
        %p634 = pneg %p355
        %p635 = pneg %p379
        %p636 = pneg %p376
        %p637 = pneg %p405
        %p638 = pneg %p402
        %s639 = sand.u32 %s392, 1
        %s640 = scalar_lea.sflag [#allocation5], %s639
        %s641 = sand.u32 %s392, 1
        %s642 = smul.addr %s641, 8
        %s643 = scalar_lea.vmem [#allocation15], %s642
        %v645 = vld [vmem:[%s561] sm:$0xf]
        %v646 = vld [vmem:[%s570] sm:$0xf]
        %v647 = vunpack.c.l.bf16 %v645
        %v648 = vld [vmem:[#allocation8] sm:$0xf]
        %v649 = vld [vmem:[#allocation8 + $0x4] sm:$0xf]
        %v650 = vld [vmem:[#allocation8 + $0x8] sm:$0xf]
        %v651 = vld [vmem:[#allocation8 + $0xc] sm:$0xf]
        %v652 = vld [vmem:[%s3] sm:$0x1]
        %v654 = vlaneseq
        %v655 = vshrl.u32 %v654, 7
        %v656 = vsub.s32 0, %v655
        %v657 = vrot.slane %v652, %v656
        %v663 = vunpack.c.l.b16 %v648
        %v664 = vunpack.c.l.b16 %v649
        %v665 = vunpack.c.l.b16 %v650
        %v666 = vunpack.c.l.b16 %v651
        %v667 = vpack.c.b16 %v664, %v663
        %v668 = vpack.c.b16 %v666, %v665
        %vm671 = vcmask 261120
        %v673 = vsel %vm671, %v645, 0
        %675 = vmatprep.subr.bf16.mxu0 0
        %676 = vmatpush1.bf16.msra.mxu0 0
        %677 = vmatprep.subr.bf16.mxu0 0
        %678 = vmatpush1.bf16.msra.mxu0 0
        %679 = vmatprep.subr.bf16.mxu0 0
        %680 = vmatpush1.bf16.msra.mxu0 0
        %681 = vmatprep.subr.bf16.mxu0 0
        %682 = vmatpush1.bf16.msra.mxu0 0
        %683 = vmatprep.subr.bf16.mxu0 0
        %684 = vmatpush1.bf16.msra.mxu0 0
        %685 = vmatprep.subr.bf16.mxu0 0
        %686 = vmatpush1.bf16.msra.mxu0 0
        %687 = vmatprep.subr.bf16.mxu0 0
        %688 = vmatpush1.bf16.msra.mxu0 %v668
        %689 = vmatprep.subr.bf16.mxu0 0
        %690 = vmatpush1.bf16.msra.mxu0 %v667
        %691 = vmatprep.subr.bf16.mxu0 0
        %692 = vmatpush2.bf16.msra.mxu0 0
        %693 = vmatprep.subr.bf16.mxu0 0
        %694 = vmatpush2.bf16.msra.mxu0 0
        %695 = vmatprep.subr.bf16.mxu0 0
        %696 = vmatpush2.bf16.msra.mxu0 0
        %697 = vmatprep.subr.bf16.mxu0 0
        %698 = vmatpush2.bf16.msra.mxu0 0
        %699 = vmatprep.subr.bf16.mxu0 0
        %700 = vmatpush2.bf16.msra.mxu0 0
        %701 = vmatprep.subr.bf16.mxu0 0
        %702 = vmatpush2.bf16.msra.mxu0 0
        %703 = vmatprep.subr.bf16.mxu0 0
        %704 = vmatpush2.bf16.msra.mxu0 0
        %705 = vmatprep.subr.bf16.mxu0 0
        %706 = vmatpush2.bf16.msra.mxu0 0
        %707 = vmatprep.mubr.bf16.mxu0 0
        %708 = vmatmul.mubr.bf16.gmra.mxu0 %v673
        %v709 = vpop.f32.mrf.mxu0
        %v710 = vadd.f32 %v657, %v709
        %v711 = vpop.f32.mrf.mxu0
        %v712 = vpop.f32.mrf.mxu0
        %v713 = vpop.f32.mrf.mxu0
        %714 = vdwg.mxu0
        %v715 = vpack.c.bf16 %v710, %v710
        %v716 = vld [vmem:[#allocation9] sm:$0xf]
        %v717 = vld [vmem:[#allocation9 + $0x4] sm:$0xf]
        %v718 = vld [vmem:[%s5] sm:$0x1]
        %v720 = vlaneseq
        %v721 = vshrl.u32 %v720, 7
        %v722 = vsub.s32 0, %v721
        %v723 = vrot.slane %v718, %v722
        %v727 = vunpack.c.l.b16 %v716
        %v728 = vunpack.c.l.b16 %v717
        %v729 = vpack.c.b16 %v728, %v727
        %vm731 = vcmask 130048
        %v733 = vsel %vm731, %v646, 0
        %735 = vmatprep.subr.bf16.mxu0 0
        %736 = vmatpush1.bf16.msra.mxu0 0
        %737 = vmatprep.subr.bf16.mxu0 0
        %738 = vmatpush1.bf16.msra.mxu0 0
        %739 = vmatprep.subr.bf16.mxu0 0
        %740 = vmatpush1.bf16.msra.mxu0 0
        %741 = vmatprep.subr.bf16.mxu0 0
        %742 = vmatpush1.bf16.msra.mxu0 0
        %743 = vmatprep.subr.bf16.mxu0 0
        %744 = vmatpush1.bf16.msra.mxu0 0
        %745 = vmatprep.subr.bf16.mxu0 0
        %746 = vmatpush1.bf16.msra.mxu0 0
        %747 = vmatprep.subr.bf16.mxu0 0
        %748 = vmatpush1.bf16.msra.mxu0 0
        %749 = vmatprep.subr.bf16.mxu0 0
        %750 = vmatpush1.bf16.msra.mxu0 %v729
        %751 = vmatprep.subr.bf16.mxu0 0
        %752 = vmatpush2.bf16.msra.mxu0 0
        %753 = vmatprep.subr.bf16.mxu0 0
        %754 = vmatpush2.bf16.msra.mxu0 0
        %755 = vmatprep.subr.bf16.mxu0 0
        %756 = vmatpush2.bf16.msra.mxu0 0
        %757 = vmatprep.subr.bf16.mxu0 0
        %758 = vmatpush2.bf16.msra.mxu0 0
        %759 = vmatprep.subr.bf16.mxu0 0
        %760 = vmatpush2.bf16.msra.mxu0 0
        %761 = vmatprep.subr.bf16.mxu0 0
        %762 = vmatpush2.bf16.msra.mxu0 0
        %763 = vmatprep.subr.bf16.mxu0 0
        %764 = vmatpush2.bf16.msra.mxu0 0
        %765 = vmatprep.subr.bf16.mxu0 0
        %766 = vmatpush2.bf16.msra.mxu0 0
        %767 = vmatprep.mubr.bf16.mxu0 0
        %768 = vmatmul.mubr.bf16.gmra.mxu0 %v733
        %v769 = vpop.f32.mrf.mxu0
        %v770 = vadd.f32 %v723, %v769
        %v771 = vpop.f32.mrf.mxu0
        %v772 = vpop.f32.mrf.mxu0
        %v773 = vpop.f32.mrf.mxu0
        %774 = vdwg.mxu0
        %v775 = vpack.c.bf16 %v770, %v770
        %v777 = vsel %vm731, %v715, 0
        %v780 = vsel %vm731, %v775, 0
        %782 = vmatprep.subr.bf16.mxu0 0
        %783 = vmatpush1.bf16.xpose.msra.mxu0 0
        %784 = vmatprep.subr.bf16.mxu0 0
        %785 = vmatpush1.bf16.xpose.msra.mxu0 0
        %786 = vmatprep.subr.bf16.mxu0 0
        %787 = vmatpush1.bf16.xpose.msra.mxu0 0
        %788 = vmatprep.subr.bf16.mxu0 0
        %789 = vmatpush1.bf16.xpose.msra.mxu0 0
        %790 = vmatprep.subr.bf16.mxu0 0
        %791 = vmatpush1.bf16.xpose.msra.mxu0 0
        %792 = vmatprep.subr.bf16.mxu0 0
        %793 = vmatpush1.bf16.xpose.msra.mxu0 0
        %794 = vmatprep.subr.bf16.mxu0 0
        %795 = vmatpush1.bf16.xpose.msra.mxu0 0
        %796 = vmatprep.subr.bf16.mxu0 0
        %797 = vmatpush1.bf16.xpose.msra.mxu0 %v780
        %798 = vmatprep.subr.bf16.mxu0 0
        %799 = vmatpush2.bf16.xpose.msra.mxu0 0
        %800 = vmatprep.subr.bf16.mxu0 0
        %801 = vmatpush2.bf16.xpose.msra.mxu0 0
        %802 = vmatprep.subr.bf16.mxu0 0
        %803 = vmatpush2.bf16.xpose.msra.mxu0 0
        %804 = vmatprep.subr.bf16.mxu0 0
        %805 = vmatpush2.bf16.xpose.msra.mxu0 0
        %806 = vmatprep.subr.bf16.mxu0 0
        %807 = vmatpush2.bf16.xpose.msra.mxu0 0
        %808 = vmatprep.subr.bf16.mxu0 0
        %809 = vmatpush2.bf16.xpose.msra.mxu0 0
        %810 = vmatprep.subr.bf16.mxu0 0
        %811 = vmatpush2.bf16.xpose.msra.mxu0 0
        %812 = vmatprep.subr.bf16.mxu0 0
        %813 = vmatpush2.bf16.xpose.msra.mxu0 0
        %814 = vmatprep.mubr.bf16.mxu0 0
        %815 = vmatmul.mubr.bf16.gmra.mxu0 %v777
        %v816 = vpop.f32.mrf.mxu0
        %v817 = vadd.f32 0.0, %v816
        %v818 = vpop.f32.mrf.mxu0
        %v819 = vpop.f32.mrf.mxu0
        %v820 = vpop.f32.mrf.mxu0
        %821 = vdwg.mxu0
        %vm822 = vcmask 64512
        %v823 = vsel %vm822, %v817, -inf
        %824 = vmax.xlane.f32.xlu0 %v823
        %v825 = vpop.xlane.xlu0 %824
        %v826 = vsub.f32 %v817, %v825
        %v827 = vmul.f32 %v826, 1.442695
        %v828 = vpow.pop %v827
        %v829 = vsel %vm822, %v828, 0.0
        %830 = vadd.xlane.f32.xlu0 %v829
        %v831 = vpop.xlane.xlu0 %830
        %v832 = vpack.c.bf16 %v828, %v828
        %834 = vrot.lane.b32.xlu0 %v775, 96
        %v835 = vpop.permute.xlu0 %834
        %v837 = vsel %vm822, %v832, 0
        %vm839 = vcmask 1043456
        %v841 = vsel %vm839, %v835, 0
        %843 = vmatprep.subr.bf16.mxu0 0
        %844 = vmatpush1.bf16.msra.mxu0 0
        %845 = vmatprep.subr.bf16.mxu0 0
        %846 = vmatpush1.bf16.msra.mxu0 0
        %847 = vmatprep.subr.bf16.mxu0 0
        %848 = vmatpush1.bf16.msra.mxu0 0
        %849 = vmatprep.subr.bf16.mxu0 0
        %850 = vmatpush1.bf16.msra.mxu0 0
        %851 = vmatprep.subr.bf16.mxu0 0
        %852 = vmatpush1.bf16.msra.mxu0 0
        %853 = vmatprep.subr.bf16.mxu0 0
        %854 = vmatpush1.bf16.msra.mxu0 0
        %855 = vmatprep.subr.bf16.mxu0 0
        %856 = vmatpush1.bf16.msra.mxu0 0
        %857 = vmatprep.subr.bf16.mxu0 0
        %858 = vmatpush1.bf16.msra.mxu0 %v841
        %859 = vmatprep.subr.bf16.mxu0 0
        %860 = vmatpush2.bf16.msra.mxu0 0
        %861 = vmatprep.subr.bf16.mxu0 0
        %862 = vmatpush2.bf16.msra.mxu0 0
        %863 = vmatprep.subr.bf16.mxu0 0
        %864 = vmatpush2.bf16.msra.mxu0 0
        %865 = vmatprep.subr.bf16.mxu0 0
        %866 = vmatpush2.bf16.msra.mxu0 0
        %867 = vmatprep.subr.bf16.mxu0 0
        %868 = vmatpush2.bf16.msra.mxu0 0
        %869 = vmatprep.subr.bf16.mxu0 0
        %870 = vmatpush2.bf16.msra.mxu0 0
        %871 = vmatprep.subr.bf16.mxu0 0
        %872 = vmatpush2.bf16.msra.mxu0 0
        %873 = vmatprep.subr.bf16.mxu0 0
        %874 = vmatpush2.bf16.msra.mxu0 0
        %875 = vmatprep.mubr.bf16.mxu0 0
        %876 = vmatmul.mubr.bf16.gmra.mxu0 %v837
        %v877 = vpop.f32.mrf.mxu0
        %v878 = vadd.f32 0.0, %v877
        %v879 = vpop.f32.mrf.mxu0
        %v880 = vpop.f32.mrf.mxu0
        %v881 = vpop.f32.mrf.mxu0
        %882 = vdwg.mxu0
        %v883 = vrcp.pop %v831
        %v884 = vmul.f32 %v878, %v883
        %885 = vst.msk [vmem:[#allocation2] sm:$0xff] %vm731, %v884
        %887 = vrot.lane.b32.xlu0 %v715, 112
        %v888 = vpop.permute.xlu0 %887
        %889 = vrot.lane.b32.xlu0 %v775, 112
        %v890 = vpop.permute.xlu0 %889
        %v892 = vsel %vm731, %v888, 0
        %v895 = vsel %vm731, %v890, 0
        %897 = vmatprep.subr.bf16.mxu0 0
        %898 = vmatpush1.bf16.xpose.msra.mxu0 0
        %899 = vmatprep.subr.bf16.mxu0 0
        %900 = vmatpush1.bf16.xpose.msra.mxu0 0
        %901 = vmatprep.subr.bf16.mxu0 0
        %902 = vmatpush1.bf16.xpose.msra.mxu0 0
        %903 = vmatprep.subr.bf16.mxu0 0
        %904 = vmatpush1.bf16.xpose.msra.mxu0 0
        %905 = vmatprep.subr.bf16.mxu0 0
        %906 = vmatpush1.bf16.xpose.msra.mxu0 0
        %907 = vmatprep.subr.bf16.mxu0 0
        %908 = vmatpush1.bf16.xpose.msra.mxu0 0
        %909 = vmatprep.subr.bf16.mxu0 0
        %910 = vmatpush1.bf16.xpose.msra.mxu0 0
        %911 = vmatprep.subr.bf16.mxu0 0
        %912 = vmatpush1.bf16.xpose.msra.mxu0 %v895
        %913 = vmatprep.subr.bf16.mxu0 0
        %914 = vmatpush2.bf16.xpose.msra.mxu0 0
        %915 = vmatprep.subr.bf16.mxu0 0
        %916 = vmatpush2.bf16.xpose.msra.mxu0 0
        %917 = vmatprep.subr.bf16.mxu0 0
        %918 = vmatpush2.bf16.xpose.msra.mxu0 0
        %919 = vmatprep.subr.bf16.mxu0 0
        %920 = vmatpush2.bf16.xpose.msra.mxu0 0
        %921 = vmatprep.subr.bf16.mxu0 0
        %922 = vmatpush2.bf16.xpose.msra.mxu0 0
        %923 = vmatprep.subr.bf16.mxu0 0
        %924 = vmatpush2.bf16.xpose.msra.mxu0 0
        %925 = vmatprep.subr.bf16.mxu0 0
        %926 = vmatpush2.bf16.xpose.msra.mxu0 0
        %927 = vmatprep.subr.bf16.mxu0 0
        %928 = vmatpush2.bf16.xpose.msra.mxu0 0
        %929 = vmatprep.mubr.bf16.mxu0 0
        %930 = vmatmul.mubr.bf16.gmra.mxu0 %v892
        %v931 = vpop.f32.mrf.mxu0
        %v932 = vadd.f32 0.0, %v931
        %v933 = vpop.f32.mrf.mxu0
        %v934 = vpop.f32.mrf.mxu0
        %v935 = vpop.f32.mrf.mxu0
        %936 = vdwg.mxu0
        %v937 = vsel %vm822, %v932, -inf
        %938 = vmax.xlane.f32.xlu0 %v937
        %v939 = vpop.xlane.xlu0 %938
        %v940 = vsub.f32 %v932, %v939
        %v941 = vmul.f32 %v940, 1.442695
        %v942 = vpow.pop %v941
        %v943 = vsel %vm822, %v942, 0.0
        %944 = vadd.xlane.f32.xlu0 %v943
        %v945 = vpop.xlane.xlu0 %944
        %v946 = vpack.c.bf16 %v942, %v942
        %947 = vrot.lane.b32.xlu0 %v775, 80
        %v948 = vpop.permute.xlu0 %947
        %v950 = vsel %vm822, %v946, 0
        %v953 = vsel %vm839, %v948, 0
        %955 = vmatprep.subr.bf16.mxu0 0
        %956 = vmatpush1.bf16.msra.mxu0 0
        %957 = vmatprep.subr.bf16.mxu0 0
        %958 = vmatpush1.bf16.msra.mxu0 0
        %959 = vmatprep.subr.bf16.mxu0 0
        %960 = vmatpush1.bf16.msra.mxu0 0
        %961 = vmatprep.subr.bf16.mxu0 0
        %962 = vmatpush1.bf16.msra.mxu0 0
        %963 = vmatprep.subr.bf16.mxu0 0
        %964 = vmatpush1.bf16.msra.mxu0 0
        %965 = vmatprep.subr.bf16.mxu0 0
        %966 = vmatpush1.bf16.msra.mxu0 0
        %967 = vmatprep.subr.bf16.mxu0 0
        %968 = vmatpush1.bf16.msra.mxu0 0
        %969 = vmatprep.subr.bf16.mxu0 0
        %970 = vmatpush1.bf16.msra.mxu0 %v953
        %971 = vmatprep.subr.bf16.mxu0 0
        %972 = vmatpush2.bf16.msra.mxu0 0
        %973 = vmatprep.subr.bf16.mxu0 0
        %974 = vmatpush2.bf16.msra.mxu0 0
        %975 = vmatprep.subr.bf16.mxu0 0
        %976 = vmatpush2.bf16.msra.mxu0 0
        %977 = vmatprep.subr.bf16.mxu0 0
        %978 = vmatpush2.bf16.msra.mxu0 0
        %979 = vmatprep.subr.bf16.mxu0 0
        %980 = vmatpush2.bf16.msra.mxu0 0
        %981 = vmatprep.subr.bf16.mxu0 0
        %982 = vmatpush2.bf16.msra.mxu0 0
        %983 = vmatprep.subr.bf16.mxu0 0
        %984 = vmatpush2.bf16.msra.mxu0 0
        %985 = vmatprep.subr.bf16.mxu0 0
        %986 = vmatpush2.bf16.msra.mxu0 0
        %987 = vmatprep.mubr.bf16.mxu0 0
        %988 = vmatmul.mubr.bf16.gmra.mxu0 %v950
        %v989 = vpop.f32.mrf.mxu0
        %v990 = vadd.f32 0.0, %v989
        %v991 = vpop.f32.mrf.mxu0
        %v992 = vpop.f32.mrf.mxu0
        %v993 = vpop.f32.mrf.mxu0
        %994 = vdwg.mxu0
        %v995 = vrcp.pop %v945
        %v996 = vmul.f32 %v990, %v995
        %998 = vrot.lane.b32.xlu0 %v996, 16
        %v999 = vpop.permute.xlu0 %998
        %vm1001 = vcmask 261248
        %1002 = vst.msk [vmem:[#allocation2] sm:$0xff] %vm1001, %v999
        %v1003 = vld [vmem:[#allocation2] sm:$0xff]
        %v1004 = vpack.c.bf16 %v1003, %v1003
        %v1005 = vld [vmem:[#allocation12] sm:$0xf]
        %v1006 = vld [vmem:[#allocation12 + $0x4] sm:$0xf]
        %v1007 = vld [vmem:[#allocation12 + $0x8] sm:$0xf]
        %v1008 = vld [vmem:[#allocation12 + $0xc] sm:$0xf]
        %v1009 = vld [vmem:[%s9] sm:$0x1]
        %v1010 = vld [vmem:[%s10] sm:$0x1]
        %v1011 = vld [vmem:[#allocation14] sm:$0x1]
        %v1013 = vlaneseq
        %v1014 = vshrl.u32 %v1013, 7
        %v1015 = vsub.s32 0, %v1014
        %v1016 = vrot.slane %v1009, %v1015
        %v1022 = vunpack.c.l.b16 %v1005
        %v1023 = vunpack.c.l.b16 %v1006
        %v1024 = vunpack.c.l.b16 %v1007
        %v1025 = vunpack.c.l.b16 %v1008
        %v1026 = vpack.c.b16 %v1023, %v1022
        %v1027 = vpack.c.b16 %v1025, %v1024
        %v1031 = vsel %vm671, %v1004, 0
        %1033 = vmatprep.subr.bf16.mxu0 0
        %1034 = vmatpush1.bf16.msra.mxu0 0
        %1035 = vmatprep.subr.bf16.mxu0 0
        %1036 = vmatpush1.bf16.msra.mxu0 0
        %1037 = vmatprep.subr.bf16.mxu0 0
        %1038 = vmatpush1.bf16.msra.mxu0 0
        %1039 = vmatprep.subr.bf16.mxu0 0
        %1040 = vmatpush1.bf16.msra.mxu0 0
        %1041 = vmatprep.subr.bf16.mxu0 0
        %1042 = vmatpush1.bf16.msra.mxu0 0
        %1043 = vmatprep.subr.bf16.mxu0 0
        %1044 = vmatpush1.bf16.msra.mxu0 0
        %1045 = vmatprep.subr.bf16.mxu0 0
        %1046 = vmatpush1.bf16.msra.mxu0 %v1027
        %1047 = vmatprep.subr.bf16.mxu0 0
        %1048 = vmatpush1.bf16.msra.mxu0 %v1026
        %1049 = vmatprep.subr.bf16.mxu0 0
        %1050 = vmatpush2.bf16.msra.mxu0 0
        %1051 = vmatprep.subr.bf16.mxu0 0
        %1052 = vmatpush2.bf16.msra.mxu0 0
        %1053 = vmatprep.subr.bf16.mxu0 0
        %1054 = vmatpush2.bf16.msra.mxu0 0
        %1055 = vmatprep.subr.bf16.mxu0 0
        %1056 = vmatpush2.bf16.msra.mxu0 0
        %1057 = vmatprep.subr.bf16.mxu0 0
        %1058 = vmatpush2.bf16.msra.mxu0 0
        %1059 = vmatprep.subr.bf16.mxu0 0
        %1060 = vmatpush2.bf16.msra.mxu0 0
        %1061 = vmatprep.subr.bf16.mxu0 0
        %1062 = vmatpush2.bf16.msra.mxu0 0
        %1063 = vmatprep.subr.bf16.mxu0 0
        %1064 = vmatpush2.bf16.msra.mxu0 0
        %1065 = vmatprep.mubr.bf16.mxu0 0
        %1066 = vmatmul.mubr.bf16.gmra.mxu0 %v1031
        %v1067 = vpop.f32.mrf.mxu0
        %v1068 = vadd.f32 %v1016, %v1067
        %v1069 = vpop.f32.mrf.mxu0
        %v1070 = vpop.f32.mrf.mxu0
        %v1071 = vpop.f32.mrf.mxu0
        %1072 = vdwg.mxu0
        %v1073 = vadd.f32 %v1068, %v647
        %v1074 = vsel %vm671, %v1073, 0.0
        %1075 = vadd.xlane.f32.xlu0 %v1074
        %v1076 = vpop.xlane.xlu0 %1075
        %v1077 = vrcp.pop 32.0
        %v1078 = vmul.f32 %v1076, %v1077
        %v1079 = vsub.f32 %v1073, %v1078
        %v1080 = vmul.f32 %v1079, %v1079
        %v1081 = vsel %vm671, %v1080, 0.0
        %1082 = vadd.xlane.f32.xlu0 %v1081
        %v1083 = vpop.xlane.xlu0 %1082
        %v1084 = vmul.f32 %v1083, %v1077
        %v1085 = vadd.f32 %v1084, 1e-05
        %v1086 = vrsqrt.pop %v1085
        %v1087 = vmul.f32 %v1079, %v1086
        %v1089 = vlaneseq
        %v1090 = vshrl.u32 %v1089, 7
        %v1091 = vsub.s32 0, %v1090
        %v1092 = vrot.slane %v1010, %v1091
        %v1094 = vmul.f32 %v1087, %v1092
        %v1096 = vlaneseq
        %v1097 = vshrl.u32 %v1096, 7
        %v1098 = vsub.s32 0, %v1097
        %v1099 = vrot.slane %v1011, %v1098
        %v1101 = vadd.f32 %v1094, %v1099
        %v1102 = vpack.c.bf16 %v1101, %v1101
        %v1103 = vld [vmem:[#allocation11] sm:$0xf]
        %v1104 = vld [vmem:[#allocation11 + $0x4] sm:$0xf]
        %v1105 = vld [vmem:[#allocation11 + $0x8] sm:$0xf]
        %v1106 = vld [vmem:[#allocation11 + $0xc] sm:$0xf]
        %v1107 = vld [vmem:[%s7] sm:$0x1]
        %v1109 = vlaneseq
        %v1110 = vshrl.u32 %v1109, 7
        %v1111 = vsub.s32 0, %v1110
        %v1112 = vrot.slane %v1107, %v1111
        %v1118 = vunpack.c.l.b16 %v1103
        %v1119 = vunpack.c.l.b16 %v1104
        %v1120 = vunpack.c.l.b16 %v1105
        %v1121 = vunpack.c.l.b16 %v1106
        %v1122 = vpack.c.b16 %v1119, %v1118
        %v1123 = vpack.c.b16 %v1121, %v1120
        %v1127 = vsel %vm671, %v1102, 0
        %1129 = vmatprep.subr.bf16.mxu0 0
        %1130 = vmatpush1.bf16.msra.mxu0 0
        %1131 = vmatprep.subr.bf16.mxu0 0
        %1132 = vmatpush1.bf16.msra.mxu0 0
        %1133 = vmatprep.subr.bf16.mxu0 0
        %1134 = vmatpush1.bf16.msra.mxu0 0
        %1135 = vmatprep.subr.bf16.mxu0 0
        %1136 = vmatpush1.bf16.msra.mxu0 0
        %1137 = vmatprep.subr.bf16.mxu0 0
        %1138 = vmatpush1.bf16.msra.mxu0 0
        %1139 = vmatprep.subr.bf16.mxu0 0
        %1140 = vmatpush1.bf16.msra.mxu0 0
        %1141 = vmatprep.subr.bf16.mxu0 0
        %1142 = vmatpush1.bf16.msra.mxu0 %v1123
        %1143 = vmatprep.subr.bf16.mxu0 0
        %1144 = vmatpush1.bf16.msra.mxu0 %v1122
        %1145 = vmatprep.subr.bf16.mxu0 0
        %1146 = vmatpush2.bf16.msra.mxu0 0
        %1147 = vmatprep.subr.bf16.mxu0 0
        %1148 = vmatpush2.bf16.msra.mxu0 0
        %1149 = vmatprep.subr.bf16.mxu0 0
        %1150 = vmatpush2.bf16.msra.mxu0 0
        %1151 = vmatprep.subr.bf16.mxu0 0
        %1152 = vmatpush2.bf16.msra.mxu0 0
        %1153 = vmatprep.subr.bf16.mxu0 0
        %1154 = vmatpush2.bf16.msra.mxu0 0
        %1155 = vmatprep.subr.bf16.mxu0 0
        %1156 = vmatpush2.bf16.msra.mxu0 0
        %1157 = vmatprep.subr.bf16.mxu0 0
        %1158 = vmatpush2.bf16.msra.mxu0 0
        %1159 = vmatprep.subr.bf16.mxu0 0
        %1160 = vmatpush2.bf16.msra.mxu0 0
        %1161 = vmatprep.mubr.bf16.mxu0 0
        %1162 = vmatmul.mubr.bf16.gmra.mxu0 %v1127
        %v1163 = vpop.f32.mrf.mxu0
        %v1164 = vadd.f32 %v1112, %v1163
        %v1165 = vpop.f32.mrf.mxu0
        %v1166 = vpop.f32.mrf.mxu0
        %v1167 = vpop.f32.mrf.mxu0
        %1168 = vdwg.mxu0
        %v1169 = vpack.c.bf16 %v1164, %v1164
        %1171 = vrot.lane.b32.xlu0 %v1169, 96
        %v1172 = vpop.permute.xlu0 %1171
        %v1174 = vsel %vm731, %v1169, 0
        %v1177 = vsel %vm731, %v1172, 0
        %1179 = vmatprep.subr.bf16.mxu0 0
        %1180 = vmatpush1.bf16.xpose.msra.mxu0 0
        %1181 = vmatprep.subr.bf16.mxu0 0
        %1182 = vmatpush1.bf16.xpose.msra.mxu0 0
        %1183 = vmatprep.subr.bf16.mxu0 0
        %1184 = vmatpush1.bf16.xpose.msra.mxu0 0
        %1185 = vmatprep.subr.bf16.mxu0 0
        %1186 = vmatpush1.bf16.xpose.msra.mxu0 0
        %1187 = vmatprep.subr.bf16.mxu0 0
        %1188 = vmatpush1.bf16.xpose.msra.mxu0 0
        %1189 = vmatprep.subr.bf16.mxu0 0
        %1190 = vmatpush1.bf16.xpose.msra.mxu0 0
        %1191 = vmatprep.subr.bf16.mxu0 0
        %1192 = vmatpush1.bf16.xpose.msra.mxu0 0
        %1193 = vmatprep.subr.bf16.mxu0 0
        %1194 = vmatpush1.bf16.xpose.msra.mxu0 %v1177
        %1195 = vmatprep.subr.bf16.mxu0 0
        %1196 = vmatpush2.bf16.xpose.msra.mxu0 0
        %1197 = vmatprep.subr.bf16.mxu0 0
        %1198 = vmatpush2.bf16.xpose.msra.mxu0 0
        %1199 = vmatprep.subr.bf16.mxu0 0
        %1200 = vmatpush2.bf16.xpose.msra.mxu0 0
        %1201 = vmatprep.subr.bf16.mxu0 0
        %1202 = vmatpush2.bf16.xpose.msra.mxu0 0
        %1203 = vmatprep.subr.bf16.mxu0 0
        %1204 = vmatpush2.bf16.xpose.msra.mxu0 0
        %1205 = vmatprep.subr.bf16.mxu0 0
        %1206 = vmatpush2.bf16.xpose.msra.mxu0 0
        %1207 = vmatprep.subr.bf16.mxu0 0
        %1208 = vmatpush2.bf16.xpose.msra.mxu0 0
        %1209 = vmatprep.subr.bf16.mxu0 0
        %1210 = vmatpush2.bf16.xpose.msra.mxu0 0
        %1211 = vmatprep.mubr.bf16.mxu0 0
        %1212 = vmatmul.mubr.bf16.gmra.mxu0 %v1174
        %v1213 = vpop.f32.mrf.mxu0
        %v1214 = vadd.f32 0.0, %v1213
        %v1215 = vpop.f32.mrf.mxu0
        %v1216 = vpop.f32.mrf.mxu0
        %v1217 = vpop.f32.mrf.mxu0
        %1218 = vdwg.mxu0
        %v1219 = vsel %vm822, %v1214, -inf
        %1220 = vmax.xlane.f32.xlu0 %v1219
        %v1221 = vpop.xlane.xlu0 %1220
        %v1222 = vsub.f32 %v1214, %v1221
        %v1223 = vmul.f32 %v1222, 1.442695
        %v1224 = vpow.pop %v1223
        %v1225 = vsel %vm822, %v1224, 0.0
        %1226 = vadd.xlane.f32.xlu0 %v1225
        %v1227 = vpop.xlane.xlu0 %1226
        %v1228 = vpack.c.bf16 %v1224, %v1224
        %1229 = vrot.lane.b32.xlu0 %v1169, 64
        %v1230 = vpop.permute.xlu0 %1229
        %v1232 = vsel %vm822, %v1228, 0
        %v1235 = vsel %vm839, %v1230, 0
        %1237 = vmatprep.subr.bf16.mxu0 0
        %1238 = vmatpush1.bf16.msra.mxu0 0
        %1239 = vmatprep.subr.bf16.mxu0 0
        %1240 = vmatpush1.bf16.msra.mxu0 0
        %1241 = vmatprep.subr.bf16.mxu0 0
        %1242 = vmatpush1.bf16.msra.mxu0 0
        %1243 = vmatprep.subr.bf16.mxu0 0
        %1244 = vmatpush1.bf16.msra.mxu0 0
        %1245 = vmatprep.subr.bf16.mxu0 0
        %1246 = vmatpush1.bf16.msra.mxu0 0
        %1247 = vmatprep.subr.bf16.mxu0 0
        %1248 = vmatpush1.bf16.msra.mxu0 0
        %1249 = vmatprep.subr.bf16.mxu0 0
        %1250 = vmatpush1.bf16.msra.mxu0 0
        %1251 = vmatprep.subr.bf16.mxu0 0
        %1252 = vmatpush1.bf16.msra.mxu0 %v1235
        %1253 = vmatprep.subr.bf16.mxu0 0
        %1254 = vmatpush2.bf16.msra.mxu0 0
        %1255 = vmatprep.subr.bf16.mxu0 0
        %1256 = vmatpush2.bf16.msra.mxu0 0
        %1257 = vmatprep.subr.bf16.mxu0 0
        %1258 = vmatpush2.bf16.msra.mxu0 0
        %1259 = vmatprep.subr.bf16.mxu0 0
        %1260 = vmatpush2.bf16.msra.mxu0 0
        %1261 = vmatprep.subr.bf16.mxu0 0
        %1262 = vmatpush2.bf16.msra.mxu0 0
        %1263 = vmatprep.subr.bf16.mxu0 0
        %1264 = vmatpush2.bf16.msra.mxu0 0
        %1265 = vmatprep.subr.bf16.mxu0 0
        %1266 = vmatpush2.bf16.msra.mxu0 0
        %1267 = vmatprep.subr.bf16.mxu0 0
        %1268 = vmatpush2.bf16.msra.mxu0 0
        %1269 = vmatprep.mubr.bf16.mxu0 0
        %1270 = vmatmul.mubr.bf16.gmra.mxu0 %v1232
        %v1271 = vpop.f32.mrf.mxu0
        %v1272 = vadd.f32 0.0, %v1271
        %v1273 = vpop.f32.mrf.mxu0
        %v1274 = vpop.f32.mrf.mxu0
        %v1275 = vpop.f32.mrf.mxu0
        %1276 = vdwg.mxu0
        %v1277 = vrcp.pop %v1227
        %v1278 = vmul.f32 %v1272, %v1277
        %1279 = vst.msk [vmem:[#allocation2] sm:$0xff] %vm731, %v1278
        %1280 = vrot.lane.b32.xlu0 %v1169, 112
        %v1281 = vpop.permute.xlu0 %1280
        %1282 = vrot.lane.b32.xlu0 %v1169, 80
        %v1283 = vpop.permute.xlu0 %1282
        %v1285 = vsel %vm731, %v1281, 0
        %v1288 = vsel %vm731, %v1283, 0
        %1290 = vmatprep.subr.bf16.mxu0 0
        %1291 = vmatpush1.bf16.xpose.msra.mxu0 0
        %1292 = vmatprep.subr.bf16.mxu0 0
        %1293 = vmatpush1.bf16.xpose.msra.mxu0 0
        %1294 = vmatprep.subr.bf16.mxu0 0
        %1295 = vmatpush1.bf16.xpose.msra.mxu0 0
        %1296 = vmatprep.subr.bf16.mxu0 0
        %1297 = vmatpush1.bf16.xpose.msra.mxu0 0
        %1298 = vmatprep.subr.bf16.mxu0 0
        %1299 = vmatpush1.bf16.xpose.msra.mxu0 0
        %1300 = vmatprep.subr.bf16.mxu0 0
        %1301 = vmatpush1.bf16.xpose.msra.mxu0 0
        %1302 = vmatprep.subr.bf16.mxu0 0
        %1303 = vmatpush1.bf16.xpose.msra.mxu0 0
        %1304 = vmatprep.subr.bf16.mxu0 0
        %1305 = vmatpush1.bf16.xpose.msra.mxu0 %v1288
        %1306 = vmatprep.subr.bf16.mxu0 0
        %1307 = vmatpush2.bf16.xpose.msra.mxu0 0
        %1308 = vmatprep.subr.bf16.mxu0 0
        %1309 = vmatpush2.bf16.xpose.msra.mxu0 0
        %1310 = vmatprep.subr.bf16.mxu0 0
        %1311 = vmatpush2.bf16.xpose.msra.mxu0 0
        %1312 = vmatprep.subr.bf16.mxu0 0
        %1313 = vmatpush2.bf16.xpose.msra.mxu0 0
        %1314 = vmatprep.subr.bf16.mxu0 0
        %1315 = vmatpush2.bf16.xpose.msra.mxu0 0
        %1316 = vmatprep.subr.bf16.mxu0 0
        %1317 = vmatpush2.bf16.xpose.msra.mxu0 0
        %1318 = vmatprep.subr.bf16.mxu0 0
        %1319 = vmatpush2.bf16.xpose.msra.mxu0 0
        %1320 = vmatprep.subr.bf16.mxu0 0
        %1321 = vmatpush2.bf16.xpose.msra.mxu0 0
        %1322 = vmatprep.mubr.bf16.mxu0 0
        %1323 = vmatmul.mubr.bf16.gmra.mxu0 %v1285
        %v1324 = vpop.f32.mrf.mxu0
        %v1325 = vadd.f32 0.0, %v1324
        %v1326 = vpop.f32.mrf.mxu0
        %v1327 = vpop.f32.mrf.mxu0
        %v1328 = vpop.f32.mrf.mxu0
        %1329 = vdwg.mxu0
        %v1330 = vsel %vm822, %v1325, -inf
        %1331 = vmax.xlane.f32.xlu0 %v1330
        %v1332 = vpop.xlane.xlu0 %1331
        %v1333 = vsub.f32 %v1325, %v1332
        %v1334 = vmul.f32 %v1333, 1.442695
        %v1335 = vpow.pop %v1334
        %v1336 = vsel %vm822, %v1335, 0.0
        %1337 = vadd.xlane.f32.xlu0 %v1336
        %v1338 = vpop.xlane.xlu0 %1337
        %v1339 = vpack.c.bf16 %v1335, %v1335
        %1340 = vrot.lane.b32.xlu0 %v1169, 48
        %v1341 = vpop.permute.xlu0 %1340
        %v1343 = vsel %vm822, %v1339, 0
        %v1346 = vsel %vm839, %v1341, 0
        %1348 = vmatprep.subr.bf16.mxu0 0
        %1349 = vmatpush1.bf16.msra.mxu0 0
        %1350 = vmatprep.subr.bf16.mxu0 0
        %1351 = vmatpush1.bf16.msra.mxu0 0
        %1352 = vmatprep.subr.bf16.mxu0 0
        %1353 = vmatpush1.bf16.msra.mxu0 0
        %1354 = vmatprep.subr.bf16.mxu0 0
        %1355 = vmatpush1.bf16.msra.mxu0 0
        %1356 = vmatprep.subr.bf16.mxu0 0
        %1357 = vmatpush1.bf16.msra.mxu0 0
        %1358 = vmatprep.subr.bf16.mxu0 0
        %1359 = vmatpush1.bf16.msra.mxu0 0
        %1360 = vmatprep.subr.bf16.mxu0 0
        %1361 = vmatpush1.bf16.msra.mxu0 0
        %1362 = vmatprep.subr.bf16.mxu0 0
        %1363 = vmatpush1.bf16.msra.mxu0 %v1346
        %1364 = vmatprep.subr.bf16.mxu0 0
        %1365 = vmatpush2.bf16.msra.mxu0 0
        %1366 = vmatprep.subr.bf16.mxu0 0
        %1367 = vmatpush2.bf16.msra.mxu0 0
        %1368 = vmatprep.subr.bf16.mxu0 0
        %1369 = vmatpush2.bf16.msra.mxu0 0
        %1370 = vmatprep.subr.bf16.mxu0 0
        %1371 = vmatpush2.bf16.msra.mxu0 0
        %1372 = vmatprep.subr.bf16.mxu0 0
        %1373 = vmatpush2.bf16.msra.mxu0 0
        %1374 = vmatprep.subr.bf16.mxu0 0
        %1375 = vmatpush2.bf16.msra.mxu0 0
        %1376 = vmatprep.subr.bf16.mxu0 0
        %1377 = vmatpush2.bf16.msra.mxu0 0
        %1378 = vmatprep.subr.bf16.mxu0 0
        %1379 = vmatpush2.bf16.msra.mxu0 0
        %1380 = vmatprep.mubr.bf16.mxu0 0
        %1381 = vmatmul.mubr.bf16.gmra.mxu0 %v1343
        %v1382 = vpop.f32.mrf.mxu0
        %v1383 = vadd.f32 0.0, %v1382
        %v1384 = vpop.f32.mrf.mxu0
        %v1385 = vpop.f32.mrf.mxu0
        %v1386 = vpop.f32.mrf.mxu0
        %1387 = vdwg.mxu0
        %v1388 = vrcp.pop %v1338
        %v1389 = vmul.f32 %v1383, %v1388
        %1391 = vrot.lane.b32.xlu0 %v1389, 16
        %v1392 = vpop.permute.xlu0 %1391
        %1394 = vst.msk [vmem:[#allocation2] sm:$0xff] %vm1001, %v1392
        %v1395 = vld [vmem:[#allocation2] sm:$0xff]
        %v1396 = vpack.c.bf16 %v1395, %v1395
        %v1397 = vld [vmem:[%s12] sm:$0xf]
        %v1398 = vld [vmem:[%s12 + $0x4] sm:$0xf]
        %v1399 = vld [vmem:[%s12 + $0x8] sm:$0xf]
        %v1400 = vld [vmem:[%s12 + $0xc] sm:$0xf]
        %v1401 = vld [vmem:[%s13] sm:$0x1]
        %v1402 = vld [vmem:[%s14] sm:$0x1]
        %v1403 = vld [vmem:[%s15] sm:$0x1]
        %v1405 = vlaneseq
        %v1406 = vshrl.u32 %v1405, 7
        %v1407 = vsub.s32 0, %v1406
        %v1408 = vrot.slane %v1401, %v1407
        %v1414 = vunpack.c.l.b16 %v1397
        %v1415 = vunpack.c.l.b16 %v1398
        %v1416 = vunpack.c.l.b16 %v1399
        %v1417 = vunpack.c.l.b16 %v1400
        %v1418 = vpack.c.b16 %v1415, %v1414
        %v1419 = vpack.c.b16 %v1417, %v1416
        %v1423 = vsel %vm671, %v1396, 0
        %1425 = vmatprep.subr.bf16.mxu0 0
        %1426 = vmatpush1.bf16.msra.mxu0 0
        %1427 = vmatprep.subr.bf16.mxu0 0
        %1428 = vmatpush1.bf16.msra.mxu0 0
        %1429 = vmatprep.subr.bf16.mxu0 0
        %1430 = vmatpush1.bf16.msra.mxu0 0
        %1431 = vmatprep.subr.bf16.mxu0 0
        %1432 = vmatpush1.bf16.msra.mxu0 0
        %1433 = vmatprep.subr.bf16.mxu0 0
        %1434 = vmatpush1.bf16.msra.mxu0 0
        %1435 = vmatprep.subr.bf16.mxu0 0
        %1436 = vmatpush1.bf16.msra.mxu0 0
        %1437 = vmatprep.subr.bf16.mxu0 0
        %1438 = vmatpush1.bf16.msra.mxu0 %v1419
        %1439 = vmatprep.subr.bf16.mxu0 0
        %1440 = vmatpush1.bf16.msra.mxu0 %v1418
        %1441 = vmatprep.subr.bf16.mxu0 0
        %1442 = vmatpush2.bf16.msra.mxu0 0
        %1443 = vmatprep.subr.bf16.mxu0 0
        %1444 = vmatpush2.bf16.msra.mxu0 0
        %1445 = vmatprep.subr.bf16.mxu0 0
        %1446 = vmatpush2.bf16.msra.mxu0 0
        %1447 = vmatprep.subr.bf16.mxu0 0
        %1448 = vmatpush2.bf16.msra.mxu0 0
        %1449 = vmatprep.subr.bf16.mxu0 0
        %1450 = vmatpush2.bf16.msra.mxu0 0
        %1451 = vmatprep.subr.bf16.mxu0 0
        %1452 = vmatpush2.bf16.msra.mxu0 0
        %1453 = vmatprep.subr.bf16.mxu0 0
        %1454 = vmatpush2.bf16.msra.mxu0 0
        %1455 = vmatprep.subr.bf16.mxu0 0
        %1456 = vmatpush2.bf16.msra.mxu0 0
        %1457 = vmatprep.mubr.bf16.mxu0 0
        %1458 = vmatmul.mubr.bf16.gmra.mxu0 %v1423
        %v1459 = vpop.f32.mrf.mxu0
        %v1460 = vadd.f32 %v1408, %v1459
        %v1461 = vpop.f32.mrf.mxu0
        %v1462 = vpop.f32.mrf.mxu0
        %v1463 = vpop.f32.mrf.mxu0
        %1464 = vdwg.mxu0
        %v1465 = vadd.f32 %v1460, %v1101
        %v1466 = vsel %vm671, %v1465, 0.0
        %1467 = vadd.xlane.f32.xlu0 %v1466
        %v1468 = vpop.xlane.xlu0 %1467
        %v1469 = vmul.f32 %v1468, %v1077
        %v1470 = vsub.f32 %v1465, %v1469
        %v1471 = vmul.f32 %v1470, %v1470
        %v1472 = vsel %vm671, %v1471, 0.0
        %1473 = vadd.xlane.f32.xlu0 %v1472
        %v1474 = vpop.xlane.xlu0 %1473
        %v1475 = vmul.f32 %v1474, %v1077
        %v1476 = vadd.f32 %v1475, 1e-05
        %v1477 = vrsqrt.pop %v1476
        %v1478 = vmul.f32 %v1470, %v1477
        %v1480 = vlaneseq
        %v1481 = vshrl.u32 %v1480, 7
        %v1482 = vsub.s32 0, %v1481
        %v1483 = vrot.slane %v1402, %v1482
        %v1485 = vmul.f32 %v1478, %v1483
        %v1487 = vlaneseq
        %v1488 = vshrl.u32 %v1487, 7
        %v1489 = vsub.s32 0, %v1488
        %v1490 = vrot.slane %v1403, %v1489
        %v1492 = vadd.f32 %v1485, %v1490
        %1493 = vst.msk [vmem:[%s643] sm:$0xff] %vm671, %v1492
        %s1494 = sand.u32 %s392, 1
        %s1495 = scalar_lea.sflag [#allocation5], %s1494
        %s1496 = sand.u32 %s392, 1
        %s1497 = smul.addr %s1496, 8
        %s1498 = scalar_lea.vmem [#allocation15], %s1497
        // Predicated region
        $region113: #{tpu_custom_call.1} parent=83 // pred_check
          %p1499 = pneg %p402
        $region114: #{tpu_custom_call.1} parent=83 // pred_check_branch
          %1501 = sbr.rel (%p1499) target = $region116
        $region115: #{tpu_custom_call.1} parent=83 // pred_region
          %s1503 = ssub.s32 128, 128
          %1504 = vsyncadd %s1495, %s1503
          %s1505 = smul.addr %s38, 128
          %s1506 = scalar_lea.hbm %s16, %s1505
          %s1508 = sshll.u32 %s1498, 4
          %s1509 = int_to_ptr.vmem [resolvable:$true] %s1508
          %1511 = dma.vmem_to_hbm [thread:$0]  %s1509, 128, %s1506, %s1495
        $region116: #{tpu_custom_call.1} parent=83 // pred_fallthru
          _
      $region84: #{tpu_custom_call.1} parent=5 // pred_fallthru
        _
      %p1512 = scmp.le.s32.totalorder 2, %s33
      // Predicated region
      $region117: #{tpu_custom_call.1} parent=5 // pred_check
        %p1513 = pneg %p1512
      $region118: #{tpu_custom_call.1} parent=5 // pred_check_branch
        %1515 = sbr.rel (%p1513) target = $region120
      $region119: #{tpu_custom_call.1} parent=5 // pred_region
        %s1516 = ssub.s32 %s33, 2
        // Predicated region
        $region121: #{tpu_custom_call.1} parent=119 // pred_check
          %p1517 = pneg %p408
        $region122: #{tpu_custom_call.1} parent=119 // pred_check_branch
          %1519 = sbr.rel (%p1517) target = $region124
        $region123: #{tpu_custom_call.1} parent=119 // pred_region
          %s1520 = sand.u32 %s393, 1
          %s1521 = scalar_lea.sflag [#allocation5], %s1520
          %s1522 = sand.u32 %s393, 1
          %s1523 = smul.addr %s1522, 8
          %s1524 = scalar_lea.vmem [#allocation15], %s1523
          %1525 = dma.done %s1521, 128
        $region124: #{tpu_custom_call.1} parent=119 // pred_fallthru
          _
      $region120: #{tpu_custom_call.1} parent=5 // pred_fallthru
        _
    $region6: #{tpu_custom_call.1} parent=1 // loop_footer
      %s37 = sadd.s32 1, %s33
    $region7: #{tpu_custom_call.1} parent=1 // loop_footer_branch
      %32 = sbr.rel target = $region3
    $region8: #{tpu_custom_call.1} parent=1 // loop_exit
      _
    %1526 = vsyncpa [#allocation4], 1
    %s1527 = scalar_lea.sflag [#allocation4], 1
    %1528 = vsyncpa %s1527, 1
    %1529 = vsyncpa [#allocation7], 1
    %s1530 = scalar_lea.sflag [#allocation7], 1
    %1531 = vsyncpa %s1530, 1
    %1532 = vsyncpa [#allocation10], 1
    %1533 = vsyncpa [#allocation13], 1
    %1534 = vsyncpa [#allocation5], 1
    %s1535 = scalar_lea.sflag [#allocation5], 1
    %1536 = vsyncpa %s1535, 1

// kernel: tpu_custom_call.1
$region0: #{tpu_custom_call.1}
  #allocation0 [shape = 'u32[]', space=smem, size = 0x4, offset = 0x4, fixed_abs, tag = 'smem constant byte address 0x4 - core index']
  #allocation1 [shape = 'u32[144,128]{1,0:T(1,128)}', space=vmem, size = 0x12000, scoped, tag = 'internal scratch']
  #allocation2 [shape = 'f32[8,32]{1,0:T(8,128)}', space=vmem, size = 0x1000, scoped, tag = 'scratch operand']
  %s0 = inlined_call_operand.hbm [shape: bf16[2,8,32], index: 0, kind: input, shape index: {}]
  %s1 = inlined_call_operand.hbm [shape: bf16[2,8,16], index: 1, kind: input, shape index: {}]
  %s2 = inlined_call_operand.hbm [shape: bf16[32,32], index: 2, kind: input, shape index: {}]
  %s3 = inlined_call_operand.vmem [shape: f32[1,32], index: 3, kind: input, shape index: {}]
  %s4 = inlined_call_operand.hbm [shape: bf16[16,64], index: 4, kind: input, shape index: {}]
  %s5 = inlined_call_operand.vmem [shape: f32[1,64], index: 5, kind: input, shape index: {}]
  %s6 = inlined_call_operand.hbm [shape: bf16[32,96], index: 6, kind: input, shape index: {}]
  %s7 = inlined_call_operand.vmem [shape: f32[1,96], index: 7, kind: input, shape index: {}]
  %s8 = inlined_call_operand.hbm [shape: bf16[32,32], index: 8, kind: input, shape index: {}]
  %s9 = inlined_call_operand.vmem [shape: f32[1,32], index: 9, kind: input, shape index: {}]
  %s10 = inlined_call_operand.vmem [shape: f32[1,32], index: 10, kind: input, shape index: {}]
  %s11 = inlined_call_operand.hbm [shape: f32[1,32], index: 11, kind: input, shape index: {}]
  %s12 = inlined_call_operand.vmem [shape: bf16[32,32], index: 12, kind: input, shape index: {}]
  %s13 = inlined_call_operand.vmem [shape: f32[1,32], index: 13, kind: input, shape index: {}]
  %s14 = inlined_call_operand.vmem [shape: f32[1,32], index: 14, kind: input, shape index: {}]
  %s15 = inlined_call_operand.vmem [shape: f32[1,32], index: 15, kind: input, shape index: {}]
  %s16 = inlined_call_operand.hbm [shape: f32[2,8,32], index: 16, kind: output, shape index: {}]
  %s17 = sld [smem:[#allocation0]]
  $region125: #{tpu_custom_call.1} parent=0
    _
  %s19 = ssub.s32 1, %s17
  %s20 = scalar_select 0, %s19, %s17
  $region1: #{tpu_custom_call.1} parent=0
    #allocation3 [shape = 'u8[4096]{0}', space=vmem, size = 0x1000, scoped, tag = 'input window, operand 0']
    #allocation4 [shape = 's32[2]{0}', space=sflag, size = 0x8, scoped, tag = 'scoped memory for tpu_custom_call.1']
    #allocation5 [shape = 's32[2]{0}', space=sflag, size = 0x8, scoped, tag = 'scoped memory for tpu_custom_call.1']
    #allocation6 [shape = 'u8[4096]{0}', space=vmem, size = 0x1000, scoped, tag = 'input window, operand 1']
    #allocation7 [shape = 's32[2]{0}', space=sflag, size = 0x8, scoped, tag = 'scoped memory for tpu_custom_call.1']
    #allocation8 [shape = 'u8[8192]{0}', space=vmem, size = 0x2000, scoped, tag = 'input window, operand 2, single buffered']
    #allocation9 [shape = 'u8[4096]{0}', space=vmem, size = 0x1000, scoped, tag = 'input window, operand 4, single buffered']
    #allocation10 [shape = 's32[1]{0}', space=sflag, size = 0x4, scoped, tag = 'scoped memory for tpu_custom_call.1']
    #allocation11 [shape = 'u8[8192]{0}', space=vmem, size = 0x2000, scoped, tag = 'input window, operand 6, single buffered']
    #allocation12 [shape = 'u8[8192]{0}', space=vmem, size = 0x2000, scoped, tag = 'input window, operand 8, single buffered']
    #allocation13 [shape = 's32[1]{0}', space=sflag, size = 0x4, scoped, tag = 'scoped memory for tpu_custom_call.1']
    #allocation14 [shape = 'u8[512]{0}', space=vmem, size = 0x400, scoped, tag = 'input window, operand 11, single buffered']
    #allocation15 [shape = 'u8[8192]{0}', space=vmem, size = 0x2000, scoped, tag = 'output window, operand 0']
    %21 = vsyncpa [#allocation4], 0
    %s22 = scalar_lea.sflag [#allocation4], 1
    %23 = vsyncpa %s22, 0
    %24 = vsyncpa [#allocation7], 0
    %s25 = scalar_lea.sflag [#allocation7], 1
    %26 = vsyncpa %s25, 0
    %27 = vsyncpa [#allocation10], 0
    %28 = vsyncpa [#allocation13], 0
    %29 = vsyncpa [#allocation5], 0
    %s30 = scalar_lea.sflag [#allocation5], 1
    %31 = vsyncpa %s30, 0
    loop: start=0, step=1, limit=4
    $region2: #{tpu_custom_call.1} parent=1 // loop_pre_header
      _
    $region3: #{tpu_custom_call.1} parent=1 // loop_header
      %s33 = sphi 0, %s37
      %p34 = scmp.ge.s32.totalorder %s33, 4
      %s43 = sphi 0, %s45
      %s46 = sphi 0, %s43
      %s47 = sphi 0, %s46
      %s63 = sphi 0, %s47
      %s69 = sphi 0, %s71
      %s72 = sphi 0, %s69
      %s73 = sphi 0, %s72
      %s89 = sphi 0, %s73
      %s93 = sphi 0, %s93
      %s95 = sphi 0, %s93
      %s96 = sphi 0, %s95
      %s110 = sphi 0, %s96
      %s114 = sphi 0, %s114
      %s116 = sphi 0, %s114
      %s117 = sphi 0, %s116
      %s131 = sphi 0, %s117
      %s135 = sphi 0, %s135
      %s137 = sphi 0, %s135
      %s138 = sphi 0, %s137
      %s152 = sphi 0, %s138
      %s156 = sphi 0, %s156
      %s158 = sphi 0, %s156
      %s159 = sphi 0, %s158
      %s173 = sphi 0, %s159
      %s177 = sphi 0, %s177
      %s179 = sphi 0, %s177
      %s180 = sphi 0, %s179
      %s194 = sphi 0, %s180
      %s198 = sphi 0, %s198
      %s200 = sphi 0, %s198
      %s201 = sphi 0, %s200
      %s215 = sphi 0, %s201
      %s219 = sphi 0, %s219
      %s221 = sphi 0, %s219
      %s222 = sphi 0, %s221
      %s236 = sphi 0, %s222
      %s240 = sphi 0, %s240
      %s242 = sphi 0, %s240
      %s243 = sphi 0, %s242
      %s257 = sphi 0, %s243
      %s261 = sphi 0, %s261
      %s263 = sphi 0, %s261
      %s264 = sphi 0, %s263
      %s278 = sphi 0, %s264
      %s282 = sphi 0, %s282
      %s284 = sphi 0, %s282
      %s285 = sphi 0, %s284
      %s299 = sphi 0, %s285
      %s303 = sphi 0, %s303
      %s305 = sphi 0, %s303
      %s306 = sphi 0, %s305
      %s320 = sphi 0, %s306
      %s324 = sphi 0, %s324
      %s326 = sphi 0, %s324
      %s327 = sphi 0, %s326
      %s341 = sphi 0, %s327
      %s345 = sphi 0, %s345
      %s347 = sphi 0, %s345
      %s348 = sphi 0, %s347
      %s362 = sphi 0, %s348
      %s366 = sphi 0, %s366
      %s368 = sphi 0, %s366
      %s369 = sphi 0, %s368
      %s383 = sphi 0, %s369
      %s389 = sphi 0, %s391
      %s392 = sphi 0, %s389
      %s393 = sphi 0, %s392
      %s409 = sphi 0, %s393
    $region4: #{tpu_custom_call.1} parent=1 // loop_header_branch
      %36 = sbr.rel (%p34) target = $region8
    $region5: #{tpu_custom_call.1} parent=1 // loop_body
      %s38 = ssub.s32 %s33, 1
      %s39 = ssub.s32 %s33, 2
      %s40 = sadd.s32 %s33, 1
      %s41 = ssub.s32 %s33, %s40
      %p42 = scmp.eq.s32.totalorder %s41, 0
      %s44 = sadd.s32 %s43, 1
      %s45 = scalar_select %p42, %s43, %s44
      %p48 = pneg %p42
      %p49 = scmp.eq.s32.totalorder %s33, 1
      %p50 = por %p48, %p49
      %p51 = scmp.ne.s32.totalorder %s43, %s46
      %p52 = scmp.eq.s32.totalorder %s33, 0
      %p53 = por %p51, %p52
      %p54 = scmp.ne.s32.totalorder %s43, %s46
      %p55 = scmp.eq.s32.totalorder %s38, 1
      %p56 = por %p54, %p55
      %p57 = scmp.ne.s32.totalorder %s46, %s47
      %p58 = scmp.eq.s32.totalorder %s38, 0
      %p59 = por %p57, %p58
      %p60 = scmp.ne.s32.totalorder %s46, %s47
      %p61 = scmp.eq.s32.totalorder %s39, 1
      %p62 = por %p60, %p61
      %p64 = scmp.ne.s32.totalorder %s47, %s63
      %p65 = scmp.eq.s32.totalorder %s39, 0
      %p66 = por %p64, %p65
      %s67 = ssub.s32 %s33, %s40
      %p68 = scmp.eq.s32.totalorder %s67, 0
      %s70 = sadd.s32 %s69, 1
      %s71 = scalar_select %p68, %s69, %s70
      %p74 = pneg %p68
      %p75 = scmp.eq.s32.totalorder %s33, 1
      %p76 = por %p74, %p75
      %p77 = scmp.ne.s32.totalorder %s69, %s72
      %p78 = scmp.eq.s32.totalorder %s33, 0
      %p79 = por %p77, %p78
      %p80 = scmp.ne.s32.totalorder %s69, %s72
      %p81 = scmp.eq.s32.totalorder %s38, 1
      %p82 = por %p80, %p81
      %p83 = scmp.ne.s32.totalorder %s72, %s73
      %p84 = scmp.eq.s32.totalorder %s38, 0
      %p85 = por %p83, %p84
      %p86 = scmp.ne.s32.totalorder %s72, %s73
      %p87 = scmp.eq.s32.totalorder %s39, 1
      %p88 = por %p86, %p87
      %p90 = scmp.ne.s32.totalorder %s73, %s89
      %p91 = scmp.eq.s32.totalorder %s39, 0
      %p92 = por %p90, %p91
      %s94 = sadd.s32 %s93, 1
      %p97 = scmp.eq.s32.totalorder %s33, 1
      %p98 = scmp.ne.s32.totalorder %s93, %s95
      %p99 = scmp.eq.s32.totalorder %s33, 0
      %p100 = por %p98, %p99
      %p101 = scmp.ne.s32.totalorder %s93, %s95
      %p102 = scmp.eq.s32.totalorder %s38, 1
      %p103 = por %p101, %p102
      %p104 = scmp.ne.s32.totalorder %s95, %s96
      %p105 = scmp.eq.s32.totalorder %s38, 0
      %p106 = por %p104, %p105
      %p107 = scmp.ne.s32.totalorder %s95, %s96
      %p108 = scmp.eq.s32.totalorder %s39, 1
      %p109 = por %p107, %p108
      %p111 = scmp.ne.s32.totalorder %s96, %s110
      %p112 = scmp.eq.s32.totalorder %s39, 0
      %p113 = por %p111, %p112
      %s115 = sadd.s32 %s114, 1
      %p118 = scmp.eq.s32.totalorder %s33, 1
      %p119 = scmp.ne.s32.totalorder %s114, %s116
      %p120 = scmp.eq.s32.totalorder %s33, 0
      %p121 = por %p119, %p120
      %p122 = scmp.ne.s32.totalorder %s114, %s116
      %p123 = scmp.eq.s32.totalorder %s38, 1
      %p124 = por %p122, %p123
      %p125 = scmp.ne.s32.totalorder %s116, %s117
      %p126 = scmp.eq.s32.totalorder %s38, 0
      %p127 = por %p125, %p126
      %p128 = scmp.ne.s32.totalorder %s116, %s117
      %p129 = scmp.eq.s32.totalorder %s39, 1
      %p130 = por %p128, %p129
      %p132 = scmp.ne.s32.totalorder %s117, %s131
      %p133 = scmp.eq.s32.totalorder %s39, 0
      %p134 = por %p132, %p133
      %s136 = sadd.s32 %s135, 1
      %p139 = scmp.eq.s32.totalorder %s33, 1
      %p140 = scmp.ne.s32.totalorder %s135, %s137
      %p141 = scmp.eq.s32.totalorder %s33, 0
      %p142 = por %p140, %p141
      %p143 = scmp.ne.s32.totalorder %s135, %s137
      %p144 = scmp.eq.s32.totalorder %s38, 1
      %p145 = por %p143, %p144
      %p146 = scmp.ne.s32.totalorder %s137, %s138
      %p147 = scmp.eq.s32.totalorder %s38, 0
      %p148 = por %p146, %p147
      %p149 = scmp.ne.s32.totalorder %s137, %s138
      %p150 = scmp.eq.s32.totalorder %s39, 1
      %p151 = por %p149, %p150
      %p153 = scmp.ne.s32.totalorder %s138, %s152
      %p154 = scmp.eq.s32.totalorder %s39, 0
      %p155 = por %p153, %p154
      %s157 = sadd.s32 %s156, 1
      %p160 = scmp.eq.s32.totalorder %s33, 1
      %p161 = scmp.ne.s32.totalorder %s156, %s158
      %p162 = scmp.eq.s32.totalorder %s33, 0
      %p163 = por %p161, %p162
      %p164 = scmp.ne.s32.totalorder %s156, %s158
      %p165 = scmp.eq.s32.totalorder %s38, 1
      %p166 = por %p164, %p165
      %p167 = scmp.ne.s32.totalorder %s158, %s159
      %p168 = scmp.eq.s32.totalorder %s38, 0
      %p169 = por %p167, %p168
      %p170 = scmp.ne.s32.totalorder %s158, %s159
      %p171 = scmp.eq.s32.totalorder %s39, 1
      %p172 = por %p170, %p171
      %p174 = scmp.ne.s32.totalorder %s159, %s173
      %p175 = scmp.eq.s32.totalorder %s39, 0
      %p176 = por %p174, %p175
      %s178 = sadd.s32 %s177, 1
      %p181 = scmp.eq.s32.totalorder %s33, 1
      %p182 = scmp.ne.s32.totalorder %s177, %s179
      %p183 = scmp.eq.s32.totalorder %s33, 0
      %p184 = por %p182, %p183
      %p185 = scmp.ne.s32.totalorder %s177, %s179
      %p186 = scmp.eq.s32.totalorder %s38, 1
      %p187 = por %p185, %p186
      %p188 = scmp.ne.s32.totalorder %s179, %s180
      %p189 = scmp.eq.s32.totalorder %s38, 0
      %p190 = por %p188, %p189
      %p191 = scmp.ne.s32.totalorder %s179, %s180
      %p192 = scmp.eq.s32.totalorder %s39, 1
      %p193 = por %p191, %p192
      %p195 = scmp.ne.s32.totalorder %s180, %s194
      %p196 = scmp.eq.s32.totalorder %s39, 0
      %p197 = por %p195, %p196
      %s199 = sadd.s32 %s198, 1
      %p202 = scmp.eq.s32.totalorder %s33, 1
      %p203 = scmp.ne.s32.totalorder %s198, %s200
      %p204 = scmp.eq.s32.totalorder %s33, 0
      %p205 = por %p203, %p204
      %p206 = scmp.ne.s32.totalorder %s198, %s200
      %p207 = scmp.eq.s32.totalorder %s38, 1
      %p208 = por %p206, %p207
      %p209 = scmp.ne.s32.totalorder %s200, %s201
      %p210 = scmp.eq.s32.totalorder %s38, 0
      %p211 = por %p209, %p210
      %p212 = scmp.ne.s32.totalorder %s200, %s201
      %p213 = scmp.eq.s32.totalorder %s39, 1
      %p214 = por %p212, %p213
      %p216 = scmp.ne.s32.totalorder %s201, %s215
      %p217 = scmp.eq.s32.totalorder %s39, 0
      %p218 = por %p216, %p217
      %s220 = sadd.s32 %s219, 1
      %p223 = scmp.eq.s32.totalorder %s33, 1
      %p224 = scmp.ne.s32.totalorder %s219, %s221
      %p225 = scmp.eq.s32.totalorder %s33, 0
      %p226 = por %p224, %p225
      %p227 = scmp.ne.s32.totalorder %s219, %s221
      %p228 = scmp.eq.s32.totalorder %s38, 1
      %p229 = por %p227, %p228
      %p230 = scmp.ne.s32.totalorder %s221, %s222
      %p231 = scmp.eq.s32.totalorder %s38, 0
      %p232 = por %p230, %p231
      %p233 = scmp.ne.s32.totalorder %s221, %s222
      %p234 = scmp.eq.s32.totalorder %s39, 1
      %p235 = por %p233, %p234
      %p237 = scmp.ne.s32.totalorder %s222, %s236
      %p238 = scmp.eq.s32.totalorder %s39, 0
      %p239 = por %p237, %p238
      %s241 = sadd.s32 %s240, 1
      %p244 = scmp.eq.s32.totalorder %s33, 1
      %p245 = scmp.ne.s32.totalorder %s240, %s242
      %p246 = scmp.eq.s32.totalorder %s33, 0
      %p247 = por %p245, %p246
      %p248 = scmp.ne.s32.totalorder %s240, %s242
      %p249 = scmp.eq.s32.totalorder %s38, 1
      %p250 = por %p248, %p249
      %p251 = scmp.ne.s32.totalorder %s242, %s243
      %p252 = scmp.eq.s32.totalorder %s38, 0
      %p253 = por %p251, %p252
      %p254 = scmp.ne.s32.totalorder %s242, %s243
      %p255 = scmp.eq.s32.totalorder %s39, 1
      %p256 = por %p254, %p255
      %p258 = scmp.ne.s32.totalorder %s243, %s257
      %p259 = scmp.eq.s32.totalorder %s39, 0
      %p260 = por %p258, %p259
      %s262 = sadd.s32 %s261, 1
      %p265 = scmp.eq.s32.totalorder %s33, 1
      %p266 = scmp.ne.s32.totalorder %s261, %s263
      %p267 = scmp.eq.s32.totalorder %s33, 0
      %p268 = por %p266, %p267
      %p269 = scmp.ne.s32.totalorder %s261, %s263
      %p270 = scmp.eq.s32.totalorder %s38, 1
      %p271 = por %p269, %p270
      %p272 = scmp.ne.s32.totalorder %s263, %s264
      %p273 = scmp.eq.s32.totalorder %s38, 0
      %p274 = por %p272, %p273
      %p275 = scmp.ne.s32.totalorder %s263, %s264
      %p276 = scmp.eq.s32.totalorder %s39, 1
      %p277 = por %p275, %p276
      %p279 = scmp.ne.s32.totalorder %s264, %s278
      %p280 = scmp.eq.s32.totalorder %s39, 0
      %p281 = por %p279, %p280
      %s283 = sadd.s32 %s282, 1
      %p286 = scmp.eq.s32.totalorder %s33, 1
      %p287 = scmp.ne.s32.totalorder %s282, %s284
      %p288 = scmp.eq.s32.totalorder %s33, 0
      %p289 = por %p287, %p288
      %p290 = scmp.ne.s32.totalorder %s282, %s284
      %p291 = scmp.eq.s32.totalorder %s38, 1
      %p292 = por %p290, %p291
      %p293 = scmp.ne.s32.totalorder %s284, %s285
      %p294 = scmp.eq.s32.totalorder %s38, 0
      %p295 = por %p293, %p294
      %p296 = scmp.ne.s32.totalorder %s284, %s285
      %p297 = scmp.eq.s32.totalorder %s39, 1
      %p298 = por %p296, %p297
      %p300 = scmp.ne.s32.totalorder %s285, %s299
      %p301 = scmp.eq.s32.totalorder %s39, 0
      %p302 = por %p300, %p301
      %s304 = sadd.s32 %s303, 1
      %p307 = scmp.eq.s32.totalorder %s33, 1
      %p308 = scmp.ne.s32.totalorder %s303, %s305
      %p309 = scmp.eq.s32.totalorder %s33, 0
      %p310 = por %p308, %p309
      %p311 = scmp.ne.s32.totalorder %s303, %s305
      %p312 = scmp.eq.s32.totalorder %s38, 1
      %p313 = por %p311, %p312
      %p314 = scmp.ne.s32.totalorder %s305, %s306
      %p315 = scmp.eq.s32.totalorder %s38, 0
      %p316 = por %p314, %p315
      %p317 = scmp.ne.s32.totalorder %s305, %s306
      %p318 = scmp.eq.s32.totalorder %s39, 1
      %p319 = por %p317, %p318
      %p321 = scmp.ne.s32.totalorder %s306, %s320
      %p322 = scmp.eq.s32.totalorder %s39, 0
      %p323 = por %p321, %p322
      %s325 = sadd.s32 %s324, 1
      %p328 = scmp.eq.s32.totalorder %s33, 1
      %p329 = scmp.ne.s32.totalorder %s324, %s326
      %p330 = scmp.eq.s32.totalorder %s33, 0
      %p331 = por %p329, %p330
      %p332 = scmp.ne.s32.totalorder %s324, %s326
      %p333 = scmp.eq.s32.totalorder %s38, 1
      %p334 = por %p332, %p333
      %p335 = scmp.ne.s32.totalorder %s326, %s327
      %p336 = scmp.eq.s32.totalorder %s38, 0
      %p337 = por %p335, %p336
      %p338 = scmp.ne.s32.totalorder %s326, %s327
      %p339 = scmp.eq.s32.totalorder %s39, 1
      %p340 = por %p338, %p339
      %p342 = scmp.ne.s32.totalorder %s327, %s341
      %p343 = scmp.eq.s32.totalorder %s39, 0
      %p344 = por %p342, %p343
      %s346 = sadd.s32 %s345, 1
      %p349 = scmp.eq.s32.totalorder %s33, 1
      %p350 = scmp.ne.s32.totalorder %s345, %s347
      %p351 = scmp.eq.s32.totalorder %s33, 0
      %p352 = por %p350, %p351
      %p353 = scmp.ne.s32.totalorder %s345, %s347
      %p354 = scmp.eq.s32.totalorder %s38, 1
      %p355 = por %p353, %p354
      %p356 = scmp.ne.s32.totalorder %s347, %s348
      %p357 = scmp.eq.s32.totalorder %s38, 0
      %p358 = por %p356, %p357
      %p359 = scmp.ne.s32.totalorder %s347, %s348
      %p360 = scmp.eq.s32.totalorder %s39, 1
      %p361 = por %p359, %p360
      %p363 = scmp.ne.s32.totalorder %s348, %s362
      %p364 = scmp.eq.s32.totalorder %s39, 0
      %p365 = por %p363, %p364
      %s367 = sadd.s32 %s366, 1
      %p370 = scmp.eq.s32.totalorder %s33, 1
      %p371 = scmp.ne.s32.totalorder %s366, %s368
      %p372 = scmp.eq.s32.totalorder %s33, 0
      %p373 = por %p371, %p372
      %p374 = scmp.ne.s32.totalorder %s366, %s368
      %p375 = scmp.eq.s32.totalorder %s38, 1
      %p376 = por %p374, %p375
      %p377 = scmp.ne.s32.totalorder %s368, %s369
      %p378 = scmp.eq.s32.totalorder %s38, 0
      %p379 = por %p377, %p378
      %p380 = scmp.ne.s32.totalorder %s368, %s369
      %p381 = scmp.eq.s32.totalorder %s39, 1
      %p382 = por %p380, %p381
      %p384 = scmp.ne.s32.totalorder %s369, %s383
      %p385 = scmp.eq.s32.totalorder %s39, 0
      %p386 = por %p384, %p385
      %s387 = ssub.s32 %s33, %s40
      %p388 = scmp.eq.s32.totalorder %s387, 0
      %s390 = sadd.s32 %s389, 1
      %s391 = scalar_select %p388, %s389, %s390
      %p394 = pneg %p388
      %p395 = scmp.eq.s32.totalorder %s33, 1
      %p396 = por %p394, %p395
      %p397 = scmp.ne.s32.totalorder %s389, %s392
      %p398 = scmp.eq.s32.totalorder %s33, 0
      %p399 = por %p397, %p398
      %p400 = scmp.ne.s32.totalorder %s389, %s392
      %p401 = scmp.eq.s32.totalorder %s38, 1
      %p402 = por %p400, %p401
      %p403 = scmp.ne.s32.totalorder %s392, %s393
      %p404 = scmp.eq.s32.totalorder %s38, 0
      %p405 = por %p403, %p404
      %p406 = scmp.ne.s32.totalorder %s392, %s393
      %p407 = scmp.eq.s32.totalorder %s39, 1
      %p408 = por %p406, %p407
      %p410 = scmp.ne.s32.totalorder %s393, %s409
      %p411 = scmp.eq.s32.totalorder %s39, 0
      %p412 = por %p410, %p411
      %p413 = scmp.le.s32.totalorder 1, %s33
      %p414 = scmp.lt.s32.totalorder %s33, 3
      %p415 = pnand %p413, %p414
      %p416 = pneg %p415
      // Predicated region
      $region9: #{tpu_custom_call.1} parent=5 // pred_check
        _
      $region10: #{tpu_custom_call.1} parent=5 // pred_check_branch
        %418 = sbr.rel (%p415) target = $region12
      $region11: #{tpu_custom_call.1} parent=5 // pred_region
        %s419 = ssub.s32 %s33, 1
        // Predicated region
        $region13: #{tpu_custom_call.1} parent=11 // pred_check
          %p420 = pneg %p106
        $region14: #{tpu_custom_call.1} parent=11 // pred_check_branch
          %422 = sbr.rel (%p420) target = $region16
        $region15: #{tpu_custom_call.1} parent=11 // pred_region
          %s424 = ssub.s32 256, 256
          %425 = vsyncadd [#allocation7], %s424
          %s426 = sshll.u32 [#allocation8], 4
          %s427 = int_to_ptr.vmem [resolvable:$true] %s426
          %432 = dma.hbm_to_vmem [thread:$0]  %s2, 256, %s427, [#allocation7], 64, 64, 4
        $region16: #{tpu_custom_call.1} parent=11 // pred_fallthru
          _
        // Predicated region
        $region17: #{tpu_custom_call.1} parent=11 // pred_check
          %p433 = pneg %p127
        $region18: #{tpu_custom_call.1} parent=11 // pred_check_branch
          %435 = sbr.rel (%p433) target = $region20
        $region19: #{tpu_custom_call.1} parent=11 // pred_region
          _
        $region20: #{tpu_custom_call.1} parent=11 // pred_fallthru
          _
        // Predicated region
        $region21: #{tpu_custom_call.1} parent=11 // pred_check
          %p436 = pneg %p148
        $region22: #{tpu_custom_call.1} parent=11 // pred_check_branch
          %438 = sbr.rel (%p436) target = $region24
        $region23: #{tpu_custom_call.1} parent=11 // pred_region
          %s440 = ssub.s32 128, 128
          %441 = vsyncadd [#allocation10], %s440
          %s442 = sshll.u32 [#allocation9], 4
          %s443 = int_to_ptr.vmem [resolvable:$true] %s442
          %448 = dma.hbm_to_vmem [thread:$0]  %s4, 128, %s443, [#allocation10], 64, 64, 4
        $region24: #{tpu_custom_call.1} parent=11 // pred_fallthru
          _
        // Predicated region
        $region25: #{tpu_custom_call.1} parent=11 // pred_check
          %p449 = pneg %p169
        $region26: #{tpu_custom_call.1} parent=11 // pred_check_branch
          %451 = sbr.rel (%p449) target = $region28
        $region27: #{tpu_custom_call.1} parent=11 // pred_region
          _
        $region28: #{tpu_custom_call.1} parent=11 // pred_fallthru
          _
        // Predicated region
        $region29: #{tpu_custom_call.1} parent=11 // pred_check
          %p452 = pneg %p190
        $region30: #{tpu_custom_call.1} parent=11 // pred_check_branch
          %454 = sbr.rel (%p452) target = $region32
        $region31: #{tpu_custom_call.1} parent=11 // pred_region
          %s456 = ssub.s32 256, 256
          %457 = vsyncadd [#allocation10], %s456
          %s458 = sshll.u32 [#allocation11], 4
          %s459 = int_to_ptr.vmem [resolvable:$true] %s458
          %464 = dma.hbm_to_vmem [thread:$0]  %s6, 256, %s459, [#allocation10], 64, 64, 4
        $region32: #{tpu_custom_call.1} parent=11 // pred_fallthru
          _
        // Predicated region
        $region33: #{tpu_custom_call.1} parent=11 // pred_check
          %p465 = pneg %p211
        $region34: #{tpu_custom_call.1} parent=11 // pred_check_branch
          %467 = sbr.rel (%p465) target = $region36
        $region35: #{tpu_custom_call.1} parent=11 // pred_region
          _
        $region36: #{tpu_custom_call.1} parent=11 // pred_fallthru
          _
        // Predicated region
        $region37: #{tpu_custom_call.1} parent=11 // pred_check
          %p468 = pneg %p232
        $region38: #{tpu_custom_call.1} parent=11 // pred_check_branch
          %470 = sbr.rel (%p468) target = $region40
        $region39: #{tpu_custom_call.1} parent=11 // pred_region
          %s472 = ssub.s32 256, 256
          %473 = vsyncadd [#allocation13], %s472
          %s474 = sshll.u32 [#allocation12], 4
          %s475 = int_to_ptr.vmem [resolvable:$true] %s474
          %480 = dma.hbm_to_vmem [thread:$0]  %s8, 256, %s475, [#allocation13], 64, 64, 4
        $region40: #{tpu_custom_call.1} parent=11 // pred_fallthru
          _
        // Predicated region
        $region41: #{tpu_custom_call.1} parent=11 // pred_check
          %p481 = pneg %p253
        $region42: #{tpu_custom_call.1} parent=11 // pred_check_branch
          %483 = sbr.rel (%p481) target = $region44
        $region43: #{tpu_custom_call.1} parent=11 // pred_region
          _
        $region44: #{tpu_custom_call.1} parent=11 // pred_fallthru
          _
        // Predicated region
        $region45: #{tpu_custom_call.1} parent=11 // pred_check
          %p484 = pneg %p274
        $region46: #{tpu_custom_call.1} parent=11 // pred_check_branch
          %486 = sbr.rel (%p484) target = $region48
        $region47: #{tpu_custom_call.1} parent=11 // pred_region
          _
        $region48: #{tpu_custom_call.1} parent=11 // pred_fallthru
          _
        // Predicated region
        $region49: #{tpu_custom_call.1} parent=11 // pred_check
          %p487 = pneg %p295
        $region50: #{tpu_custom_call.1} parent=11 // pred_check_branch
          %489 = sbr.rel (%p487) target = $region52
        $region51: #{tpu_custom_call.1} parent=11 // pred_region
          %s491 = ssub.s32 16, 16
          %492 = vsyncadd [#allocation13], %s491
          %s494 = sshll.u32 [#allocation14], 4
          %s495 = int_to_ptr.vmem [resolvable:$true] %s494
          %497 = dma.hbm_to_vmem [thread:$0]  %s11, 16, %s495, [#allocation13]
        $region52: #{tpu_custom_call.1} parent=11 // pred_fallthru
          _
        // Predicated region
        $region53: #{tpu_custom_call.1} parent=11 // pred_check
          %p498 = pneg %p316
        $region54: #{tpu_custom_call.1} parent=11 // pred_check_branch
          %500 = sbr.rel (%p498) target = $region56
        $region55: #{tpu_custom_call.1} parent=11 // pred_region
          _
        $region56: #{tpu_custom_call.1} parent=11 // pred_fallthru
          _
        // Predicated region
        $region57: #{tpu_custom_call.1} parent=11 // pred_check
          %p501 = pneg %p337
        $region58: #{tpu_custom_call.1} parent=11 // pred_check_branch
          %503 = sbr.rel (%p501) target = $region60
        $region59: #{tpu_custom_call.1} parent=11 // pred_region
          _
        $region60: #{tpu_custom_call.1} parent=11 // pred_fallthru
          _
        // Predicated region
        $region61: #{tpu_custom_call.1} parent=11 // pred_check
          %p504 = pneg %p358
        $region62: #{tpu_custom_call.1} parent=11 // pred_check_branch
          %506 = sbr.rel (%p504) target = $region64
        $region63: #{tpu_custom_call.1} parent=11 // pred_region
          _
        $region64: #{tpu_custom_call.1} parent=11 // pred_fallthru
          _
        // Predicated region
        $region65: #{tpu_custom_call.1} parent=11 // pred_check
          %p507 = pneg %p379
        $region66: #{tpu_custom_call.1} parent=11 // pred_check_branch
          %509 = sbr.rel (%p507) target = $region68
        $region67: #{tpu_custom_call.1} parent=11 // pred_region
          _
        $region68: #{tpu_custom_call.1} parent=11 // pred_fallthru
          _
      $region12: #{tpu_custom_call.1} parent=5 // pred_fallthru
        _
      %p510 = scmp.lt.s32.totalorder %s33, 2
      // Predicated region
      $region69: #{tpu_custom_call.1} parent=5 // pred_check
        %p511 = pneg %p510
      $region70: #{tpu_custom_call.1} parent=5 // pred_check_branch
        %513 = sbr.rel (%p511) target = $region72
      $region71: #{tpu_custom_call.1} parent=5 // pred_region
        // Predicated region
        $region73: #{tpu_custom_call.1} parent=71 // pred_check
          %p514 = pneg %p53
        $region74: #{tpu_custom_call.1} parent=71 // pred_check_branch
          %516 = sbr.rel (%p514) target = $region76
        $region75: #{tpu_custom_call.1} parent=71 // pred_region
          %s517 = sand.u32 %s43, 1
          %s518 = scalar_lea.sflag [#allocation4], %s517
          %s519 = sand.u32 %s43, 1
          %s520 = smul.addr %s519, 4
          %s521 = scalar_lea.vmem [#allocation3], %s520
          %s523 = ssub.s32 64, 64
          %524 = vsyncadd %s518, %s523
          %s525 = smul.addr %s33, 64
          %s526 = scalar_lea.hbm %s0, %s525
          %s528 = sshll.u32 %s521, 4
          %s529 = int_to_ptr.vmem [resolvable:$true] %s528
          %531 = dma.hbm_to_vmem [thread:$0]  %s526, 64, %s529, %s518
        $region76: #{tpu_custom_call.1} parent=71 // pred_fallthru
          _
        // Predicated region
        $region77: #{tpu_custom_call.1} parent=71 // pred_check
          %p532 = pneg %p79
        $region78: #{tpu_custom_call.1} parent=71 // pred_check_branch
          %534 = sbr.rel (%p532) target = $region80
        $region79: #{tpu_custom_call.1} parent=71 // pred_region
          %s535 = sand.u32 %s33, 1
          %s536 = scalar_lea.sflag [#allocation7], %s535
          %s537 = sand.u32 %s69, 1
          %s538 = smul.addr %s537, 4
          %s539 = scalar_lea.vmem [#allocation6], %s538
          %s541 = ssub.s32 64, 64
          %542 = vsyncadd %s536, %s541
          %s543 = smul.addr %s33, 64
          %s544 = scalar_lea.hbm %s1, %s543
          %s546 = sshll.u32 %s539, 4
          %s547 = int_to_ptr.vmem [resolvable:$true] %s546
          %549 = dma.hbm_to_vmem [thread:$0]  %s544, 64, %s547, %s536
        $region80: #{tpu_custom_call.1} parent=71 // pred_fallthru
          _
      $region72: #{tpu_custom_call.1} parent=5 // pred_fallthru
        _
      %p550 = scmp.le.s32.totalorder 1, %s33
      %p551 = scmp.lt.s32.totalorder %s33, 3
      %p552 = pnand %p550, %p551
      %p553 = pneg %p552
      // Predicated region
      $region81: #{tpu_custom_call.1} parent=5 // pred_check
        _
      $region82: #{tpu_custom_call.1} parent=5 // pred_check_branch
        %555 = sbr.rel (%p552) target = $region84
      $region83: #{tpu_custom_call.1} parent=5 // pred_region
        %s556 = ssub.s32 %s33, 1
        %s557 = sand.u32 %s46, 1
        %s558 = scalar_lea.sflag [#allocation4], %s557
        %s559 = sand.u32 %s46, 1
        %s560 = smul.addr %s559, 4
        %s561 = scalar_lea.vmem [#allocation3], %s560
        // Predicated region
        $region85: #{tpu_custom_call.1} parent=83 // pred_check
          %p562 = pneg %p59
        $region86: #{tpu_custom_call.1} parent=83 // pred_check_branch
          %564 = sbr.rel (%p562) target = $region88
        $region87: #{tpu_custom_call.1} parent=83 // pred_region
          %565 = dma.done %s558, 64
        $region88: #{tpu_custom_call.1} parent=83 // pred_fallthru
          _
        %s566 = sand.u32 %s38, 1
        %s567 = scalar_lea.sflag [#allocation7], %s566
        %s568 = sand.u32 %s72, 1
        %s569 = smul.addr %s568, 4
        %s570 = scalar_lea.vmem [#allocation6], %s569
        // Predicated region
        $region89: #{tpu_custom_call.1} parent=83 // pred_check
          %p571 = pneg %p85
        $region90: #{tpu_custom_call.1} parent=83 // pred_check_branch
          %573 = sbr.rel (%p571) target = $region92
        $region91: #{tpu_custom_call.1} parent=83 // pred_region
          %574 = dma.done %s567, 64
        $region92: #{tpu_custom_call.1} parent=83 // pred_fallthru
          _
        // Predicated region
        $region93: #{tpu_custom_call.1} parent=83 // pred_check
          %p575 = pneg %p106
        $region94: #{tpu_custom_call.1} parent=83 // pred_check_branch
          %577 = sbr.rel (%p575) target = $region96
        $region95: #{tpu_custom_call.1} parent=83 // pred_region
          %578 = dma.done [#allocation7], 256
        $region96: #{tpu_custom_call.1} parent=83 // pred_fallthru
          _
        // Predicated region
        $region97: #{tpu_custom_call.1} parent=83 // pred_check
          %p579 = pneg %p148
        $region98: #{tpu_custom_call.1} parent=83 // pred_check_branch
          %581 = sbr.rel (%p579) target = $region100
        $region99: #{tpu_custom_call.1} parent=83 // pred_region
          %582 = dma.done [#allocation10], 128
        $region100: #{tpu_custom_call.1} parent=83 // pred_fallthru
          _
        // Predicated region
        $region101: #{tpu_custom_call.1} parent=83 // pred_check
          %p583 = pneg %p190
        $region102: #{tpu_custom_call.1} parent=83 // pred_check_branch
          %585 = sbr.rel (%p583) target = $region104
        $region103: #{tpu_custom_call.1} parent=83 // pred_region
          %586 = dma.done [#allocation10], 256
        $region104: #{tpu_custom_call.1} parent=83 // pred_fallthru
          _
        // Predicated region
        $region105: #{tpu_custom_call.1} parent=83 // pred_check
          %p587 = pneg %p232
        $region106: #{tpu_custom_call.1} parent=83 // pred_check_branch
          %589 = sbr.rel (%p587) target = $region108
        $region107: #{tpu_custom_call.1} parent=83 // pred_region
          %590 = dma.done [#allocation13], 256
        $region108: #{tpu_custom_call.1} parent=83 // pred_fallthru
          _
        // Predicated region
        $region109: #{tpu_custom_call.1} parent=83 // pred_check
          %p591 = pneg %p295
        $region110: #{tpu_custom_call.1} parent=83 // pred_check_branch
          %593 = sbr.rel (%p591) target = $region112
        $region111: #{tpu_custom_call.1} parent=83 // pred_region
          %594 = dma.done [#allocation13], 16
        $region112: #{tpu_custom_call.1} parent=83 // pred_fallthru
          _
        %s595 = sand.u32 %s46, 1
        %s596 = scalar_lea.sflag [#allocation4], %s595
        %s597 = sand.u32 %s46, 1
        %s598 = smul.addr %s597, 4
        %s599 = scalar_lea.vmem [#allocation3], %s598
        %p600 = pneg %p59
        %p601 = pneg %p56
        %s602 = sand.u32 %s38, 1
        %s603 = scalar_lea.sflag [#allocation7], %s602
        %s604 = sand.u32 %s72, 1
        %s605 = smul.addr %s604, 4
        %s606 = scalar_lea.vmem [#allocation6], %s605
        %p607 = pneg %p85
        %p608 = pneg %p82
        %p609 = pneg %p106
        %p610 = pneg %p103
        %p611 = pneg %p127
        %p612 = pneg %p124
        %p613 = pneg %p148
        %p614 = pneg %p145
        %p615 = pneg %p169
        %p616 = pneg %p166
        %p617 = pneg %p190
        %p618 = pneg %p187
        %p619 = pneg %p211
        %p620 = pneg %p208
        %p621 = pneg %p232
        %p622 = pneg %p229
        %p623 = pneg %p253
        %p624 = pneg %p250
        %p625 = pneg %p274
        %p626 = pneg %p271
        %p627 = pneg %p295
        %p628 = pneg %p292
        %p629 = pneg %p316
        %p630 = pneg %p313
        %p631 = pneg %p337
        %p632 = pneg %p334
        %p633 = pneg %p358
        %p634 = pneg %p355
        %p635 = pneg %p379
        %p636 = pneg %p376
        %p637 = pneg %p405
        %p638 = pneg %p402
        %s639 = sand.u32 %s392, 1
        %s640 = scalar_lea.sflag [#allocation5], %s639
        %s641 = sand.u32 %s392, 1
        %s642 = smul.addr %s641, 8
        %s643 = scalar_lea.vmem [#allocation15], %s642
        %v645 = vld [vmem:[%s561] sm:$0xf]
        %v646 = vld [vmem:[%s570] sm:$0xf]
        %v647 = vunpack.c.l.bf16 %v645
        %v648 = vld [vmem:[#allocation8] sm:$0xf]
        %v649 = vld [vmem:[#allocation8 + $0x4] sm:$0xf]
        %v650 = vld [vmem:[#allocation8 + $0x8] sm:$0xf]
        %v651 = vld [vmem:[#allocation8 + $0xc] sm:$0xf]
        %v652 = vld [vmem:[%s3] sm:$0x1]
        %v654 = vlaneseq
        %v655 = vshrl.u32 %v654, 7
        %v656 = vsub.s32 0, %v655
        %v657 = vrot.slane %v652, %v656
        %v663 = vunpack.c.l.b16 %v648
        %v664 = vunpack.c.l.b16 %v649
        %v665 = vunpack.c.l.b16 %v650
        %v666 = vunpack.c.l.b16 %v651
        %v667 = vpack.c.b16 %v664, %v663
        %v668 = vpack.c.b16 %v666, %v665
        %vm671 = vcmask 261120
        %v673 = vsel %vm671, %v645, 0
        %675 = vmatprep.subr.bf16.mxu0 0
        %676 = vmatpush1.bf16.msra.mxu0 0
        %677 = vmatprep.subr.bf16.mxu0 0
        %678 = vmatpush1.bf16.msra.mxu0 0
        %679 = vmatprep.subr.bf16.mxu0 0
        %680 = vmatpush1.bf16.msra.mxu0 0
        %681 = vmatprep.subr.bf16.mxu0 0
        %682 = vmatpush1.bf16.msra.mxu0 0
        %683 = vmatprep.subr.bf16.mxu0 0
        %684 = vmatpush1.bf16.msra.mxu0 0
        %685 = vmatprep.subr.bf16.mxu0 0
        %686 = vmatpush1.bf16.msra.mxu0 0
        %687 = vmatprep.subr.bf16.mxu0 0
        %688 = vmatpush1.bf16.msra.mxu0 %v668
        %689 = vmatprep.subr.bf16.mxu0 0
        %690 = vmatpush1.bf16.msra.mxu0 %v667
        %691 = vmatprep.subr.bf16.mxu0 0
        %692 = vmatpush2.bf16.msra.mxu0 0
        %693 = vmatprep.subr.bf16.mxu0 0
        %694 = vmatpush2.bf16.msra.mxu0 0
        %695 = vmatprep.subr.bf16.mxu0 0
        %696 = vmatpush2.bf16.msra.mxu0 0
        %697 = vmatprep.subr.bf16.mxu0 0
        %698 = vmatpush2.bf16.msra.mxu0 0
        %699 = vmatprep.subr.bf16.mxu0 0
        %700 = vmatpush2.bf16.msra.mxu0 0
        %701 = vmatprep.subr.bf16.mxu0 0
        %702 = vmatpush2.bf16.msra.mxu0 0
        %703 = vmatprep.subr.bf16.mxu0 0
        %704 = vmatpush2.bf16.msra.mxu0 0
        %705 = vmatprep.subr.bf16.mxu0 0
        %706 = vmatpush2.bf16.msra.mxu0 0
        %707 = vmatprep.mubr.bf16.mxu0 0
        %708 = vmatmul.mubr.bf16.gmra.mxu0 %v673
        %v709 = vpop.f32.mrf.mxu0
        %v710 = vadd.f32 %v657, %v709
        %v711 = vpop.f32.mrf.mxu0
        %v712 = vpop.f32.mrf.mxu0
        %v713 = vpop.f32.mrf.mxu0
        %714 = vdwg.mxu0
        %v715 = vpack.c.bf16 %v710, %v710
        %v716 = vld [vmem:[#allocation9] sm:$0xf]
        %v717 = vld [vmem:[#allocation9 + $0x4] sm:$0xf]
        %v718 = vld [vmem:[%s5] sm:$0x1]
        %v720 = vlaneseq
        %v721 = vshrl.u32 %v720, 7
        %v722 = vsub.s32 0, %v721
        %v723 = vrot.slane %v718, %v722
        %v727 = vunpack.c.l.b16 %v716
        %v728 = vunpack.c.l.b16 %v717
        %v729 = vpack.c.b16 %v728, %v727
        %vm731 = vcmask 130048
        %v733 = vsel %vm731, %v646, 0
        %735 = vmatprep.subr.bf16.mxu0 0
        %736 = vmatpush1.bf16.msra.mxu0 0
        %737 = vmatprep.subr.bf16.mxu0 0
        %738 = vmatpush1.bf16.msra.mxu0 0
        %739 = vmatprep.subr.bf16.mxu0 0
        %740 = vmatpush1.bf16.msra.mxu0 0
        %741 = vmatprep.subr.bf16.mxu0 0
        %742 = vmatpush1.bf16.msra.mxu0 0
        %743 = vmatprep.subr.bf16.mxu0 0
        %744 = vmatpush1.bf16.msra.mxu0 0
        %745 = vmatprep.subr.bf16.mxu0 0
        %746 = vmatpush1.bf16.msra.mxu0 0
        %747 = vmatprep.subr.bf16.mxu0 0
        %748 = vmatpush1.bf16.msra.mxu0 0
        %749 = vmatprep.subr.bf16.mxu0 0
        %750 = vmatpush1.bf16.msra.mxu0 %v729
        %751 = vmatprep.subr.bf16.mxu0 0
        %752 = vmatpush2.bf16.msra.mxu0 0
        %753 = vmatprep.subr.bf16.mxu0 0
        %754 = vmatpush2.bf16.msra.mxu0 0
        %755 = vmatprep.subr.bf16.mxu0 0
        %756 = vmatpush2.bf16.msra.mxu0 0
        %757 = vmatprep.subr.bf16.mxu0 0
        %758 = vmatpush2.bf16.msra.mxu0 0
        %759 = vmatprep.subr.bf16.mxu0 0
        %760 = vmatpush2.bf16.msra.mxu0 0
        %761 = vmatprep.subr.bf16.mxu0 0
        %762 = vmatpush2.bf16.msra.mxu0 0
        %763 = vmatprep.subr.bf16.mxu0 0
        %764 = vmatpush2.bf16.msra.mxu0 0
        %765 = vmatprep.subr.bf16.mxu0 0
        %766 = vmatpush2.bf16.msra.mxu0 0
        %767 = vmatprep.mubr.bf16.mxu0 0
        %768 = vmatmul.mubr.bf16.gmra.mxu0 %v733
        %v769 = vpop.f32.mrf.mxu0
        %v770 = vadd.f32 %v723, %v769
        %v771 = vpop.f32.mrf.mxu0
        %v772 = vpop.f32.mrf.mxu0
        %v773 = vpop.f32.mrf.mxu0
        %774 = vdwg.mxu0
        %v775 = vpack.c.bf16 %v770, %v770
        %v777 = vsel %vm731, %v715, 0
        %v780 = vsel %vm731, %v775, 0
        %782 = vmatprep.subr.bf16.mxu0 0
        %783 = vmatpush1.bf16.xpose.msra.mxu0 0
        %784 = vmatprep.subr.bf16.mxu0 0
        %785 = vmatpush1.bf16.xpose.msra.mxu0 0
        %786 = vmatprep.subr.bf16.mxu0 0
        %787 = vmatpush1.bf16.xpose.msra.mxu0 0
        %788 = vmatprep.subr.bf16.mxu0 0
        %789 = vmatpush1.bf16.xpose.msra.mxu0 0
        %790 = vmatprep.subr.bf16.mxu0 0
        %791 = vmatpush1.bf16.xpose.msra.mxu0 0
        %792 = vmatprep.subr.bf16.mxu0 0
        %793 = vmatpush1.bf16.xpose.msra.mxu0 0
        %794 = vmatprep.subr.bf16.mxu0 0
        %795 = vmatpush1.bf16.xpose.msra.mxu0 0
        %796 = vmatprep.subr.bf16.mxu0 0
        %797 = vmatpush1.bf16.xpose.msra.mxu0 %v780
        %798 = vmatprep.subr.bf16.mxu0 0
        %799 = vmatpush2.bf16.xpose.msra.mxu0 0
        %800 = vmatprep.subr.bf16.mxu0 0
        %801 = vmatpush2.bf16.xpose.msra.mxu0 0
        %802 = vmatprep.subr.bf16.mxu0 0
        %803 = vmatpush2.bf16.xpose.msra.mxu0 0
        %804 = vmatprep.subr.bf16.mxu0 0
        %805 = vmatpush2.bf16.xpose.msra.mxu0 0
        %806 = vmatprep.subr.bf16.mxu0 0
        %807 = vmatpush2.bf16.xpose.msra.mxu0 0
        %808 = vmatprep.subr.bf16.mxu0 0
        %809 = vmatpush2.bf16.xpose.msra.mxu0 0
        %810 = vmatprep.subr.bf16.mxu0 0
        %811 = vmatpush2.bf16.xpose.msra.mxu0 0
        %812 = vmatprep.subr.bf16.mxu0 0
        %813 = vmatpush2.bf16.xpose.msra.mxu0 0
        %814 = vmatprep.mubr.bf16.mxu0 0
        %815 = vmatmul.mubr.bf16.gmra.mxu0 %v777
        %v816 = vpop.f32.mrf.mxu0
        %v817 = vadd.f32 0.0, %v816
        %v818 = vpop.f32.mrf.mxu0
        %v819 = vpop.f32.mrf.mxu0
        %v820 = vpop.f32.mrf.mxu0
        %821 = vdwg.mxu0
        %vm822 = vcmask 64512
        %v823 = vsel %vm822, %v817, -inf
        %824 = vmax.xlane.f32.xlu0 %v823
        %v825 = vpop.xlane.xlu0 %824
        %v826 = vsub.f32 %v817, %v825
        %v827 = vmul.f32 %v826, 1.442695
        %v828 = vpow.pop %v827
        %v829 = vsel %vm822, %v828, 0.0
        %830 = vadd.xlane.f32.xlu0 %v829
        %v831 = vpop.xlane.xlu0 %830
        %v832 = vpack.c.bf16 %v828, %v828
        %834 = vrot.lane.b32.xlu0 %v775, 96
        %v835 = vpop.permute.xlu0 %834
        %v837 = vsel %vm822, %v832, 0
        %vm839 = vcmask 1043456
        %v841 = vsel %vm839, %v835, 0
        %843 = vmatprep.subr.bf16.mxu0 0
        %844 = vmatpush1.bf16.msra.mxu0 0
        %845 = vmatprep.subr.bf16.mxu0 0
        %846 = vmatpush1.bf16.msra.mxu0 0
        %847 = vmatprep.subr.bf16.mxu0 0
        %848 = vmatpush1.bf16.msra.mxu0 0
        %849 = vmatprep.subr.bf16.mxu0 0
        %850 = vmatpush1.bf16.msra.mxu0 0
        %851 = vmatprep.subr.bf16.mxu0 0
        %852 = vmatpush1.bf16.msra.mxu0 0
        %853 = vmatprep.subr.bf16.mxu0 0
        %854 = vmatpush1.bf16.msra.mxu0 0
        %855 = vmatprep.subr.bf16.mxu0 0
        %856 = vmatpush1.bf16.msra.mxu0 0
        %857 = vmatprep.subr.bf16.mxu0 0
        %858 = vmatpush1.bf16.msra.mxu0 %v841
        %859 = vmatprep.subr.bf16.mxu0 0
        %860 = vmatpush2.bf16.msra.mxu0 0
        %861 = vmatprep.subr.bf16.mxu0 0
        %862 = vmatpush2.bf16.msra.mxu0 0
        %863 = vmatprep.subr.bf16.mxu0 0
        %864 = vmatpush2.bf16.msra.mxu0 0
        %865 = vmatprep.subr.bf16.mxu0 0
        %866 = vmatpush2.bf16.msra.mxu0 0
        %867 = vmatprep.subr.bf16.mxu0 0
        %868 = vmatpush2.bf16.msra.mxu0 0
        %869 = vmatprep.subr.bf16.mxu0 0
        %870 = vmatpush2.bf16.msra.mxu0 0
        %871 = vmatprep.subr.bf16.mxu0 0
        %872 = vmatpush2.bf16.msra.mxu0 0
        %873 = vmatprep.subr.bf16.mxu0 0
        %874 = vmatpush2.bf16.msra.mxu0 0
        %875 = vmatprep.mubr.bf16.mxu0 0
        %876 = vmatmul.mubr.bf16.gmra.mxu0 %v837
        %v877 = vpop.f32.mrf.mxu0
        %v878 = vadd.f32 0.0, %v877
        %v879 = vpop.f32.mrf.mxu0
        %v880 = vpop.f32.mrf.mxu0
        %v881 = vpop.f32.mrf.mxu0
        %882 = vdwg.mxu0
        %v883 = vrcp.pop %v831
        %v884 = vmul.f32 %v878, %v883
        %885 = vst.msk [vmem:[#allocation2] sm:$0xff] %vm731, %v884
        %887 = vrot.lane.b32.xlu0 %v715, 112
        %v888 = vpop.permute.xlu0 %887
        %889 = vrot.lane.b32.xlu0 %v775, 112
        %v890 = vpop.permute.xlu0 %889
        %v892 = vsel %vm731, %v888, 0
        %v895 = vsel %vm731, %v890, 0
        %897 = vmatprep.subr.bf16.mxu0 0
        %898 = vmatpush1.bf16.xpose.msra.mxu0 0
        %899 = vmatprep.subr.bf16.mxu0 0
        %900 = vmatpush1.bf16.xpose.msra.mxu0 0
        %901 = vmatprep.subr.bf16.mxu0 0
        %902 = vmatpush1.bf16.xpose.msra.mxu0 0
        %903 = vmatprep.subr.bf16.mxu0 0
        %904 = vmatpush1.bf16.xpose.msra.mxu0 0
        %905 = vmatprep.subr.bf16.mxu0 0
        %906 = vmatpush1.bf16.xpose.msra.mxu0 0
        %907 = vmatprep.subr.bf16.mxu0 0
        %908 = vmatpush1.bf16.xpose.msra.mxu0 0
        %909 = vmatprep.subr.bf16.mxu0 0
        %910 = vmatpush1.bf16.xpose.msra.mxu0 0
        %911 = vmatprep.subr.bf16.mxu0 0
        %912 = vmatpush1.bf16.xpose.msra.mxu0 %v895
        %913 = vmatprep.subr.bf16.mxu0 0
        %914 = vmatpush2.bf16.xpose.msra.mxu0 0
        %915 = vmatprep.subr.bf16.mxu0 0
        %916 = vmatpush2.bf16.xpose.msra.mxu0 0
        %917 = vmatprep.subr.bf16.mxu0 0
        %918 = vmatpush2.bf16.xpose.msra.mxu0 0
        %919 = vmatprep.subr.bf16.mxu0 0
        %920 = vmatpush2.bf16.xpose.msra.mxu0 0
        %921 = vmatprep.subr.bf16.mxu0 0
        %922 = vmatpush2.bf16.xpose.msra.mxu0 0
        %923 = vmatprep.subr.bf16.mxu0 0
        %924 = vmatpush2.bf16.xpose.msra.mxu0 0
        %925 = vmatprep.subr.bf16.mxu0 0
        %926 = vmatpush2.bf16.xpose.msra.mxu0 0
        %927 = vmatprep.subr.bf16.mxu0 0
        %928 = vmatpush2.bf16.xpose.msra.mxu0 0
        %929 = vmatprep.mubr.bf16.mxu0 0
        %930 = vmatmul.mubr.bf16.gmra.mxu0 %v892
        %v931 = vpop.f32.mrf.mxu0
        %v932 = vadd.f32 0.0, %v931
        %v933 = vpop.f32.mrf.mxu0
        %v934 = vpop.f32.mrf.mxu0
        %v935 = vpop.f32.mrf.mxu0
        %936 = vdwg.mxu0
        %v937 = vsel %vm822, %v932, -inf
        %938 = vmax.xlane.f32.xlu0 %v937
        %v939 = vpop.xlane.xlu0 %938
        %v940 = vsub.f32 %v932, %v939
        %v941 = vmul.f32 %v940, 1.442695
        %v942 = vpow.pop %v941
        %v943 = vsel %vm822, %v942, 0.0
        %944 = vadd.xlane.f32.xlu0 %v943
        %v945 = vpop.xlane.xlu0 %944
        %v946 = vpack.c.bf16 %v942, %v942
        %947 = vrot.lane.b32.xlu0 %v775, 80
        %v948 = vpop.permute.xlu0 %947
        %v950 = vsel %vm822, %v946, 0
        %v953 = vsel %vm839, %v948, 0
        %955 = vmatprep.subr.bf16.mxu0 0
        %956 = vmatpush1.bf16.msra.mxu0 0
        %957 = vmatprep.subr.bf16.mxu0 0
        %958 = vmatpush1.bf16.msra.mxu0 0
        %959 = vmatprep.subr.bf16.mxu0 0
        %960 = vmatpush1.bf16.msra.mxu0 0
        %961 = vmatprep.subr.bf16.mxu0 0
        %962 = vmatpush1.bf16.msra.mxu0 0
        %963 = vmatprep.subr.bf16.mxu0 0
        %964 = vmatpush1.bf16.msra.mxu0 0
        %965 = vmatprep.subr.bf16.mxu0 0
        %966 = vmatpush1.bf16.msra.mxu0 0
        %967 = vmatprep.subr.bf16.mxu0 0
        %968 = vmatpush1.bf16.msra.mxu0 0
        %969 = vmatprep.subr.bf16.mxu0 0
        %970 = vmatpush1.bf16.msra.mxu0 %v953
        %971 = vmatprep.subr.bf16.mxu0 0
        %972 = vmatpush2.bf16.msra.mxu0 0
        %973 = vmatprep.subr.bf16.mxu0 0
        %974 = vmatpush2.bf16.msra.mxu0 0
        %975 = vmatprep.subr.bf16.mxu0 0
        %976 = vmatpush2.bf16.msra.mxu0 0
        %977 = vmatprep.subr.bf16.mxu0 0
        %978 = vmatpush2.bf16.msra.mxu0 0
        %979 = vmatprep.subr.bf16.mxu0 0
        %980 = vmatpush2.bf16.msra.mxu0 0
        %981 = vmatprep.subr.bf16.mxu0 0
        %982 = vmatpush2.bf16.msra.mxu0 0
        %983 = vmatprep.subr.bf16.mxu0 0
        %984 = vmatpush2.bf16.msra.mxu0 0
        %985 = vmatprep.subr.bf16.mxu0 0
        %986 = vmatpush2.bf16.msra.mxu0 0
        %987 = vmatprep.mubr.bf16.mxu0 0
        %988 = vmatmul.mubr.bf16.gmra.mxu0 %v950
        %v989 = vpop.f32.mrf.mxu0
        %v990 = vadd.f32 0.0, %v989
        %v991 = vpop.f32.mrf.mxu0
        %v992 = vpop.f32.mrf.mxu0
        %v993 = vpop.f32.mrf.mxu0
        %994 = vdwg.mxu0
        %v995 = vrcp.pop %v945
        %v996 = vmul.f32 %v990, %v995
        %998 = vrot.lane.b32.xlu0 %v996, 16
        %v999 = vpop.permute.xlu0 %998
        %vm1001 = vcmask 261248
        %1002 = vst.msk [vmem:[#allocation2] sm:$0xff] %vm1001, %v999
        %v1003 = vld [vmem:[#allocation2] sm:$0xff]
        %v1004 = vpack.c.bf16 %v1003, %v1003
        %v1005 = vld [vmem:[#allocation12] sm:$0xf]
        %v1006 = vld [vmem:[#allocation12 + $0x4] sm:$0xf]
        %v1007 = vld [vmem:[#allocation12 + $0x8] sm:$0xf]
        %v1008 = vld [vmem:[#allocation12 + $0xc] sm:$0xf]
        %v1009 = vld [vmem:[%s9] sm:$0x1]
        %v1010 = vld [vmem:[%s10] sm:$0x1]
        %v1011 = vld [vmem:[#allocation14] sm:$0x1]
        %v1013 = vlaneseq
        %v1014 = vshrl.u32 %v1013, 7
        %v1015 = vsub.s32 0, %v1014
        %v1016 = vrot.slane %v1009, %v1015
        %v1022 = vunpack.c.l.b16 %v1005
        %v1023 = vunpack.c.l.b16 %v1006
        %v1024 = vunpack.c.l.b16 %v1007
        %v1025 = vunpack.c.l.b16 %v1008
        %v1026 = vpack.c.b16 %v1023, %v1022
        %v1027 = vpack.c.b16 %v1025, %v1024
        %v1031 = vsel %vm671, %v1004, 0
        %1033 = vmatprep.subr.bf16.mxu0 0
        %1034 = vmatpush1.bf16.msra.mxu0 0
        %1035 = vmatprep.subr.bf16.mxu0 0
        %1036 = vmatpush1.bf16.msra.mxu0 0
        %1037 = vmatprep.subr.bf16.mxu0 0
        %1038 = vmatpush1.bf16.msra.mxu0 0
        %1039 = vmatprep.subr.bf16.mxu0 0
        %1040 = vmatpush1.bf16.msra.mxu0 0
        %1041 = vmatprep.subr.bf16.mxu0 0
        %1042 = vmatpush1.bf16.msra.mxu0 0
        %1043 = vmatprep.subr.bf16.mxu0 0
        %1044 = vmatpush1.bf16.msra.mxu0 0
        %1045 = vmatprep.subr.bf16.mxu0 0
        %1046 = vmatpush1.bf16.msra.mxu0 %v1027
        %1047 = vmatprep.subr.bf16.mxu0 0
        %1048 = vmatpush1.bf16.msra.mxu0 %v1026
        %1049 = vmatprep.subr.bf16.mxu0 0
        %1050 = vmatpush2.bf16.msra.mxu0 0
        %1051 = vmatprep.subr.bf16.mxu0 0
        %1052 = vmatpush2.bf16.msra.mxu0 0
        %1053 = vmatprep.subr.bf16.mxu0 0
        %1054 = vmatpush2.bf16.msra.mxu0 0
        %1055 = vmatprep.subr.bf16.mxu0 0
        %1056 = vmatpush2.bf16.msra.mxu0 0
        %1057 = vmatprep.subr.bf16.mxu0 0
        %1058 = vmatpush2.bf16.msra.mxu0 0
        %1059 = vmatprep.subr.bf16.mxu0 0
        %1060 = vmatpush2.bf16.msra.mxu0 0
        %1061 = vmatprep.subr.bf16.mxu0 0
        %1062 = vmatpush2.bf16.msra.mxu0 0
        %1063 = vmatprep.subr.bf16.mxu0 0
        %1064 = vmatpush2.bf16.msra.mxu0 0
        %1065 = vmatprep.mubr.bf16.mxu0 0
        %1066 = vmatmul.mubr.bf16.gmra.mxu0 %v1031
        %v1067 = vpop.f32.mrf.mxu0
        %v1068 = vadd.f32 %v1016, %v1067
        %v1069 = vpop.f32.mrf.mxu0
        %v1070 = vpop.f32.mrf.mxu0
        %v1071 = vpop.f32.mrf.mxu0
        %1072 = vdwg.mxu0
        %v1073 = vadd.f32 %v1068, %v647
        %v1074 = vsel %vm671, %v1073, 0.0
        %1075 = vadd.xlane.f32.xlu0 %v1074
        %v1076 = vpop.xlane.xlu0 %1075
        %v1077 = vrcp.pop 32.0
        %v1078 = vmul.f32 %v1076, %v1077
        %v1079 = vsub.f32 %v1073, %v1078
        %v1080 = vmul.f32 %v1079, %v1079
        %v1081 = vsel %vm671, %v1080, 0.0
        %1082 = vadd.xlane.f32.xlu0 %v1081
        %v1083 = vpop.xlane.xlu0 %1082
        %v1084 = vmul.f32 %v1083, %v1077
        %v1085 = vadd.f32 %v1084, 1e-05
        %v1086 = vrsqrt.pop %v1085
        %v1087 = vmul.f32 %v1079, %v1086
        %v1089 = vlaneseq
        %v1090 = vshrl.u32 %v1089, 7
        %v1091 = vsub.s32 0, %v1090
        %v1092 = vrot.slane %v1010, %v1091
        %v1094 = vmul.f32 %v1087, %v1092
        %v1096 = vlaneseq
        %v1097 = vshrl.u32 %v1096, 7
        %v1098 = vsub.s32 0, %v1097
        %v1099 = vrot.slane %v1011, %v1098
        %v1101 = vadd.f32 %v1094, %v1099
        %v1102 = vpack.c.bf16 %v1101, %v1101
        %v1103 = vld [vmem:[#allocation11] sm:$0xf]
        %v1104 = vld [vmem:[#allocation11 + $0x4] sm:$0xf]
        %v1105 = vld [vmem:[#allocation11 + $0x8] sm:$0xf]
        %v1106 = vld [vmem:[#allocation11 + $0xc] sm:$0xf]
        %v1107 = vld [vmem:[%s7] sm:$0x1]
        %v1109 = vlaneseq
        %v1110 = vshrl.u32 %v1109, 7
        %v1111 = vsub.s32 0, %v1110
        %v1112 = vrot.slane %v1107, %v1111
        %v1118 = vunpack.c.l.b16 %v1103
        %v1119 = vunpack.c.l.b16 %v1104
        %v1120 = vunpack.c.l.b16 %v1105
        %v1121 = vunpack.c.l.b16 %v1106
        %v1122 = vpack.c.b16 %v1119, %v1118
        %v1123 = vpack.c.b16 %v1121, %v1120
        %v1127 = vsel %vm671, %v1102, 0
        %1129 = vmatprep.subr.bf16.mxu0 0
        %1130 = vmatpush1.bf16.msra.mxu0 0
        %1131 = vmatprep.subr.bf16.mxu0 0
        %1132 = vmatpush1.bf16.msra.mxu0 0
        %1133 = vmatprep.subr.bf16.mxu0 0
        %1134 = vmatpush1.bf16.msra.mxu0 0
        %1135 = vmatprep.subr.bf16.mxu0 0
        %1136 = vmatpush1.bf16.msra.mxu0 0
        %1137 = vmatprep.subr.bf16.mxu0 0
        %1138 = vmatpush1.bf16.msra.mxu0 0
        %1139 = vmatprep.subr.bf16.mxu0 0
        %1140 = vmatpush1.bf16.msra.mxu0 0
        %1141 = vmatprep.subr.bf16.mxu0 0
        %1142 = vmatpush1.bf16.msra.mxu0 %v1123
        %1143 = vmatprep.subr.bf16.mxu0 0
        %1144 = vmatpush1.bf16.msra.mxu0 %v1122
        %1145 = vmatprep.subr.bf16.mxu0 0
        %1146 = vmatpush2.bf16.msra.mxu0 0
        %1147 = vmatprep.subr.bf16.mxu0 0
        %1148 = vmatpush2.bf16.msra.mxu0 0
        %1149 = vmatprep.subr.bf16.mxu0 0
        %1150 = vmatpush2.bf16.msra.mxu0 0
        %1151 = vmatprep.subr.bf16.mxu0 0
        %1152 = vmatpush2.bf16.msra.mxu0 0
        %1153 = vmatprep.subr.bf16.mxu0 0
        %1154 = vmatpush2.bf16.msra.mxu0 0
        %1155 = vmatprep.subr.bf16.mxu0 0
        %1156 = vmatpush2.bf16.msra.mxu0 0
        %1157 = vmatprep.subr.bf16.mxu0 0
        %1158 = vmatpush2.bf16.msra.mxu0 0
        %1159 = vmatprep.subr.bf16.mxu0 0
        %1160 = vmatpush2.bf16.msra.mxu0 0
        %1161 = vmatprep.mubr.bf16.mxu0 0
        %1162 = vmatmul.mubr.bf16.gmra.mxu0 %v1127
        %v1163 = vpop.f32.mrf.mxu0
        %v1164 = vadd.f32 %v1112, %v1163
        %v1165 = vpop.f32.mrf.mxu0
        %v1166 = vpop.f32.mrf.mxu0
        %v1167 = vpop.f32.mrf.mxu0
        %1168 = vdwg.mxu0
        %v1169 = vpack.c.bf16 %v1164, %v1164
        %1171 = vrot.lane.b32.xlu0 %v1169, 96
        %v1172 = vpop.permute.xlu0 %1171
        %v1174 = vsel %vm731, %v1169, 0
        %v1177 = vsel %vm731, %v1172, 0
        %1179 = vmatprep.subr.bf16.mxu0 0
        %1180 = vmatpush1.bf16.xpose.msra.mxu0 0
        %1181 = vmatprep.subr.bf16.mxu0 0
        %1182 = vmatpush1.bf16.xpose.msra.mxu0 0
        %1183 = vmatprep.subr.bf16.mxu0 0
        %1184 = vmatpush1.bf16.xpose.msra.mxu0 0
        %1185 = vmatprep.subr.bf16.mxu0 0
        %1186 = vmatpush1.bf16.xpose.msra.mxu0 0
        %1187 = vmatprep.subr.bf16.mxu0 0
        %1188 = vmatpush1.bf16.xpose.msra.mxu0 0
        %1189 = vmatprep.subr.bf16.mxu0 0
        %1190 = vmatpush1.bf16.xpose.msra.mxu0 0
        %1191 = vmatprep.subr.bf16.mxu0 0
        %1192 = vmatpush1.bf16.xpose.msra.mxu0 0
        %1193 = vmatprep.subr.bf16.mxu0 0
        %1194 = vmatpush1.bf16.xpose.msra.mxu0 %v1177
        %1195 = vmatprep.subr.bf16.mxu0 0
        %1196 = vmatpush2.bf16.xpose.msra.mxu0 0
        %1197 = vmatprep.subr.bf16.mxu0 0
        %1198 = vmatpush2.bf16.xpose.msra.mxu0 0
        %1199 = vmatprep.subr.bf16.mxu0 0
        %1200 = vmatpush2.bf16.xpose.msra.mxu0 0
        %1201 = vmatprep.subr.bf16.mxu0 0
        %1202 = vmatpush2.bf16.xpose.msra.mxu0 0
        %1203 = vmatprep.subr.bf16.mxu0 0
        %1204 = vmatpush2.bf16.xpose.msra.mxu0 0
        %1205 = vmatprep.subr.bf16.mxu0 0
        %1206 = vmatpush2.bf16.xpose.msra.mxu0 0
        %1207 = vmatprep.subr.bf16.mxu0 0
        %1208 = vmatpush2.bf16.xpose.msra.mxu0 0
        %1209 = vmatprep.subr.bf16.mxu0 0
        %1210 = vmatpush2.bf16.xpose.msra.mxu0 0
        %1211 = vmatprep.mubr.bf16.mxu0 0
        %1212 = vmatmul.mubr.bf16.gmra.mxu0 %v1174
        %v1213 = vpop.f32.mrf.mxu0
        %v1214 = vadd.f32 0.0, %v1213
        %v1215 = vpop.f32.mrf.mxu0
        %v1216 = vpop.f32.mrf.mxu0
        %v1217 = vpop.f32.mrf.mxu0
        %1218 = vdwg.mxu0
        %v1219 = vsel %vm822, %v1214, -inf
        %1220 = vmax.xlane.f32.xlu0 %v1219
        %v1221 = vpop.xlane.xlu0 %1220
        %v1222 = vsub.f32 %v1214, %v1221
        %v1223 = vmul.f32 %v1222, 1.442695
        %v1224 = vpow.pop %v1223
        %v1225 = vsel %vm822, %v1224, 0.0
        %1226 = vadd.xlane.f32.xlu0 %v1225
        %v1227 = vpop.xlane.xlu0 %1226
        %v1228 = vpack.c.bf16 %v1224, %v1224
        %1229 = vrot.lane.b32.xlu0 %v1169, 64
        %v1230 = vpop.permute.xlu0 %1229
        %v1232 = vsel %vm822, %v1228, 0
        %v1235 = vsel %vm839, %v1230, 0
        %1237 = vmatprep.subr.bf16.mxu0 0
        %1238 = vmatpush1.bf16.msra.mxu0 0
        %1239 = vmatprep.subr.bf16.mxu0 0
        %1240 = vmatpush1.bf16.msra.mxu0 0
        %1241 = vmatprep.subr.bf16.mxu0 0
        %1242 = vmatpush1.bf16.msra.mxu0 0
        %1243 = vmatprep.subr.bf16.mxu0 0
        %1244 = vmatpush1.bf16.msra.mxu0 0
        %1245 = vmatprep.subr.bf16.mxu0 0
        %1246 = vmatpush1.bf16.msra.mxu0 0
        %1247 = vmatprep.subr.bf16.mxu0 0
        %1248 = vmatpush1.bf16.msra.mxu0 0
        %1249 = vmatprep.subr.bf16.mxu0 0
        %1250 = vmatpush1.bf16.msra.mxu0 0
        %1251 = vmatprep.subr.bf16.mxu0 0
        %1252 = vmatpush1.bf16.msra.mxu0 %v1235
        %1253 = vmatprep.subr.bf16.mxu0 0
        %1254 = vmatpush2.bf16.msra.mxu0 0
        %1255 = vmatprep.subr.bf16.mxu0 0
        %1256 = vmatpush2.bf16.msra.mxu0 0
        %1257 = vmatprep.subr.bf16.mxu0 0
        %1258 = vmatpush2.bf16.msra.mxu0 0
        %1259 = vmatprep.subr.bf16.mxu0 0
        %1260 = vmatpush2.bf16.msra.mxu0 0
        %1261 = vmatprep.subr.bf16.mxu0 0
        %1262 = vmatpush2.bf16.msra.mxu0 0
        %1263 = vmatprep.subr.bf16.mxu0 0
        %1264 = vmatpush2.bf16.msra.mxu0 0
        %1265 = vmatprep.subr.bf16.mxu0 0
        %1266 = vmatpush2.bf16.msra.mxu0 0
        %1267 = vmatprep.subr.bf16.mxu0 0
        %1268 = vmatpush2.bf16.msra.mxu0 0
        %1269 = vmatprep.mubr.bf16.mxu0 0
        %1270 = vmatmul.mubr.bf16.gmra.mxu0 %v1232
        %v1271 = vpop.f32.mrf.mxu0
        %v1272 = vadd.f32 0.0, %v1271
        %v1273 = vpop.f32.mrf.mxu0
        %v1274 = vpop.f32.mrf.mxu0
        %v1275 = vpop.f32.mrf.mxu0
        %1276 = vdwg.mxu0
        %v1277 = vrcp.pop %v1227
        %v1278 = vmul.f32 %v1272, %v1277
        %1279 = vst.msk [vmem:[#allocation2] sm:$0xff] %vm731, %v1278
        %1280 = vrot.lane.b32.xlu0 %v1169, 112
        %v1281 = vpop.permute.xlu0 %1280
        %1282 = vrot.lane.b32.xlu0 %v1169, 80
        %v1283 = vpop.permute.xlu0 %1282
        %v1285 = vsel %vm731, %v1281, 0
        %v1288 = vsel %vm731, %v1283, 0
        %1290 = vmatprep.subr.bf16.mxu0 0
        %1291 = vmatpush1.bf16.xpose.msra.mxu0 0
        %1292 = vmatprep.subr.bf16.mxu0 0
        %1293 = vmatpush1.bf16.xpose.msra.mxu0 0
        %1294 = vmatprep.subr.bf16.mxu0 0
        %1295 = vmatpush1.bf16.xpose.msra.mxu0 0
        %1296 = vmatprep.subr.bf16.mxu0 0
        %1297 = vmatpush1.bf16.xpose.msra.mxu0 0
        %1298 = vmatprep.subr.bf16.mxu0 0
        %1299 = vmatpush1.bf16.xpose.msra.mxu0 0
        %1300 = vmatprep.subr.bf16.mxu0 0
        %1301 = vmatpush1.bf16.xpose.msra.mxu0 0
        %1302 = vmatprep.subr.bf16.mxu0 0
        %1303 = vmatpush1.bf16.xpose.msra.mxu0 0
        %1304 = vmatprep.subr.bf16.mxu0 0
        %1305 = vmatpush1.bf16.xpose.msra.mxu0 %v1288
        %1306 = vmatprep.subr.bf16.mxu0 0
        %1307 = vmatpush2.bf16.xpose.msra.mxu0 0
        %1308 = vmatprep.subr.bf16.mxu0 0
        %1309 = vmatpush2.bf16.xpose.msra.mxu0 0
        %1310 = vmatprep.subr.bf16.mxu0 0
        %1311 = vmatpush2.bf16.xpose.msra.mxu0 0
        %1312 = vmatprep.subr.bf16.mxu0 0
        %1313 = vmatpush2.bf16.xpose.msra.mxu0 0
        %1314 = vmatprep.subr.bf16.mxu0 0
        %1315 = vmatpush2.bf16.xpose.msra.mxu0 0
        %1316 = vmatprep.subr.bf16.mxu0 0
        %1317 = vmatpush2.bf16.xpose.msra.mxu0 0
        %1318 = vmatprep.subr.bf16.mxu0 0
        %1319 = vmatpush2.bf16.xpose.msra.mxu0 0
        %1320 = vmatprep.subr.bf16.mxu0 0
        %1321 = vmatpush2.bf16.xpose.msra.mxu0 0
        %1322 = vmatprep.mubr.bf16.mxu0 0
        %1323 = vmatmul.mubr.bf16.gmra.mxu0 %v1285
        %v1324 = vpop.f32.mrf.mxu0
        %v1325 = vadd.f32 0.0, %v1324
        %v1326 = vpop.f32.mrf.mxu0
        %v1327 = vpop.f32.mrf.mxu0
        %v1328 = vpop.f32.mrf.mxu0
        %1329 = vdwg.mxu0
        %v1330 = vsel %vm822, %v1325, -inf
        %1331 = vmax.xlane.f32.xlu0 %v1330
        %v1332 = vpop.xlane.xlu0 %1331
        %v1333 = vsub.f32 %v1325, %v1332
        %v1334 = vmul.f32 %v1333, 1.442695
        %v1335 = vpow.pop %v1334
        %v1336 = vsel %vm822, %v1335, 0.0
        %1337 = vadd.xlane.f32.xlu0 %v1336
        %v1338 = vpop.xlane.xlu0 %1337
        %v1339 = vpack.c.bf16 %v1335, %v1335
        %1340 = vrot.lane.b32.xlu0 %v1169, 48
        %v1341 = vpop.permute.xlu0 %1340
        %v1343 = vsel %vm822, %v1339, 0
        %v1346 = vsel %vm839, %v1341, 0
        %1348 = vmatprep.subr.bf16.mxu0 0
        %1349 = vmatpush1.bf16.msra.mxu0 0
        %1350 = vmatprep.subr.bf16.mxu0 0
        %1351 = vmatpush1.bf16.msra.mxu0 0
        %1352 = vmatprep.subr.bf16.mxu0 0
        %1353 = vmatpush1.bf16.msra.mxu0 0
        %1354 = vmatprep.subr.bf16.mxu0 0
        %1355 = vmatpush1.bf16.msra.mxu0 0
        %1356 = vmatprep.subr.bf16.mxu0 0
        %1357 = vmatpush1.bf16.msra.mxu0 0
        %1358 = vmatprep.subr.bf16.mxu0 0
        %1359 = vmatpush1.bf16.msra.mxu0 0
        %1360 = vmatprep.subr.bf16.mxu0 0
        %1361 = vmatpush1.bf16.msra.mxu0 0
        %1362 = vmatprep.subr.bf16.mxu0 0
        %1363 = vmatpush1.bf16.msra.mxu0 %v1346
        %1364 = vmatprep.subr.bf16.mxu0 0
        %1365 = vmatpush2.bf16.msra.mxu0 0
        %1366 = vmatprep.subr.bf16.mxu0 0
        %1367 = vmatpush2.bf16.msra.mxu0 0
        %1368 = vmatprep.subr.bf16.mxu0 0
        %1369 = vmatpush2.bf16.msra.mxu0 0
        %1370 = vmatprep.subr.bf16.mxu0 0
        %1371 = vmatpush2.bf16.msra.mxu0 0
        %1372 = vmatprep.subr.bf16.mxu0 0
        %1373 = vmatpush2.bf16.msra.mxu0 0
        %1374 = vmatprep.subr.bf16.mxu0 0
        %1375 = vmatpush2.bf16.msra.mxu0 0
        %1376 = vmatprep.subr.bf16.mxu0 0
        %1377 = vmatpush2.bf16.msra.mxu0 0
        %1378 = vmatprep.subr.bf16.mxu0 0
        %1379 = vmatpush2.bf16.msra.mxu0 0
        %1380 = vmatprep.mubr.bf16.mxu0 0
        %1381 = vmatmul.mubr.bf16.gmra.mxu0 %v1343
        %v1382 = vpop.f32.mrf.mxu0
        %v1383 = vadd.f32 0.0, %v1382
        %v1384 = vpop.f32.mrf.mxu0
        %v1385 = vpop.f32.mrf.mxu0
        %v1386 = vpop.f32.mrf.mxu0
        %1387 = vdwg.mxu0
        %v1388 = vrcp.pop %v1338
        %v1389 = vmul.f32 %v1383, %v1388
        %1391 = vrot.lane.b32.xlu0 %v1389, 16
        %v1392 = vpop.permute.xlu0 %1391
        %1394 = vst.msk [vmem:[#allocation2] sm:$0xff] %vm1001, %v1392
        %v1395 = vld [vmem:[#allocation2] sm:$0xff]
        %v1396 = vpack.c.bf16 %v1395, %v1395
        %v1397 = vld [vmem:[%s12] sm:$0xf]
        %v1398 = vld [vmem:[%s12 + $0x4] sm:$0xf]
        %v1399 = vld [vmem:[%s12 + $0x8] sm:$0xf]
        %v1400 = vld [vmem:[%s12 + $0xc] sm:$0xf]
        %v1401 = vld [vmem:[%s13] sm:$0x1]
        %v1402 = vld [vmem:[%s14] sm:$0x1]
        %v1403 = vld [vmem:[%s15] sm:$0x1]
        %v1405 = vlaneseq
        %v1406 = vshrl.u32 %v1405, 7
        %v1407 = vsub.s32 0, %v1406
        %v1408 = vrot.slane %v1401, %v1407
        %v1414 = vunpack.c.l.b16 %v1397
        %v1415 = vunpack.c.l.b16 %v1398
        %v1416 = vunpack.c.l.b16 %v1399
        %v1417 = vunpack.c.l.b16 %v1400
        %v1418 = vpack.c.b16 %v1415, %v1414
        %v1419 = vpack.c.b16 %v1417, %v1416
        %v1423 = vsel %vm671, %v1396, 0
        %1425 = vmatprep.subr.bf16.mxu0 0
        %1426 = vmatpush1.bf16.msra.mxu0 0
        %1427 = vmatprep.subr.bf16.mxu0 0
        %1428 = vmatpush1.bf16.msra.mxu0 0
        %1429 = vmatprep.subr.bf16.mxu0 0
        %1430 = vmatpush1.bf16.msra.mxu0 0
        %1431 = vmatprep.subr.bf16.mxu0 0
        %1432 = vmatpush1.bf16.msra.mxu0 0
        %1433 = vmatprep.subr.bf16.mxu0 0
        %1434 = vmatpush1.bf16.msra.mxu0 0
        %1435 = vmatprep.subr.bf16.mxu0 0
        %1436 = vmatpush1.bf16.msra.mxu0 0
        %1437 = vmatprep.subr.bf16.mxu0 0
        %1438 = vmatpush1.bf16.msra.mxu0 %v1419
        %1439 = vmatprep.subr.bf16.mxu0 0
        %1440 = vmatpush1.bf16.msra.mxu0 %v1418
        %1441 = vmatprep.subr.bf16.mxu0 0
        %1442 = vmatpush2.bf16.msra.mxu0 0
        %1443 = vmatprep.subr.bf16.mxu0 0
        %1444 = vmatpush2.bf16.msra.mxu0 0
        %1445 = vmatprep.subr.bf16.mxu0 0
        %1446 = vmatpush2.bf16.msra.mxu0 0
        %1447 = vmatprep.subr.bf16.mxu0 0
        %1448 = vmatpush2.bf16.msra.mxu0 0
        %1449 = vmatprep.subr.bf16.mxu0 0
        %1450 = vmatpush2.bf16.msra.mxu0 0
        %1451 = vmatprep.subr.bf16.mxu0 0
        %1452 = vmatpush2.bf16.msra.mxu0 0
        %1453 = vmatprep.subr.bf16.mxu0 0
        %1454 = vmatpush2.bf16.msra.mxu0 0
        %1455 = vmatprep.subr.bf16.mxu0 0
        %1456 = vmatpush2.bf16.msra.mxu0 0
        %1457 = vmatprep.mubr.bf16.mxu0 0
        %1458 = vmatmul.mubr.bf16.gmra.mxu0 %v1423
        %v1459 = vpop.f32.mrf.mxu0
        %v1460 = vadd.f32 %v1408, %v1459
        %v1461 = vpop.f32.mrf.mxu0
        %v1462 = vpop.f32.mrf.mxu0
        %v1463 = vpop.f32.mrf.mxu0
        %1464 = vdwg.mxu0
        %v1465 = vadd.f32 %v1460, %v1101
        %v1466 = vsel %vm671, %v1465, 0.0
        %1467 = vadd.xlane.f32.xlu0 %v1466
        %v1468 = vpop.xlane.xlu0 %1467
        %v1469 = vmul.f32 %v1468, %v1077
        %v1470 = vsub.f32 %v1465, %v1469
        %v1471 = vmul.f32 %v1470, %v1470
        %v1472 = vsel %vm671, %v1471, 0.0
        %1473 = vadd.xlane.f32.xlu0 %v1472
        %v1474 = vpop.xlane.xlu0 %1473
        %v1475 = vmul.f32 %v1474, %v1077
        %v1476 = vadd.f32 %v1475, 1e-05
        %v1477 = vrsqrt.pop %v1476
        %v1478 = vmul.f32 %v1470, %v1477
        %v1480 = vlaneseq
        %v1481 = vshrl.u32 %v1480, 7
        %v1482 = vsub.s32 0, %v1481
        %v1483 = vrot.slane %v1402, %v1482
        %v1485 = vmul.f32 %v1478, %v1483
        %v1487 = vlaneseq
        %v1488 = vshrl.u32 %v1487, 7
        %v1489 = vsub.s32 0, %v1488
        %v1490 = vrot.slane %v1403, %v1489
        %v1492 = vadd.f32 %v1485, %v1490
        %1493 = vst.msk [vmem:[%s643] sm:$0xff] %vm671, %v1492
        %s1494 = sand.u32 %s392, 1
        %s1495 = scalar_lea.sflag [#allocation5], %s1494
        %s1496 = sand.u32 %s392, 1
        %s1497 = smul.addr %s1496, 8
        %s1498 = scalar_lea.vmem [#allocation15], %s1497
        // Predicated region
        $region113: #{tpu_custom_call.1} parent=83 // pred_check
          %p1499 = pneg %p402
        $region114: #{tpu_custom_call.1} parent=83 // pred_check_branch
          %1501 = sbr.rel (%p1499) target = $region116
        $region115: #{tpu_custom_call.1} parent=83 // pred_region
          %s1503 = ssub.s32 128, 128
          %1504 = vsyncadd %s1495, %s1503
          %s1505 = smul.addr %s38, 128
          %s1506 = scalar_lea.hbm %s16, %s1505
          %s1508 = sshll.u32 %s1498, 4
          %s1509 = int_to_ptr.vmem [resolvable:$true] %s1508
          %1511 = dma.vmem_to_hbm [thread:$0]  %s1509, 128, %s1506, %s1495
        $region116: #{tpu_custom_call.1} parent=83 // pred_fallthru
          _
      $region84: #{tpu_custom_call.1} parent=5 // pred_fallthru
        _
      %p1512 = scmp.le.s32.totalorder 2, %s33
      // Predicated region
      $region117: #{tpu_custom_call.1} parent=5 // pred_check
        %p1513 = pneg %p1512
      $region118: #{tpu_custom_call.1} parent=5 // pred_check_branch
        %1515 = sbr.rel (%p1513) target = $region120
      $region119: #{tpu_custom_call.1} parent=5 // pred_region
        %s1516 = ssub.s32 %s33, 2
        // Predicated region
        $region121: #{tpu_custom_call.1} parent=119 // pred_check
          %p1517 = pneg %p408
        $region122: #{tpu_custom_call.1} parent=119 // pred_check_branch
          %1519 = sbr.rel (%p1517) target = $region124
        $region123: #{tpu_custom_call.1} parent=119 // pred_region
          %s1520 = sand.u32 %s393, 1
          %s1521 = scalar_lea.sflag [#allocation5], %s1520
          %s1522 = sand.u32 %s393, 1
          %s1523 = smul.addr %s1522, 8
          %s1524 = scalar_lea.vmem [#allocation15], %s1523
          %1525 = dma.done %s1521, 128
        $region124: #{tpu_custom_call.1} parent=119 // pred_fallthru
          _
      $region120: #{tpu_custom_call.1} parent=5 // pred_fallthru
        _
    $region6: #{tpu_custom_call.1} parent=1 // loop_footer
      %s37 = sadd.s32 1, %s33
    $region7: #{tpu_custom_call.1} parent=1 // loop_footer_branch
      %32 = sbr.rel target = $region3
    $region8: #{tpu_custom_call.1} parent=1 // loop_exit
      _
    %1526 = vsyncpa [#allocation4], 1
    %s1527 = scalar_lea.sflag [#allocation4], 1
    %1528 = vsyncpa %s1527, 1
    %1529 = vsyncpa [#allocation7], 1
    %s1530 = scalar_lea.sflag [#allocation7], 1
    %1531 = vsyncpa %s1530, 1
    %1532 = vsyncpa [#allocation10], 1
    %1533 = vsyncpa [#allocation13], 1
    %1534 = vsyncpa [#allocation5], 1
    %s1535 = scalar_lea.sflag [#allocation5], 1
    %1536 = vsyncpa %s1535, 1

</llo_original>
